<compile_context>
chip_gen: v7x
topology: tpu7x:2x2x1
jax: 0.10.0
libtpu: 0.0.40
codegen_flags: <defaults>
</compile_context>

<pallas_src>
import jax
import jax.numpy as jnp
from jax import lax
from jax.experimental import pallas as pl
from jax.experimental.pallas import tpu as pltpu

# ---- dimensions fixed by the PyTorch module ---------------------------------
NUM_FEATURES_XT = 25
VOCAB = NUM_FEATURES_XT + 1            # 26
VOCAB_PAD = 32                         # padded vocab rows for the one-hot matmul
EMBED_DIM = 128                        # conv spatial length L
SEQ_LEN = 1000                         # conv in_channels C (= token sequence length)
N_FILTERS = 32                         # conv out_channels F
KERNEL_SIZE = 8
CONV_OUT_LEN = EMBED_DIM - KERNEL_SIZE + 1   # 121
CONV_PAD_LEN = EMBED_DIM                     # 128 (lane-dense padded time axis)
FC_IN = N_FILTERS * CONV_OUT_LEN             # 3872 (torch flatten size)
FC_IN_PAD = N_FILTERS * CONV_PAD_LEN         # 4096 (zero-padded flatten for kernel 2)
OUTPUT_DIM = 128


# ---- Pallas kernels ----------------------------------------------------------
def _embed_conv_kernel(tok_ref, emb_ref, w2_ref, cb_ref, out_ref):
    # tok_ref: (1, S, 1) int32          token ids for this batch element
    # emb_ref: (VOCAB_PAD, 128) bf16    padded embedding table (rows >= 26 are 0)
    # w2_ref : (K*F, S) bf16            conv weight, w2[k*F + f, c] = conv_w[f, c, k]
    # cb_ref : (F, 1) f32               conv bias
    # out_ref: (1, F, 128) bf16         conv output, time axis padded 121 -> 128 with 0
    tok = tok_ref[0]                                                  # (S, 1)
    vocab_iota = lax.broadcasted_iota(jnp.int32, (SEQ_LEN, VOCAB_PAD), 1)
    one_hot = jnp.where(tok == vocab_iota, 1.0, 0.0).astype(jnp.bfloat16)   # (S, VP)

    # Embedding gather as an MXU matmul: x[c, l] = emb[tok[c], l]  (C, L) layout.
    x = jnp.dot(one_hot, emb_ref[...],
                preferred_element_type=jnp.float32).astype(jnp.bfloat16)    # (S, 128)

    # One lane-dense matmul for all taps/filters:
    #   y[k*F + f, l] = sum_c conv_w[f, c, k] * x[c, l]
    y = jnp.dot(w2_ref[...], x, preferred_element_type=jnp.float32)         # (K*F, 128)

    # Tap combine: conv[f, t] = sum_k y[k*F + f, t + k]   (static lane-shifted slices)
    acc = y[0:N_FILTERS, 0:CONV_OUT_LEN]
    for k in range(1, KERNEL_SIZE):
        acc = acc + y[k * N_FILTERS:(k + 1) * N_FILTERS, k:k + CONV_OUT_LEN]
    conv = acc + cb_ref[...]                                                 # (F, 121)

    out_ref[0] = jnp.zeros((N_FILTERS, CONV_PAD_LEN), out_ref.dtype)
    out_ref[0, :, :CONV_OUT_LEN] = conv.astype(out_ref.dtype)


def _fc_kernel(x_ref, w_ref, b_ref, o_ref):
    # x_ref: (TB, 4096) bf16  zero-padded flattened conv output
    # w_ref: (4096, 128) bf16 fc weight re-laid-out, zero at padded t >= 121
    # b_ref: (1, 128) f32; o_ref: (TB, 128) f32
    o_ref[...] = (jnp.dot(x_ref[...], w_ref[...],
                          preferred_element_type=jnp.float32)
                  + b_ref[...]).astype(o_ref.dtype)


# ---- parameter preparation (one-time layout transforms, NOT per-call) --------
def prepare_params(params):
    emb_pad = jnp.zeros((VOCAB_PAD, EMBED_DIM), jnp.float32).at[:VOCAB].set(params["emb"])
    # (F, C, K) -> (K, F, C) -> (K*F, C)
    w2 = jnp.transpose(params["conv_w"], (2, 0, 1)).reshape(KERNEL_SIZE * N_FILTERS, SEQ_LEN)
    # fc_w (O, F*121) -> (F, 121, O), zero-pad t to 128, flatten -> (F*128, O)
    wp = jnp.transpose(params["fc_w"].reshape(OUTPUT_DIM, N_FILTERS, CONV_OUT_LEN), (1, 2, 0))
    wp = jnp.pad(wp, ((0, 0), (0, CONV_PAD_LEN - CONV_OUT_LEN), (0, 0)))
    wp = wp.reshape(FC_IN_PAD, OUTPUT_DIM)
    return {
        "emb": emb_pad.astype(jnp.bfloat16),
        "conv_w": w2.astype(jnp.bfloat16),
        "conv_b": params["conv_b"].reshape(N_FILTERS, 1).astype(jnp.float32),
        "fc_w": wp.astype(jnp.bfloat16),
        "fc_b": params["fc_b"].reshape(1, OUTPUT_DIM).astype(jnp.float32),
    }


# ---- forward -----------------------------------------------------------------
def conv1d_forward(target, prepared):
    B = target.shape[0]
    tok3 = target.astype(jnp.int32).reshape(B, SEQ_LEN, 1)

    conv_pad = pl.pallas_call(
        _embed_conv_kernel,
        out_shape=jax.ShapeDtypeStruct((B, N_FILTERS, CONV_PAD_LEN), jnp.bfloat16),
        grid=(B,),
        in_specs=[
            pl.BlockSpec((1, SEQ_LEN, 1), lambda b: (b, 0, 0)),
            pl.BlockSpec((VOCAB_PAD, EMBED_DIM), lambda b: (0, 0)),
            pl.BlockSpec((KERNEL_SIZE * N_FILTERS, SEQ_LEN), lambda b: (0, 0)),
            pl.BlockSpec((N_FILTERS, 1), lambda b: (0, 0)),
        ],
        out_specs=pl.BlockSpec((1, N_FILTERS, CONV_PAD_LEN), lambda b: (b, 0, 0)),
        compiler_params=pltpu.CompilerParams(dimension_semantics=("parallel",)),
    )(tok3, prepared["emb"], prepared["conv_w"], prepared["conv_b"])

    # (B, 32, 128) -> (B, 4096): row-major metadata reshape, stays lane-dense.
    xt = conv_pad.reshape(B, FC_IN_PAD)

    tb = B if B <= 256 else 256
    out = pl.pallas_call(
        _fc_kernel,
        out_shape=jax.ShapeDtypeStruct((B, OUTPUT_DIM), jnp.float32),
        grid=(pl.cdiv(B, tb),),
        in_specs=[
            pl.BlockSpec((tb, FC_IN_PAD), lambda i: (i, 0)),
            pl.BlockSpec((FC_IN_PAD, OUTPUT_DIM), lambda i: (0, 0)),
            pl.BlockSpec((1, OUTPUT_DIM), lambda i: (0, 0)),
        ],
        out_specs=pl.BlockSpec((tb, OUTPUT_DIM), lambda i: (i, 0)),
        compiler_params=pltpu.CompilerParams(dimension_semantics=("parallel",)),
    )(xt, prepared["fc_w"], prepared["fc_b"])
    return out


# ---- deterministic parameter init (synthetic, torch layouts) -----------------
def init_params(key):
    k1, k2, k3, k4, k5 = jax.random.split(key, 5)
    return {
        "emb": jax.random.normal(k1, (VOCAB, EMBED_DIM), jnp.float32),
        "conv_w": 0.02 * jax.random.normal(k2, (N_FILTERS, SEQ_LEN, KERNEL_SIZE), jnp.float32),
        "conv_b": 0.02 * jax.random.normal(k3, (N_FILTERS,), jnp.float32),
        "fc_w": 0.02 * jax.random.normal(k4, (OUTPUT_DIM, FC_IN), jnp.float32),
        "fc_b": 0.02 * jax.random.normal(k5, (OUTPUT_DIM,), jnp.float32),
    }


# ---- pure-JAX reference (torch semantics, f32) -------------------------------
def _reference(target, p):
    embedded = p["emb"][target]                               # (B, C=1000, L=128)
    patches = jnp.stack(
        [embedded[:, :, k:k + CONV_OUT_LEN] for k in range(KERNEL_SIZE)], axis=-1
    )                                                         # (B, C, T, K)
    conv = jnp.einsum("bctk,fck->bft", patches, p["conv_w"]) + p["conv_b"][None, :, None]
    xt = conv.reshape(target.shape[0], FC_IN)
    return xt @ p["fc_w"].T + p["fc_b"]


if __name__ == "__main__":
    key = jax.random.PRNGKey(0)
    k_tok, k_params = jax.random.split(key)
    B = 2
    # target: int token ids in [0, 26), shape (B, 1000) — only free dim is batch.
    target = jax.random.randint(k_tok, (B, SEQ_LEN), 0, VOCAB, dtype=jnp.int32)
    params = init_params(k_params)
    prepared = prepare_params(params)

    fwd = jax.jit(conv1d_forward)
    out = jax.block_until_ready(fwd(target, prepared))
    assert out.shape == (B, OUTPUT_DIM), out.shape

    ref = jax.block_until_ready(_reference(target, params))
    if not jnp.allclose(out, ref, atol=5e-2, rtol=5e-2):
        err = float(jnp.max(jnp.abs(out - ref)))
        raise AssertionError(f"Pallas kernel output mismatch vs JAX reference (max|err|={err})")

    print("KERNEL_OK")
</pallas_src>

<mosaic_0001>
module attributes {stable_mosaic.version = 11 : i64} {
  func.func @_embed_conv_kernel(%arg0: i32, %arg1: memref<1x1000x1xi32, #tpu.memory_space<vmem>>, %arg2: memref<32x128xbf16, #tpu.memory_space<vmem>>, %arg3: memref<256x1000xbf16, #tpu.memory_space<vmem>>, %arg4: memref<32x1xf32, #tpu.memory_space<vmem>>, %arg5: memref<1x32x128xbf16, #tpu.memory_space<vmem>>) attributes {dimension_semantics = [#tpu.dimension_semantics<parallel>], iteration_bounds = array<i64: 2>, scalar_prefetch = 0 : i64, scratch_operands = 0 : i64, tpu.core_type = #tpu.core_type<tc>, window_params = [{transform_indices = @transform_0, window_bounds = array<i64: 1, 1000, 1>}, {pipeline_mode = #tpu.pipeline_mode<synchronous>, transform_indices = @transform_1, window_bounds = array<i64: 32, 128>}, {pipeline_mode = #tpu.pipeline_mode<synchronous>, transform_indices = @transform_2, window_bounds = array<i64: 256, 1000>}, {pipeline_mode = #tpu.pipeline_mode<synchronous>, transform_indices = @transform_3, window_bounds = array<i64: 32, 1>}, {transform_indices = @transform_4, window_bounds = array<i64: 1, 32, 128>}]} {
    %c0 = arith.constant 0 : index
    %c0_0 = arith.constant 0 : index
    %c0_1 = arith.constant 0 : index
    %0 = vector.load %arg1[%c0, %c0_0, %c0_1] : memref<1x1000x1xi32, #tpu.memory_space<vmem>>, vector<1x1000x1xi32>
    %1 = vector.shape_cast %0 : vector<1x1000x1xi32> to vector<1000x1xi32>
    %2 = tpu.iota {dimensions = array<i32: 1>} : vector<1000x32xi32>
    %3 = vector.broadcast %1 : vector<1000x1xi32> to vector<1000x32xi32>
    %4 = arith.cmpi eq, %3, %2 : vector<1000x32xi32>
    %cst = arith.constant 1.000000e+00 : f32
    %cst_2 = arith.constant 0.000000e+00 : f32
    %5 = vector.broadcast %cst : f32 to vector<1000x32xf32>
    %6 = vector.broadcast %cst_2 : f32 to vector<1000x32xf32>
    %7 = arith.select %4, %5, %6 : vector<1000x32xi1>, vector<1000x32xf32>
    %8 = arith.truncf %7 : vector<1000x32xf32> to vector<1000x32xbf16>
    %c0_3 = arith.constant 0 : index
    %c0_4 = arith.constant 0 : index
    %9 = vector.load %arg2[%c0_3, %c0_4] : memref<32x128xbf16, #tpu.memory_space<vmem>>, vector<32x128xbf16>
    %cst_5 = arith.constant dense<0.000000e+00> : vector<1000x128xf32>
    %10 = tpu.matmul %8, %9, %cst_5 {dimension_numbers = #tpu.dot_dimension_numbers<[1], [0], [0], [1], [0, 0, 1, 1], [], []>} : vector<1000x32xbf16>, vector<32x128xbf16>, vector<1000x128xf32> -> vector<1000x128xf32>
    %11 = arith.truncf %10 : vector<1000x128xf32> to vector<1000x128xbf16>
    %c0_6 = arith.constant 0 : index
    %c0_7 = arith.constant 0 : index
    %12 = vector.load %arg3[%c0_6, %c0_7] : memref<256x1000xbf16, #tpu.memory_space<vmem>>, vector<256x1000xbf16>
    %cst_8 = arith.constant dense<0.000000e+00> : vector<256x128xf32>
    %13 = tpu.matmul %12, %11, %cst_8 {dimension_numbers = #tpu.dot_dimension_numbers<[1], [0], [0], [1], [0, 0, 1, 1], [], []>} : vector<256x1000xbf16>, vector<1000x128xbf16>, vector<256x128xf32> -> vector<256x128xf32>
    %14 = vector.extract_strided_slice %13 {offsets = [0, 0], sizes = [32, 121], strides = [1, 1]} : vector<256x128xf32> to vector<32x121xf32>
    %15 = vector.extract_strided_slice %13 {offsets = [32, 1], sizes = [32, 121], strides = [1, 1]} : vector<256x128xf32> to vector<32x121xf32>
    %16 = arith.addf %14, %15 : vector<32x121xf32>
    %17 = vector.extract_strided_slice %13 {offsets = [64, 2], sizes = [32, 121], strides = [1, 1]} : vector<256x128xf32> to vector<32x121xf32>
    %18 = arith.addf %16, %17 : vector<32x121xf32>
    %19 = vector.extract_strided_slice %13 {offsets = [96, 3], sizes = [32, 121], strides = [1, 1]} : vector<256x128xf32> to vector<32x121xf32>
    %20 = arith.addf %18, %19 : vector<32x121xf32>
    %21 = vector.extract_strided_slice %13 {offsets = [128, 4], sizes = [32, 121], strides = [1, 1]} : vector<256x128xf32> to vector<32x121xf32>
    %22 = arith.addf %20, %21 : vector<32x121xf32>
    %23 = vector.extract_strided_slice %13 {offsets = [160, 5], sizes = [32, 121], strides = [1, 1]} : vector<256x128xf32> to vector<32x121xf32>
    %24 = arith.addf %22, %23 : vector<32x121xf32>
    %25 = vector.extract_strided_slice %13 {offsets = [192, 6], sizes = [32, 121], strides = [1, 1]} : vector<256x128xf32> to vector<32x121xf32>
    %26 = arith.addf %24, %25 : vector<32x121xf32>
    %27 = vector.extract_strided_slice %13 {offsets = [224, 7], sizes = [32, 121], strides = [1, 1]} : vector<256x128xf32> to vector<32x121xf32>
    %28 = arith.addf %26, %27 : vector<32x121xf32>
    %c0_9 = arith.constant 0 : index
    %c0_10 = arith.constant 0 : index
    %29 = vector.load %arg4[%c0_9, %c0_10] : memref<32x1xf32, #tpu.memory_space<vmem>>, vector<32x1xf32>
    %30 = vector.broadcast %29 : vector<32x1xf32> to vector<32x121xf32>
    %31 = arith.addf %28, %30 : vector<32x121xf32>
    %cst_11 = arith.constant 0.000000e+00 : bf16
    %32 = vector.broadcast %cst_11 : bf16 to vector<32x128xbf16>
    %c0_12 = arith.constant 0 : index
    %c0_13 = arith.constant 0 : index
    %c0_14 = arith.constant 0 : index
    %33 = vector.load %arg5[%c0_12, %c0_13, %c0_14] : memref<1x32x128xbf16, #tpu.memory_space<vmem>>, vector<1x32x128xbf16>
    %34 = vector.shape_cast %33 : vector<1x32x128xbf16> to vector<32x128xbf16>
    %35 = vector.shape_cast %32 : vector<32x128xbf16> to vector<1x32x128xbf16>
    tpu.vector_store %arg5[%c0_12, %c0_13, %c0_14], %35 {strides = array<i32>} : memref<1x32x128xbf16, #tpu.memory_space<vmem>>, vector<1x32x128xbf16>,
    %36 = arith.truncf %31 : vector<32x121xf32> to vector<32x121xbf16>
    %c0_15 = arith.constant 0 : index
    %c0_16 = arith.constant 0 : index
    %c0_17 = arith.constant 0 : index
    %37 = vector.load %arg5[%c0_15, %c0_16, %c0_17] : memref<1x32x128xbf16, #tpu.memory_space<vmem>>, vector<1x32x121xbf16>
    %38 = vector.shape_cast %37 : vector<1x32x121xbf16> to vector<32x121xbf16>
    %39 = vector.shape_cast %36 : vector<32x121xbf16> to vector<1x32x121xbf16>
    tpu.vector_store %arg5[%c0_15, %c0_16, %c0_17], %39 {strides = array<i32>} : memref<1x32x128xbf16, #tpu.memory_space<vmem>>, vector<1x32x121xbf16>,
    return
  }
  func.func @transform_0(%arg0: i32) -> (i32, i32, i32) {
    %c0_i32 = arith.constant 0 : i32
    %c0_i32_0 = arith.constant 0 : i32
    %c0_i32_1 = arith.constant 0 : i32
    return %arg0, %c0_i32, %c0_i32_0 : i32, i32, i32
  }
  func.func @transform_1(%arg0: i32) -> (i32, i32) {
    %c0_i32 = arith.constant 0 : i32
    %c0_i32_0 = arith.constant 0 : i32
    %c0_i32_1 = arith.constant 0 : i32
    return %c0_i32, %c0_i32_0 : i32, i32
  }
  func.func @transform_2(%arg0: i32) -> (i32, i32) {
    %c0_i32 = arith.constant 0 : i32
    %c0_i32_0 = arith.constant 0 : i32
    %c0_i32_1 = arith.constant 0 : i32
    return %c0_i32, %c0_i32_0 : i32, i32
  }
  func.func @transform_3(%arg0: i32) -> (i32, i32) {
    %c0_i32 = arith.constant 0 : i32
    %c0_i32_0 = arith.constant 0 : i32
    %c0_i32_1 = arith.constant 0 : i32
    return %c0_i32, %c0_i32_0 : i32, i32
  }
  func.func @transform_4(%arg0: i32) -> (i32, i32, i32) {
    %c0_i32 = arith.constant 0 : i32
    %c0_i32_0 = arith.constant 0 : i32
    %c0_i32_1 = arith.constant 0 : i32
    return %arg0, %c0_i32, %c0_i32_0 : i32, i32, i32
  }
}

module attributes {stable_mosaic.version = 11 : i64} {
  func.func @_fc_kernel(%arg0: i32, %arg1: memref<2x4096xbf16, #tpu.memory_space<vmem>>, %arg2: memref<4096x128xbf16, #tpu.memory_space<vmem>>, %arg3: memref<1x128xf32, #tpu.memory_space<vmem>>, %arg4: memref<2x128xf32, #tpu.memory_space<vmem>>) attributes {dimension_semantics = [#tpu.dimension_semantics<parallel>], iteration_bounds = array<i64: 1>, scalar_prefetch = 0 : i64, scratch_operands = 0 : i64, tpu.core_type = #tpu.core_type<tc>, window_params = [{transform_indices = @transform_0, window_bounds = array<i64: 2, 4096>}, {pipeline_mode = #tpu.pipeline_mode<synchronous>, transform_indices = @transform_1, window_bounds = array<i64: 4096, 128>}, {pipeline_mode = #tpu.pipeline_mode<synchronous>, transform_indices = @transform_2, window_bounds = array<i64: 1, 128>}, {transform_indices = @transform_3, window_bounds = array<i64: 2, 128>}]} {
    %c0 = arith.constant 0 : index
    %c0_0 = arith.constant 0 : index
    %0 = vector.load %arg1[%c0, %c0_0] : memref<2x4096xbf16, #tpu.memory_space<vmem>>, vector<2x4096xbf16>
    %c0_1 = arith.constant 0 : index
    %c0_2 = arith.constant 0 : index
    %1 = vector.load %arg2[%c0_1, %c0_2] : memref<4096x128xbf16, #tpu.memory_space<vmem>>, vector<4096x128xbf16>
    %cst = arith.constant dense<0.000000e+00> : vector<2x128xf32>
    %2 = tpu.matmul %0, %1, %cst {dimension_numbers = #tpu.dot_dimension_numbers<[1], [0], [0], [1], [0, 0, 1, 1], [], []>} : vector<2x4096xbf16>, vector<4096x128xbf16>, vector<2x128xf32> -> vector<2x128xf32>
    %c0_3 = arith.constant 0 : index
    %c0_4 = arith.constant 0 : index
    %3 = vector.load %arg3[%c0_3, %c0_4] : memref<1x128xf32, #tpu.memory_space<vmem>>, vector<1x128xf32>
    %4 = vector.broadcast %3 : vector<1x128xf32> to vector<2x128xf32>
    %5 = arith.addf %2, %4 : vector<2x128xf32>
    %c0_5 = arith.constant 0 : index
    %c0_6 = arith.constant 0 : index
    %6 = vector.load %arg4[%c0_5, %c0_6] : memref<2x128xf32, #tpu.memory_space<vmem>>, vector<2x128xf32>
    tpu.vector_store %arg4[%c0_5, %c0_6], %5 {strides = array<i32>} : memref<2x128xf32, #tpu.memory_space<vmem>>, vector<2x128xf32>,
    return
  }
  func.func @transform_0(%arg0: i32) -> (i32, i32) {
    %c0_i32 = arith.constant 0 : i32
    %c0_i32_0 = arith.constant 0 : i32
    return %arg0, %c0_i32 : i32, i32
  }
  func.func @transform_1(%arg0: i32) -> (i32, i32) {
    %c0_i32 = arith.constant 0 : i32
    %c0_i32_0 = arith.constant 0 : i32
    %c0_i32_1 = arith.constant 0 : i32
    return %c0_i32, %c0_i32_0 : i32, i32
  }
  func.func @transform_2(%arg0: i32) -> (i32, i32) {
    %c0_i32 = arith.constant 0 : i32
    %c0_i32_0 = arith.constant 0 : i32
    %c0_i32_1 = arith.constant 0 : i32
    return %c0_i32, %c0_i32_0 : i32, i32
  }
  func.func @transform_3(%arg0: i32) -> (i32, i32) {
    %c0_i32 = arith.constant 0 : i32
    %c0_i32_0 = arith.constant 0 : i32
    return %arg0, %c0_i32 : i32, i32
  }
}

</mosaic_0001>

<llo_original>
// kernel: conv1d_forward.2
$region0: #{conv1d_forward.2}
  #allocation0 [shape = 'u32[]', space=smem, size = 0x4, offset = 0x4, fixed_abs, tag = 'smem constant byte address 0x4 - core index']
  #allocation1 [shape = 'u32[144,128]{1,0:T(1,128)}', space=vmem, size = 0x12000, scoped, tag = 'internal scratch']
  %s0 = inlined_call_operand.vmem [shape: s32[2,1000,1], index: 0, kind: input, shape index: {}]
  %s1 = inlined_call_operand.vmem [shape: bf16[32,128], index: 1, kind: input, shape index: {}]
  %s2 = inlined_call_operand.vmem [shape: bf16[256,1000], index: 2, kind: input, shape index: {}]
  %s3 = inlined_call_operand.vmem [shape: f32[32,1], index: 3, kind: input, shape index: {}]
  %s4 = inlined_call_operand.vmem [shape: bf16[2,32,128], index: 4, kind: output, shape index: {}]
  %s5 = sld [smem:[#allocation0]]
  $region49: #{conv1d_forward.2} parent=0
    _
  %s7 = ssub.s32 1, %s5
  %s8 = scalar_select 0, %s7, %s5
  loop: start=0, step=1, limit=4
  $region2: #{conv1d_forward.2} parent=0 // loop_pre_header
    _
  $region3: #{conv1d_forward.2} parent=0 // loop_header
    %s10 = sphi 0, %s14
    %p11 = scmp.ge.s32.totalorder %s10, 4
    %s20 = sphi 0, %s22
    %s23 = sphi 0, %s20
    %s24 = sphi 0, %s23
    %s40 = sphi 0, %s24
    %s44 = sphi 0, %s44
    %s46 = sphi 0, %s44
    %s47 = sphi 0, %s46
    %s61 = sphi 0, %s47
    %s65 = sphi 0, %s65
    %s67 = sphi 0, %s65
    %s68 = sphi 0, %s67
    %s82 = sphi 0, %s68
    %s86 = sphi 0, %s86
    %s88 = sphi 0, %s86
    %s89 = sphi 0, %s88
    %s103 = sphi 0, %s89
    %s109 = sphi 0, %s111
    %s112 = sphi 0, %s109
    %s113 = sphi 0, %s112
    %s129 = sphi 0, %s113
  $region4: #{conv1d_forward.2} parent=0 // loop_header_branch
    %13 = sbr.rel (%p11) target = $region8
  $region5: #{conv1d_forward.2} parent=0 // loop_body
    %s15 = ssub.s32 %s10, 1
    %s16 = ssub.s32 %s10, 2
    %s17 = sadd.s32 %s10, 1
    %s18 = ssub.s32 %s10, %s17
    %p19 = scmp.eq.s32.totalorder %s18, 0
    %s21 = sadd.s32 %s20, 1
    %s22 = scalar_select %p19, %s20, %s21
    %p25 = pneg %p19
    %p26 = scmp.eq.s32.totalorder %s10, 1
    %p27 = por %p25, %p26
    %p28 = scmp.ne.s32.totalorder %s20, %s23
    %p29 = scmp.eq.s32.totalorder %s10, 0
    %p30 = por %p28, %p29
    %p31 = scmp.ne.s32.totalorder %s20, %s23
    %p32 = scmp.eq.s32.totalorder %s15, 1
    %p33 = por %p31, %p32
    %p34 = scmp.ne.s32.totalorder %s23, %s24
    %p35 = scmp.eq.s32.totalorder %s15, 0
    %p36 = por %p34, %p35
    %p37 = scmp.ne.s32.totalorder %s23, %s24
    %p38 = scmp.eq.s32.totalorder %s16, 1
    %p39 = por %p37, %p38
    %p41 = scmp.ne.s32.totalorder %s24, %s40
    %p42 = scmp.eq.s32.totalorder %s16, 0
    %p43 = por %p41, %p42
    %s45 = sadd.s32 %s44, 1
    %p48 = scmp.eq.s32.totalorder %s10, 1
    %p49 = scmp.ne.s32.totalorder %s44, %s46
    %p50 = scmp.eq.s32.totalorder %s10, 0
    %p51 = por %p49, %p50
    %p52 = scmp.ne.s32.totalorder %s44, %s46
    %p53 = scmp.eq.s32.totalorder %s15, 1
    %p54 = por %p52, %p53
    %p55 = scmp.ne.s32.totalorder %s46, %s47
    %p56 = scmp.eq.s32.totalorder %s15, 0
    %p57 = por %p55, %p56
    %p58 = scmp.ne.s32.totalorder %s46, %s47
    %p59 = scmp.eq.s32.totalorder %s16, 1
    %p60 = por %p58, %p59
    %p62 = scmp.ne.s32.totalorder %s47, %s61
    %p63 = scmp.eq.s32.totalorder %s16, 0
    %p64 = por %p62, %p63
    %s66 = sadd.s32 %s65, 1
    %p69 = scmp.eq.s32.totalorder %s10, 1
    %p70 = scmp.ne.s32.totalorder %s65, %s67
    %p71 = scmp.eq.s32.totalorder %s10, 0
    %p72 = por %p70, %p71
    %p73 = scmp.ne.s32.totalorder %s65, %s67
    %p74 = scmp.eq.s32.totalorder %s15, 1
    %p75 = por %p73, %p74
    %p76 = scmp.ne.s32.totalorder %s67, %s68
    %p77 = scmp.eq.s32.totalorder %s15, 0
    %p78 = por %p76, %p77
    %p79 = scmp.ne.s32.totalorder %s67, %s68
    %p80 = scmp.eq.s32.totalorder %s16, 1
    %p81 = por %p79, %p80
    %p83 = scmp.ne.s32.totalorder %s68, %s82
    %p84 = scmp.eq.s32.totalorder %s16, 0
    %p85 = por %p83, %p84
    %s87 = sadd.s32 %s86, 1
    %p90 = scmp.eq.s32.totalorder %s10, 1
    %p91 = scmp.ne.s32.totalorder %s86, %s88
    %p92 = scmp.eq.s32.totalorder %s10, 0
    %p93 = por %p91, %p92
    %p94 = scmp.ne.s32.totalorder %s86, %s88
    %p95 = scmp.eq.s32.totalorder %s15, 1
    %p96 = por %p94, %p95
    %p97 = scmp.ne.s32.totalorder %s88, %s89
    %p98 = scmp.eq.s32.totalorder %s15, 0
    %p99 = por %p97, %p98
    %p100 = scmp.ne.s32.totalorder %s88, %s89
    %p101 = scmp.eq.s32.totalorder %s16, 1
    %p102 = por %p100, %p101
    %p104 = scmp.ne.s32.totalorder %s89, %s103
    %p105 = scmp.eq.s32.totalorder %s16, 0
    %p106 = por %p104, %p105
    %s107 = ssub.s32 %s10, %s17
    %p108 = scmp.eq.s32.totalorder %s107, 0
    %s110 = sadd.s32 %s109, 1
    %s111 = scalar_select %p108, %s109, %s110
    %p114 = pneg %p108
    %p115 = scmp.eq.s32.totalorder %s10, 1
    %p116 = por %p114, %p115
    %p117 = scmp.ne.s32.totalorder %s109, %s112
    %p118 = scmp.eq.s32.totalorder %s10, 0
    %p119 = por %p117, %p118
    %p120 = scmp.ne.s32.totalorder %s109, %s112
    %p121 = scmp.eq.s32.totalorder %s15, 1
    %p122 = por %p120, %p121
    %p123 = scmp.ne.s32.totalorder %s112, %s113
    %p124 = scmp.eq.s32.totalorder %s15, 0
    %p125 = por %p123, %p124
    %p126 = scmp.ne.s32.totalorder %s112, %s113
    %p127 = scmp.eq.s32.totalorder %s16, 1
    %p128 = por %p126, %p127
    %p130 = scmp.ne.s32.totalorder %s113, %s129
    %p131 = scmp.eq.s32.totalorder %s16, 0
    %p132 = por %p130, %p131
    %p133 = scmp.le.s32.totalorder 1, %s10
    %p134 = scmp.lt.s32.totalorder %s10, 3
    %p135 = pnand %p133, %p134
    %p136 = pneg %p135
    // Predicated region
    $region9: #{conv1d_forward.2} parent=5 // pred_check
      _
    $region10: #{conv1d_forward.2} parent=5 // pred_check_branch
      %138 = sbr.rel (%p135) target = $region12
    $region11: #{conv1d_forward.2} parent=5 // pred_region
      %s139 = ssub.s32 %s10, 1
      // Predicated region
      $region13: #{conv1d_forward.2} parent=11 // pred_check
        %p140 = pneg %p57
      $region14: #{conv1d_forward.2} parent=11 // pred_check_branch
        %142 = sbr.rel (%p140) target = $region16
      $region15: #{conv1d_forward.2} parent=11 // pred_region
        _
      $region16: #{conv1d_forward.2} parent=11 // pred_fallthru
        _
      // Predicated region
      $region17: #{conv1d_forward.2} parent=11 // pred_check
        %p143 = pneg %p78
      $region18: #{conv1d_forward.2} parent=11 // pred_check_branch
        %145 = sbr.rel (%p143) target = $region20
      $region19: #{conv1d_forward.2} parent=11 // pred_region
        _
      $region20: #{conv1d_forward.2} parent=11 // pred_fallthru
        _
      // Predicated region
      $region21: #{conv1d_forward.2} parent=11 // pred_check
        %p146 = pneg %p99
      $region22: #{conv1d_forward.2} parent=11 // pred_check_branch
        %148 = sbr.rel (%p146) target = $region24
      $region23: #{conv1d_forward.2} parent=11 // pred_region
        _
      $region24: #{conv1d_forward.2} parent=11 // pred_fallthru
        _
    $region12: #{conv1d_forward.2} parent=5 // pred_fallthru
      _
    %p149 = scmp.lt.s32.totalorder %s10, 2
    // Predicated region
    $region25: #{conv1d_forward.2} parent=5 // pred_check
      %p150 = pneg %p149
    $region26: #{conv1d_forward.2} parent=5 // pred_check_branch
      %152 = sbr.rel (%p150) target = $region28
    $region27: #{conv1d_forward.2} parent=5 // pred_region
      // Predicated region
      $region29: #{conv1d_forward.2} parent=27 // pred_check
        %p153 = pneg %p30
      $region30: #{conv1d_forward.2} parent=27 // pred_check_branch
        %155 = sbr.rel (%p153) target = $region32
      $region31: #{conv1d_forward.2} parent=27 // pred_region
        %p156 = scmp.lt.s32.totalorder %s10, 1
        %s157 = scalar_select %p156, %s10, 1
        %s158 = smul.addr %s157, 125
        %s159 = smul.addr %s158, 8
        %s160 = scalar_lea.vmem %s0, %s159
      $region32: #{conv1d_forward.2} parent=27 // pred_fallthru
        _
    $region28: #{conv1d_forward.2} parent=5 // pred_fallthru
      _
    %p161 = scmp.le.s32.totalorder 1, %s10
    %p162 = scmp.lt.s32.totalorder %s10, 3
    %p163 = pnand %p161, %p162
    %p164 = pneg %p163
    // Predicated region
    $region33: #{conv1d_forward.2} parent=5 // pred_check
      _
    $region34: #{conv1d_forward.2} parent=5 // pred_check_branch
      %166 = sbr.rel (%p163) target = $region36
    $region35: #{conv1d_forward.2} parent=5 // pred_region
      %s167 = ssub.s32 %s10, 1
      %p168 = scmp.lt.s32.totalorder %s15, 1
      %s169 = scalar_select %p168, %s15, 1
      %s170 = smul.addr %s169, 125
      %s171 = smul.addr %s170, 8
      %s172 = scalar_lea.vmem %s0, %s171
      %p173 = pneg %p36
      %p174 = pneg %p33
      %p175 = pneg %p57
      %p176 = pneg %p54
      %p177 = pneg %p78
      %p178 = pneg %p75
      %p179 = pneg %p99
      %p180 = pneg %p96
      %p181 = pneg %p125
      %p182 = pneg %p122
      %p183 = scmp.lt.s32.totalorder %s15, 1
      %s184 = scalar_select %p183, %s15, 1
      %s185 = smul.addr %s184, 4
      %s186 = smul.addr %s185, 4
      %s187 = scalar_lea.vmem %s4, %s186
      %p188 = scmp.lt.s32.totalorder %s15, 1
      %s189 = scalar_select %p188, %s15, 1
      %s190 = smul.addr %s189, 125
      %s191 = smul.addr %s190, 8
      %s192 = scalar_lea.vmem %s0, %s191
      %p193 = scmp.lt.s32.totalorder %s15, 1
      %s194 = scalar_select %p193, %s15, 1
      %s195 = smul.addr %s194, 4
      %s196 = smul.addr %s195, 4
      %s197 = scalar_lea.vmem %s4, %s196
      %v199 = vld [vmem:[%s192] sm:$0xff]
      %v200 = vld [vmem:[%s192 + $0x8] sm:$0xff]
      %v201 = vld [vmem:[%s192 + $0x10] sm:$0xff]
      %v202 = vld [vmem:[%s192 + $0x18] sm:$0xff]
      %v203 = vld [vmem:[%s192 + $0x20] sm:$0xff]
      %v204 = vld [vmem:[%s192 + $0x28] sm:$0xff]
      %v205 = vld [vmem:[%s192 + $0x30] sm:$0xff]
      %v206 = vld [vmem:[%s192 + $0x38] sm:$0xff]
      %v207 = vld [vmem:[%s192 + $0x40] sm:$0xff]
      %v208 = vld [vmem:[%s192 + $0x48] sm:$0xff]
      %v209 = vld [vmem:[%s192 + $0x50] sm:$0xff]
      %v210 = vld [vmem:[%s192 + $0x58] sm:$0xff]
      %v211 = vld [vmem:[%s192 + $0x60] sm:$0xff]
      %v212 = vld [vmem:[%s192 + $0x68] sm:$0xff]
      %v213 = vld [vmem:[%s192 + $0x70] sm:$0xff]
      %v214 = vld [vmem:[%s192 + $0x78] sm:$0xff]
      %v215 = vld [vmem:[%s192 + $0x80] sm:$0xff]
      %v216 = vld [vmem:[%s192 + $0x88] sm:$0xff]
      %v217 = vld [vmem:[%s192 + $0x90] sm:$0xff]
      %v218 = vld [vmem:[%s192 + $0x98] sm:$0xff]
      %v219 = vld [vmem:[%s192 + $0xa0] sm:$0xff]
      %v220 = vld [vmem:[%s192 + $0xa8] sm:$0xff]
      %v221 = vld [vmem:[%s192 + $0xb0] sm:$0xff]
      %v222 = vld [vmem:[%s192 + $0xb8] sm:$0xff]
      %v223 = vld [vmem:[%s192 + $0xc0] sm:$0xff]
      %v224 = vld [vmem:[%s192 + $0xc8] sm:$0xff]
      %v225 = vld [vmem:[%s192 + $0xd0] sm:$0xff]
      %v226 = vld [vmem:[%s192 + $0xd8] sm:$0xff]
      %v227 = vld [vmem:[%s192 + $0xe0] sm:$0xff]
      %v228 = vld [vmem:[%s192 + $0xe8] sm:$0xff]
      %v229 = vld [vmem:[%s192 + $0xf0] sm:$0xff]
      %v230 = vld [vmem:[%s192 + $0xf8] sm:$0xff]
      %v231 = vld [vmem:[%s192 + $0x100] sm:$0xff]
      %v232 = vld [vmem:[%s192 + $0x108] sm:$0xff]
      %v233 = vld [vmem:[%s192 + $0x110] sm:$0xff]
      %v234 = vld [vmem:[%s192 + $0x118] sm:$0xff]
      %v235 = vld [vmem:[%s192 + $0x120] sm:$0xff]
      %v236 = vld [vmem:[%s192 + $0x128] sm:$0xff]
      %v237 = vld [vmem:[%s192 + $0x130] sm:$0xff]
      %v238 = vld [vmem:[%s192 + $0x138] sm:$0xff]
      %v239 = vld [vmem:[%s192 + $0x140] sm:$0xff]
      %v240 = vld [vmem:[%s192 + $0x148] sm:$0xff]
      %v241 = vld [vmem:[%s192 + $0x150] sm:$0xff]
      %v242 = vld [vmem:[%s192 + $0x158] sm:$0xff]
      %v243 = vld [vmem:[%s192 + $0x160] sm:$0xff]
      %v244 = vld [vmem:[%s192 + $0x168] sm:$0xff]
      %v245 = vld [vmem:[%s192 + $0x170] sm:$0xff]
      %v246 = vld [vmem:[%s192 + $0x178] sm:$0xff]
      %v247 = vld [vmem:[%s192 + $0x180] sm:$0xff]
      %v248 = vld [vmem:[%s192 + $0x188] sm:$0xff]
      %v249 = vld [vmem:[%s192 + $0x190] sm:$0xff]
      %v250 = vld [vmem:[%s192 + $0x198] sm:$0xff]
      %v251 = vld [vmem:[%s192 + $0x1a0] sm:$0xff]
      %v252 = vld [vmem:[%s192 + $0x1a8] sm:$0xff]
      %v253 = vld [vmem:[%s192 + $0x1b0] sm:$0xff]
      %v254 = vld [vmem:[%s192 + $0x1b8] sm:$0xff]
      %v255 = vld [vmem:[%s192 + $0x1c0] sm:$0xff]
      %v256 = vld [vmem:[%s192 + $0x1c8] sm:$0xff]
      %v257 = vld [vmem:[%s192 + $0x1d0] sm:$0xff]
      %v258 = vld [vmem:[%s192 + $0x1d8] sm:$0xff]
      %v259 = vld [vmem:[%s192 + $0x1e0] sm:$0xff]
      %v260 = vld [vmem:[%s192 + $0x1e8] sm:$0xff]
      %v261 = vld [vmem:[%s192 + $0x1f0] sm:$0xff]
      %v262 = vld [vmem:[%s192 + $0x1f8] sm:$0xff]
      %v263 = vld [vmem:[%s192 + $0x200] sm:$0xff]
      %v264 = vld [vmem:[%s192 + $0x208] sm:$0xff]
      %v265 = vld [vmem:[%s192 + $0x210] sm:$0xff]
      %v266 = vld [vmem:[%s192 + $0x218] sm:$0xff]
      %v267 = vld [vmem:[%s192 + $0x220] sm:$0xff]
      %v268 = vld [vmem:[%s192 + $0x228] sm:$0xff]
      %v269 = vld [vmem:[%s192 + $0x230] sm:$0xff]
      %v270 = vld [vmem:[%s192 + $0x238] sm:$0xff]
      %v271 = vld [vmem:[%s192 + $0x240] sm:$0xff]
      %v272 = vld [vmem:[%s192 + $0x248] sm:$0xff]
      %v273 = vld [vmem:[%s192 + $0x250] sm:$0xff]
      %v274 = vld [vmem:[%s192 + $0x258] sm:$0xff]
      %v275 = vld [vmem:[%s192 + $0x260] sm:$0xff]
      %v276 = vld [vmem:[%s192 + $0x268] sm:$0xff]
      %v277 = vld [vmem:[%s192 + $0x270] sm:$0xff]
      %v278 = vld [vmem:[%s192 + $0x278] sm:$0xff]
      %v279 = vld [vmem:[%s192 + $0x280] sm:$0xff]
      %v280 = vld [vmem:[%s192 + $0x288] sm:$0xff]
      %v281 = vld [vmem:[%s192 + $0x290] sm:$0xff]
      %v282 = vld [vmem:[%s192 + $0x298] sm:$0xff]
      %v283 = vld [vmem:[%s192 + $0x2a0] sm:$0xff]
      %v284 = vld [vmem:[%s192 + $0x2a8] sm:$0xff]
      %v285 = vld [vmem:[%s192 + $0x2b0] sm:$0xff]
      %v286 = vld [vmem:[%s192 + $0x2b8] sm:$0xff]
      %v287 = vld [vmem:[%s192 + $0x2c0] sm:$0xff]
      %v288 = vld [vmem:[%s192 + $0x2c8] sm:$0xff]
      %v289 = vld [vmem:[%s192 + $0x2d0] sm:$0xff]
      %v290 = vld [vmem:[%s192 + $0x2d8] sm:$0xff]
      %v291 = vld [vmem:[%s192 + $0x2e0] sm:$0xff]
      %v292 = vld [vmem:[%s192 + $0x2e8] sm:$0xff]
      %v293 = vld [vmem:[%s192 + $0x2f0] sm:$0xff]
      %v294 = vld [vmem:[%s192 + $0x2f8] sm:$0xff]
      %v295 = vld [vmem:[%s192 + $0x300] sm:$0xff]
      %v296 = vld [vmem:[%s192 + $0x308] sm:$0xff]
      %v297 = vld [vmem:[%s192 + $0x310] sm:$0xff]
      %v298 = vld [vmem:[%s192 + $0x318] sm:$0xff]
      %v299 = vld [vmem:[%s192 + $0x320] sm:$0xff]
      %v300 = vld [vmem:[%s192 + $0x328] sm:$0xff]
      %v301 = vld [vmem:[%s192 + $0x330] sm:$0xff]
      %v302 = vld [vmem:[%s192 + $0x338] sm:$0xff]
      %v303 = vld [vmem:[%s192 + $0x340] sm:$0xff]
      %v304 = vld [vmem:[%s192 + $0x348] sm:$0xff]
      %v305 = vld [vmem:[%s192 + $0x350] sm:$0xff]
      %v306 = vld [vmem:[%s192 + $0x358] sm:$0xff]
      %v307 = vld [vmem:[%s192 + $0x360] sm:$0xff]
      %v308 = vld [vmem:[%s192 + $0x368] sm:$0xff]
      %v309 = vld [vmem:[%s192 + $0x370] sm:$0xff]
      %v310 = vld [vmem:[%s192 + $0x378] sm:$0xff]
      %v311 = vld [vmem:[%s192 + $0x380] sm:$0xff]
      %v312 = vld [vmem:[%s192 + $0x388] sm:$0xff]
      %v313 = vld [vmem:[%s192 + $0x390] sm:$0xff]
      %v314 = vld [vmem:[%s192 + $0x398] sm:$0xff]
      %v315 = vld [vmem:[%s192 + $0x3a0] sm:$0xff]
      %v316 = vld [vmem:[%s192 + $0x3a8] sm:$0xff]
      %v317 = vld [vmem:[%s192 + $0x3b0] sm:$0xff]
      %v318 = vld [vmem:[%s192 + $0x3b8] sm:$0xff]
      %v319 = vld [vmem:[%s192 + $0x3c0] sm:$0xff]
      %v320 = vld [vmem:[%s192 + $0x3c8] sm:$0xff]
      %v321 = vld [vmem:[%s192 + $0x3d0] sm:$0xff]
      %v322 = vld [vmem:[%s192 + $0x3d8] sm:$0xff]
      %v323 = vld [vmem:[%s192 + $0x3e0] sm:$0xff]
      %v324 = vlaneseq
      %v325 = vand.u32 %v324, 127
      %326 = vset.pattern.permute.xlu0 0
      %327 = vperm.xlu0 %326, %v199
      %v328 = vpop.permute.xlu0 %327
      %329 = vset.pattern.permute.xlu0 0
      %330 = vperm.xlu0 %329, %v200
      %v331 = vpop.permute.xlu0 %330
      %332 = vset.pattern.permute.xlu0 0
      %333 = vperm.xlu0 %332, %v201
      %v334 = vpop.permute.xlu0 %333
      %335 = vset.pattern.permute.xlu0 0
      %336 = vperm.xlu0 %335, %v202
      %v337 = vpop.permute.xlu0 %336
      %338 = vset.pattern.permute.xlu0 0
      %339 = vperm.xlu0 %338, %v203
      %v340 = vpop.permute.xlu0 %339
      %341 = vset.pattern.permute.xlu0 0
      %342 = vperm.xlu0 %341, %v204
      %v343 = vpop.permute.xlu0 %342
      %344 = vset.pattern.permute.xlu0 0
      %345 = vperm.xlu0 %344, %v205
      %v346 = vpop.permute.xlu0 %345
      %347 = vset.pattern.permute.xlu0 0
      %348 = vperm.xlu0 %347, %v206
      %v349 = vpop.permute.xlu0 %348
      %350 = vset.pattern.permute.xlu0 0
      %351 = vperm.xlu0 %350, %v207
      %v352 = vpop.permute.xlu0 %351
      %353 = vset.pattern.permute.xlu0 0
      %354 = vperm.xlu0 %353, %v208
      %v355 = vpop.permute.xlu0 %354
      %356 = vset.pattern.permute.xlu0 0
      %357 = vperm.xlu0 %356, %v209
      %v358 = vpop.permute.xlu0 %357
      %359 = vset.pattern.permute.xlu0 0
      %360 = vperm.xlu0 %359, %v210
      %v361 = vpop.permute.xlu0 %360
      %362 = vset.pattern.permute.xlu0 0
      %363 = vperm.xlu0 %362, %v211
      %v364 = vpop.permute.xlu0 %363
      %365 = vset.pattern.permute.xlu0 0
      %366 = vperm.xlu0 %365, %v212
      %v367 = vpop.permute.xlu0 %366
      %368 = vset.pattern.permute.xlu0 0
      %369 = vperm.xlu0 %368, %v213
      %v370 = vpop.permute.xlu0 %369
      %371 = vset.pattern.permute.xlu0 0
      %372 = vperm.xlu0 %371, %v214
      %v373 = vpop.permute.xlu0 %372
      %374 = vset.pattern.permute.xlu0 0
      %375 = vperm.xlu0 %374, %v215
      %v376 = vpop.permute.xlu0 %375
      %377 = vset.pattern.permute.xlu0 0
      %378 = vperm.xlu0 %377, %v216
      %v379 = vpop.permute.xlu0 %378
      %380 = vset.pattern.permute.xlu0 0
      %381 = vperm.xlu0 %380, %v217
      %v382 = vpop.permute.xlu0 %381
      %383 = vset.pattern.permute.xlu0 0
      %384 = vperm.xlu0 %383, %v218
      %v385 = vpop.permute.xlu0 %384
      %386 = vset.pattern.permute.xlu0 0
      %387 = vperm.xlu0 %386, %v219
      %v388 = vpop.permute.xlu0 %387
      %389 = vset.pattern.permute.xlu0 0
      %390 = vperm.xlu0 %389, %v220
      %v391 = vpop.permute.xlu0 %390
      %392 = vset.pattern.permute.xlu0 0
      %393 = vperm.xlu0 %392, %v221
      %v394 = vpop.permute.xlu0 %393
      %395 = vset.pattern.permute.xlu0 0
      %396 = vperm.xlu0 %395, %v222
      %v397 = vpop.permute.xlu0 %396
      %398 = vset.pattern.permute.xlu0 0
      %399 = vperm.xlu0 %398, %v223
      %v400 = vpop.permute.xlu0 %399
      %401 = vset.pattern.permute.xlu0 0
      %402 = vperm.xlu0 %401, %v224
      %v403 = vpop.permute.xlu0 %402
      %404 = vset.pattern.permute.xlu0 0
      %405 = vperm.xlu0 %404, %v225
      %v406 = vpop.permute.xlu0 %405
      %407 = vset.pattern.permute.xlu0 0
      %408 = vperm.xlu0 %407, %v226
      %v409 = vpop.permute.xlu0 %408
      %410 = vset.pattern.permute.xlu0 0
      %411 = vperm.xlu0 %410, %v227
      %v412 = vpop.permute.xlu0 %411
      %413 = vset.pattern.permute.xlu0 0
      %414 = vperm.xlu0 %413, %v228
      %v415 = vpop.permute.xlu0 %414
      %416 = vset.pattern.permute.xlu0 0
      %417 = vperm.xlu0 %416, %v229
      %v418 = vpop.permute.xlu0 %417
      %419 = vset.pattern.permute.xlu0 0
      %420 = vperm.xlu0 %419, %v230
      %v421 = vpop.permute.xlu0 %420
      %422 = vset.pattern.permute.xlu0 0
      %423 = vperm.xlu0 %422, %v231
      %v424 = vpop.permute.xlu0 %423
      %425 = vset.pattern.permute.xlu0 0
      %426 = vperm.xlu0 %425, %v232
      %v427 = vpop.permute.xlu0 %426
      %428 = vset.pattern.permute.xlu0 0
      %429 = vperm.xlu0 %428, %v233
      %v430 = vpop.permute.xlu0 %429
      %431 = vset.pattern.permute.xlu0 0
      %432 = vperm.xlu0 %431, %v234
      %v433 = vpop.permute.xlu0 %432
      %434 = vset.pattern.permute.xlu0 0
      %435 = vperm.xlu0 %434, %v235
      %v436 = vpop.permute.xlu0 %435
      %437 = vset.pattern.permute.xlu0 0
      %438 = vperm.xlu0 %437, %v236
      %v439 = vpop.permute.xlu0 %438
      %440 = vset.pattern.permute.xlu0 0
      %441 = vperm.xlu0 %440, %v237
      %v442 = vpop.permute.xlu0 %441
      %443 = vset.pattern.permute.xlu0 0
      %444 = vperm.xlu0 %443, %v238
      %v445 = vpop.permute.xlu0 %444
      %446 = vset.pattern.permute.xlu0 0
      %447 = vperm.xlu0 %446, %v239
      %v448 = vpop.permute.xlu0 %447
      %449 = vset.pattern.permute.xlu0 0
      %450 = vperm.xlu0 %449, %v240
      %v451 = vpop.permute.xlu0 %450
      %452 = vset.pattern.permute.xlu0 0
      %453 = vperm.xlu0 %452, %v241
      %v454 = vpop.permute.xlu0 %453
      %455 = vset.pattern.permute.xlu0 0
      %456 = vperm.xlu0 %455, %v242
      %v457 = vpop.permute.xlu0 %456
      %458 = vset.pattern.permute.xlu0 0
      %459 = vperm.xlu0 %458, %v243
      %v460 = vpop.permute.xlu0 %459
      %461 = vset.pattern.permute.xlu0 0
      %462 = vperm.xlu0 %461, %v244
      %v463 = vpop.permute.xlu0 %462
      %464 = vset.pattern.permute.xlu0 0
      %465 = vperm.xlu0 %464, %v245
      %v466 = vpop.permute.xlu0 %465
      %467 = vset.pattern.permute.xlu0 0
      %468 = vperm.xlu0 %467, %v246
      %v469 = vpop.permute.xlu0 %468
      %470 = vset.pattern.permute.xlu0 0
      %471 = vperm.xlu0 %470, %v247
      %v472 = vpop.permute.xlu0 %471
      %473 = vset.pattern.permute.xlu0 0
      %474 = vperm.xlu0 %473, %v248
      %v475 = vpop.permute.xlu0 %474
      %476 = vset.pattern.permute.xlu0 0
      %477 = vperm.xlu0 %476, %v249
      %v478 = vpop.permute.xlu0 %477
      %479 = vset.pattern.permute.xlu0 0
      %480 = vperm.xlu0 %479, %v250
      %v481 = vpop.permute.xlu0 %480
      %482 = vset.pattern.permute.xlu0 0
      %483 = vperm.xlu0 %482, %v251
      %v484 = vpop.permute.xlu0 %483
      %485 = vset.pattern.permute.xlu0 0
      %486 = vperm.xlu0 %485, %v252
      %v487 = vpop.permute.xlu0 %486
      %488 = vset.pattern.permute.xlu0 0
      %489 = vperm.xlu0 %488, %v253
      %v490 = vpop.permute.xlu0 %489
      %491 = vset.pattern.permute.xlu0 0
      %492 = vperm.xlu0 %491, %v254
      %v493 = vpop.permute.xlu0 %492
      %494 = vset.pattern.permute.xlu0 0
      %495 = vperm.xlu0 %494, %v255
      %v496 = vpop.permute.xlu0 %495
      %497 = vset.pattern.permute.xlu0 0
      %498 = vperm.xlu0 %497, %v256
      %v499 = vpop.permute.xlu0 %498
      %500 = vset.pattern.permute.xlu0 0
      %501 = vperm.xlu0 %500, %v257
      %v502 = vpop.permute.xlu0 %501
      %503 = vset.pattern.permute.xlu0 0
      %504 = vperm.xlu0 %503, %v258
      %v505 = vpop.permute.xlu0 %504
      %506 = vset.pattern.permute.xlu0 0
      %507 = vperm.xlu0 %506, %v259
      %v508 = vpop.permute.xlu0 %507
      %509 = vset.pattern.permute.xlu0 0
      %510 = vperm.xlu0 %509, %v260
      %v511 = vpop.permute.xlu0 %510
      %512 = vset.pattern.permute.xlu0 0
      %513 = vperm.xlu0 %512, %v261
      %v514 = vpop.permute.xlu0 %513
      %515 = vset.pattern.permute.xlu0 0
      %516 = vperm.xlu0 %515, %v262
      %v517 = vpop.permute.xlu0 %516
      %518 = vset.pattern.permute.xlu0 0
      %519 = vperm.xlu0 %518, %v263
      %v520 = vpop.permute.xlu0 %519
      %521 = vset.pattern.permute.xlu0 0
      %522 = vperm.xlu0 %521, %v264
      %v523 = vpop.permute.xlu0 %522
      %524 = vset.pattern.permute.xlu0 0
      %525 = vperm.xlu0 %524, %v265
      %v526 = vpop.permute.xlu0 %525
      %527 = vset.pattern.permute.xlu0 0
      %528 = vperm.xlu0 %527, %v266
      %v529 = vpop.permute.xlu0 %528
      %530 = vset.pattern.permute.xlu0 0
      %531 = vperm.xlu0 %530, %v267
      %v532 = vpop.permute.xlu0 %531
      %533 = vset.pattern.permute.xlu0 0
      %534 = vperm.xlu0 %533, %v268
      %v535 = vpop.permute.xlu0 %534
      %536 = vset.pattern.permute.xlu0 0
      %537 = vperm.xlu0 %536, %v269
      %v538 = vpop.permute.xlu0 %537
      %539 = vset.pattern.permute.xlu0 0
      %540 = vperm.xlu0 %539, %v270
      %v541 = vpop.permute.xlu0 %540
      %542 = vset.pattern.permute.xlu0 0
      %543 = vperm.xlu0 %542, %v271
      %v544 = vpop.permute.xlu0 %543
      %545 = vset.pattern.permute.xlu0 0
      %546 = vperm.xlu0 %545, %v272
      %v547 = vpop.permute.xlu0 %546
      %548 = vset.pattern.permute.xlu0 0
      %549 = vperm.xlu0 %548, %v273
      %v550 = vpop.permute.xlu0 %549
      %551 = vset.pattern.permute.xlu0 0
      %552 = vperm.xlu0 %551, %v274
      %v553 = vpop.permute.xlu0 %552
      %554 = vset.pattern.permute.xlu0 0
      %555 = vperm.xlu0 %554, %v275
      %v556 = vpop.permute.xlu0 %555
      %557 = vset.pattern.permute.xlu0 0
      %558 = vperm.xlu0 %557, %v276
      %v559 = vpop.permute.xlu0 %558
      %560 = vset.pattern.permute.xlu0 0
      %561 = vperm.xlu0 %560, %v277
      %v562 = vpop.permute.xlu0 %561
      %563 = vset.pattern.permute.xlu0 0
      %564 = vperm.xlu0 %563, %v278
      %v565 = vpop.permute.xlu0 %564
      %566 = vset.pattern.permute.xlu0 0
      %567 = vperm.xlu0 %566, %v279
      %v568 = vpop.permute.xlu0 %567
      %569 = vset.pattern.permute.xlu0 0
      %570 = vperm.xlu0 %569, %v280
      %v571 = vpop.permute.xlu0 %570
      %572 = vset.pattern.permute.xlu0 0
      %573 = vperm.xlu0 %572, %v281
      %v574 = vpop.permute.xlu0 %573
      %575 = vset.pattern.permute.xlu0 0
      %576 = vperm.xlu0 %575, %v282
      %v577 = vpop.permute.xlu0 %576
      %578 = vset.pattern.permute.xlu0 0
      %579 = vperm.xlu0 %578, %v283
      %v580 = vpop.permute.xlu0 %579
      %581 = vset.pattern.permute.xlu0 0
      %582 = vperm.xlu0 %581, %v284
      %v583 = vpop.permute.xlu0 %582
      %584 = vset.pattern.permute.xlu0 0
      %585 = vperm.xlu0 %584, %v285
      %v586 = vpop.permute.xlu0 %585
      %587 = vset.pattern.permute.xlu0 0
      %588 = vperm.xlu0 %587, %v286
      %v589 = vpop.permute.xlu0 %588
      %590 = vset.pattern.permute.xlu0 0
      %591 = vperm.xlu0 %590, %v287
      %v592 = vpop.permute.xlu0 %591
      %593 = vset.pattern.permute.xlu0 0
      %594 = vperm.xlu0 %593, %v288
      %v595 = vpop.permute.xlu0 %594
      %596 = vset.pattern.permute.xlu0 0
      %597 = vperm.xlu0 %596, %v289
      %v598 = vpop.permute.xlu0 %597
      %599 = vset.pattern.permute.xlu0 0
      %600 = vperm.xlu0 %599, %v290
      %v601 = vpop.permute.xlu0 %600
      %602 = vset.pattern.permute.xlu0 0
      %603 = vperm.xlu0 %602, %v291
      %v604 = vpop.permute.xlu0 %603
      %605 = vset.pattern.permute.xlu0 0
      %606 = vperm.xlu0 %605, %v292
      %v607 = vpop.permute.xlu0 %606
      %608 = vset.pattern.permute.xlu0 0
      %609 = vperm.xlu0 %608, %v293
      %v610 = vpop.permute.xlu0 %609
      %611 = vset.pattern.permute.xlu0 0
      %612 = vperm.xlu0 %611, %v294
      %v613 = vpop.permute.xlu0 %612
      %614 = vset.pattern.permute.xlu0 0
      %615 = vperm.xlu0 %614, %v295
      %v616 = vpop.permute.xlu0 %615
      %617 = vset.pattern.permute.xlu0 0
      %618 = vperm.xlu0 %617, %v296
      %v619 = vpop.permute.xlu0 %618
      %620 = vset.pattern.permute.xlu0 0
      %621 = vperm.xlu0 %620, %v297
      %v622 = vpop.permute.xlu0 %621
      %623 = vset.pattern.permute.xlu0 0
      %624 = vperm.xlu0 %623, %v298
      %v625 = vpop.permute.xlu0 %624
      %626 = vset.pattern.permute.xlu0 0
      %627 = vperm.xlu0 %626, %v299
      %v628 = vpop.permute.xlu0 %627
      %629 = vset.pattern.permute.xlu0 0
      %630 = vperm.xlu0 %629, %v300
      %v631 = vpop.permute.xlu0 %630
      %632 = vset.pattern.permute.xlu0 0
      %633 = vperm.xlu0 %632, %v301
      %v634 = vpop.permute.xlu0 %633
      %635 = vset.pattern.permute.xlu0 0
      %636 = vperm.xlu0 %635, %v302
      %v637 = vpop.permute.xlu0 %636
      %638 = vset.pattern.permute.xlu0 0
      %639 = vperm.xlu0 %638, %v303
      %v640 = vpop.permute.xlu0 %639
      %641 = vset.pattern.permute.xlu0 0
      %642 = vperm.xlu0 %641, %v304
      %v643 = vpop.permute.xlu0 %642
      %644 = vset.pattern.permute.xlu0 0
      %645 = vperm.xlu0 %644, %v305
      %v646 = vpop.permute.xlu0 %645
      %647 = vset.pattern.permute.xlu0 0
      %648 = vperm.xlu0 %647, %v306
      %v649 = vpop.permute.xlu0 %648
      %650 = vset.pattern.permute.xlu0 0
      %651 = vperm.xlu0 %650, %v307
      %v652 = vpop.permute.xlu0 %651
      %653 = vset.pattern.permute.xlu0 0
      %654 = vperm.xlu0 %653, %v308
      %v655 = vpop.permute.xlu0 %654
      %656 = vset.pattern.permute.xlu0 0
      %657 = vperm.xlu0 %656, %v309
      %v658 = vpop.permute.xlu0 %657
      %659 = vset.pattern.permute.xlu0 0
      %660 = vperm.xlu0 %659, %v310
      %v661 = vpop.permute.xlu0 %660
      %662 = vset.pattern.permute.xlu0 0
      %663 = vperm.xlu0 %662, %v311
      %v664 = vpop.permute.xlu0 %663
      %665 = vset.pattern.permute.xlu0 0
      %666 = vperm.xlu0 %665, %v312
      %v667 = vpop.permute.xlu0 %666
      %668 = vset.pattern.permute.xlu0 0
      %669 = vperm.xlu0 %668, %v313
      %v670 = vpop.permute.xlu0 %669
      %671 = vset.pattern.permute.xlu0 0
      %672 = vperm.xlu0 %671, %v314
      %v673 = vpop.permute.xlu0 %672
      %674 = vset.pattern.permute.xlu0 0
      %675 = vperm.xlu0 %674, %v315
      %v676 = vpop.permute.xlu0 %675
      %677 = vset.pattern.permute.xlu0 0
      %678 = vperm.xlu0 %677, %v316
      %v679 = vpop.permute.xlu0 %678
      %680 = vset.pattern.permute.xlu0 0
      %681 = vperm.xlu0 %680, %v317
      %v682 = vpop.permute.xlu0 %681
      %683 = vset.pattern.permute.xlu0 0
      %684 = vperm.xlu0 %683, %v318
      %v685 = vpop.permute.xlu0 %684
      %686 = vset.pattern.permute.xlu0 0
      %687 = vperm.xlu0 %686, %v319
      %v688 = vpop.permute.xlu0 %687
      %689 = vset.pattern.permute.xlu0 0
      %690 = vperm.xlu0 %689, %v320
      %v691 = vpop.permute.xlu0 %690
      %692 = vset.pattern.permute.xlu0 0
      %693 = vperm.xlu0 %692, %v321
      %v694 = vpop.permute.xlu0 %693
      %695 = vset.pattern.permute.xlu0 0
      %696 = vperm.xlu0 %695, %v322
      %v697 = vpop.permute.xlu0 %696
      %698 = vset.pattern.permute.xlu0 0
      %699 = vperm.xlu0 %698, %v323
      %v700 = vpop.permute.xlu0 %699
      %vm701 = vcmp.eq.s32.totalorder %v328, %v325
      %vm702 = vcmp.eq.s32.totalorder %v331, %v325
      %vm703 = vcmp.eq.s32.totalorder %v334, %v325
      %vm704 = vcmp.eq.s32.totalorder %v337, %v325
      %vm705 = vcmp.eq.s32.totalorder %v340, %v325
      %vm706 = vcmp.eq.s32.totalorder %v343, %v325
      %vm707 = vcmp.eq.s32.totalorder %v346, %v325
      %vm708 = vcmp.eq.s32.totalorder %v349, %v325
      %vm709 = vcmp.eq.s32.totalorder %v352, %v325
      %vm710 = vcmp.eq.s32.totalorder %v355, %v325
      %vm711 = vcmp.eq.s32.totalorder %v358, %v325
      %vm712 = vcmp.eq.s32.totalorder %v361, %v325
      %vm713 = vcmp.eq.s32.totalorder %v364, %v325
      %vm714 = vcmp.eq.s32.totalorder %v367, %v325
      %vm715 = vcmp.eq.s32.totalorder %v370, %v325
      %vm716 = vcmp.eq.s32.totalorder %v373, %v325
      %vm717 = vcmp.eq.s32.totalorder %v376, %v325
      %vm718 = vcmp.eq.s32.totalorder %v379, %v325
      %vm719 = vcmp.eq.s32.totalorder %v382, %v325
      %vm720 = vcmp.eq.s32.totalorder %v385, %v325
      %vm721 = vcmp.eq.s32.totalorder %v388, %v325
      %vm722 = vcmp.eq.s32.totalorder %v391, %v325
      %vm723 = vcmp.eq.s32.totalorder %v394, %v325
      %vm724 = vcmp.eq.s32.totalorder %v397, %v325
      %vm725 = vcmp.eq.s32.totalorder %v400, %v325
      %vm726 = vcmp.eq.s32.totalorder %v403, %v325
      %vm727 = vcmp.eq.s32.totalorder %v406, %v325
      %vm728 = vcmp.eq.s32.totalorder %v409, %v325
      %vm729 = vcmp.eq.s32.totalorder %v412, %v325
      %vm730 = vcmp.eq.s32.totalorder %v415, %v325
      %vm731 = vcmp.eq.s32.totalorder %v418, %v325
      %vm732 = vcmp.eq.s32.totalorder %v421, %v325
      %vm733 = vcmp.eq.s32.totalorder %v424, %v325
      %vm734 = vcmp.eq.s32.totalorder %v427, %v325
      %vm735 = vcmp.eq.s32.totalorder %v430, %v325
      %vm736 = vcmp.eq.s32.totalorder %v433, %v325
      %vm737 = vcmp.eq.s32.totalorder %v436, %v325
      %vm738 = vcmp.eq.s32.totalorder %v439, %v325
      %vm739 = vcmp.eq.s32.totalorder %v442, %v325
      %vm740 = vcmp.eq.s32.totalorder %v445, %v325
      %vm741 = vcmp.eq.s32.totalorder %v448, %v325
      %vm742 = vcmp.eq.s32.totalorder %v451, %v325
      %vm743 = vcmp.eq.s32.totalorder %v454, %v325
      %vm744 = vcmp.eq.s32.totalorder %v457, %v325
      %vm745 = vcmp.eq.s32.totalorder %v460, %v325
      %vm746 = vcmp.eq.s32.totalorder %v463, %v325
      %vm747 = vcmp.eq.s32.totalorder %v466, %v325
      %vm748 = vcmp.eq.s32.totalorder %v469, %v325
      %vm749 = vcmp.eq.s32.totalorder %v472, %v325
      %vm750 = vcmp.eq.s32.totalorder %v475, %v325
      %vm751 = vcmp.eq.s32.totalorder %v478, %v325
      %vm752 = vcmp.eq.s32.totalorder %v481, %v325
      %vm753 = vcmp.eq.s32.totalorder %v484, %v325
      %vm754 = vcmp.eq.s32.totalorder %v487, %v325
      %vm755 = vcmp.eq.s32.totalorder %v490, %v325
      %vm756 = vcmp.eq.s32.totalorder %v493, %v325
      %vm757 = vcmp.eq.s32.totalorder %v496, %v325
      %vm758 = vcmp.eq.s32.totalorder %v499, %v325
      %vm759 = vcmp.eq.s32.totalorder %v502, %v325
      %vm760 = vcmp.eq.s32.totalorder %v505, %v325
      %vm761 = vcmp.eq.s32.totalorder %v508, %v325
      %vm762 = vcmp.eq.s32.totalorder %v511, %v325
      %vm763 = vcmp.eq.s32.totalorder %v514, %v325
      %vm764 = vcmp.eq.s32.totalorder %v517, %v325
      %vm765 = vcmp.eq.s32.totalorder %v520, %v325
      %vm766 = vcmp.eq.s32.totalorder %v523, %v325
      %vm767 = vcmp.eq.s32.totalorder %v526, %v325
      %vm768 = vcmp.eq.s32.totalorder %v529, %v325
      %vm769 = vcmp.eq.s32.totalorder %v532, %v325
      %vm770 = vcmp.eq.s32.totalorder %v535, %v325
      %vm771 = vcmp.eq.s32.totalorder %v538, %v325
      %vm772 = vcmp.eq.s32.totalorder %v541, %v325
      %vm773 = vcmp.eq.s32.totalorder %v544, %v325
      %vm774 = vcmp.eq.s32.totalorder %v547, %v325
      %vm775 = vcmp.eq.s32.totalorder %v550, %v325
      %vm776 = vcmp.eq.s32.totalorder %v553, %v325
      %vm777 = vcmp.eq.s32.totalorder %v556, %v325
      %vm778 = vcmp.eq.s32.totalorder %v559, %v325
      %vm779 = vcmp.eq.s32.totalorder %v562, %v325
      %vm780 = vcmp.eq.s32.totalorder %v565, %v325
      %vm781 = vcmp.eq.s32.totalorder %v568, %v325
      %vm782 = vcmp.eq.s32.totalorder %v571, %v325
      %vm783 = vcmp.eq.s32.totalorder %v574, %v325
      %vm784 = vcmp.eq.s32.totalorder %v577, %v325
      %vm785 = vcmp.eq.s32.totalorder %v580, %v325
      %vm786 = vcmp.eq.s32.totalorder %v583, %v325
      %vm787 = vcmp.eq.s32.totalorder %v586, %v325
      %vm788 = vcmp.eq.s32.totalorder %v589, %v325
      %vm789 = vcmp.eq.s32.totalorder %v592, %v325
      %vm790 = vcmp.eq.s32.totalorder %v595, %v325
      %vm791 = vcmp.eq.s32.totalorder %v598, %v325
      %vm792 = vcmp.eq.s32.totalorder %v601, %v325
      %vm793 = vcmp.eq.s32.totalorder %v604, %v325
      %vm794 = vcmp.eq.s32.totalorder %v607, %v325
      %vm795 = vcmp.eq.s32.totalorder %v610, %v325
      %vm796 = vcmp.eq.s32.totalorder %v613, %v325
      %vm797 = vcmp.eq.s32.totalorder %v616, %v325
      %vm798 = vcmp.eq.s32.totalorder %v619, %v325
      %vm799 = vcmp.eq.s32.totalorder %v622, %v325
      %vm800 = vcmp.eq.s32.totalorder %v625, %v325
      %vm801 = vcmp.eq.s32.totalorder %v628, %v325
      %vm802 = vcmp.eq.s32.totalorder %v631, %v325
      %vm803 = vcmp.eq.s32.totalorder %v634, %v325
      %vm804 = vcmp.eq.s32.totalorder %v637, %v325
      %vm805 = vcmp.eq.s32.totalorder %v640, %v325
      %vm806 = vcmp.eq.s32.totalorder %v643, %v325
      %vm807 = vcmp.eq.s32.totalorder %v646, %v325
      %vm808 = vcmp.eq.s32.totalorder %v649, %v325
      %vm809 = vcmp.eq.s32.totalorder %v652, %v325
      %vm810 = vcmp.eq.s32.totalorder %v655, %v325
      %vm811 = vcmp.eq.s32.totalorder %v658, %v325
      %vm812 = vcmp.eq.s32.totalorder %v661, %v325
      %vm813 = vcmp.eq.s32.totalorder %v664, %v325
      %vm814 = vcmp.eq.s32.totalorder %v667, %v325
      %vm815 = vcmp.eq.s32.totalorder %v670, %v325
      %vm816 = vcmp.eq.s32.totalorder %v673, %v325
      %vm817 = vcmp.eq.s32.totalorder %v676, %v325
      %vm818 = vcmp.eq.s32.totalorder %v679, %v325
      %vm819 = vcmp.eq.s32.totalorder %v682, %v325
      %vm820 = vcmp.eq.s32.totalorder %v685, %v325
      %vm821 = vcmp.eq.s32.totalorder %v688, %v325
      %vm822 = vcmp.eq.s32.totalorder %v691, %v325
      %vm823 = vcmp.eq.s32.totalorder %v694, %v325
      %vm824 = vcmp.eq.s32.totalorder %v697, %v325
      %vm825 = vcmp.eq.s32.totalorder %v700, %v325
      %v826 = vsel %vm701, 1.0, 0.0
      %v827 = vsel %vm702, 1.0, 0.0
      %v828 = vsel %vm703, 1.0, 0.0
      %v829 = vsel %vm704, 1.0, 0.0
      %v830 = vsel %vm705, 1.0, 0.0
      %v831 = vsel %vm706, 1.0, 0.0
      %v832 = vsel %vm707, 1.0, 0.0
      %v833 = vsel %vm708, 1.0, 0.0
      %v834 = vsel %vm709, 1.0, 0.0
      %v835 = vsel %vm710, 1.0, 0.0
      %v836 = vsel %vm711, 1.0, 0.0
      %v837 = vsel %vm712, 1.0, 0.0
      %v838 = vsel %vm713, 1.0, 0.0
      %v839 = vsel %vm714, 1.0, 0.0
      %v840 = vsel %vm715, 1.0, 0.0
      %v841 = vsel %vm716, 1.0, 0.0
      %v842 = vsel %vm717, 1.0, 0.0
      %v843 = vsel %vm718, 1.0, 0.0
      %v844 = vsel %vm719, 1.0, 0.0
      %v845 = vsel %vm720, 1.0, 0.0
      %v846 = vsel %vm721, 1.0, 0.0
      %v847 = vsel %vm722, 1.0, 0.0
      %v848 = vsel %vm723, 1.0, 0.0
      %v849 = vsel %vm724, 1.0, 0.0
      %v850 = vsel %vm725, 1.0, 0.0
      %v851 = vsel %vm726, 1.0, 0.0
      %v852 = vsel %vm727, 1.0, 0.0
      %v853 = vsel %vm728, 1.0, 0.0
      %v854 = vsel %vm729, 1.0, 0.0
      %v855 = vsel %vm730, 1.0, 0.0
      %v856 = vsel %vm731, 1.0, 0.0
      %v857 = vsel %vm732, 1.0, 0.0
      %v858 = vsel %vm733, 1.0, 0.0
      %v859 = vsel %vm734, 1.0, 0.0
      %v860 = vsel %vm735, 1.0, 0.0
      %v861 = vsel %vm736, 1.0, 0.0
      %v862 = vsel %vm737, 1.0, 0.0
      %v863 = vsel %vm738, 1.0, 0.0
      %v864 = vsel %vm739, 1.0, 0.0
      %v865 = vsel %vm740, 1.0, 0.0
      %v866 = vsel %vm741, 1.0, 0.0
      %v867 = vsel %vm742, 1.0, 0.0
      %v868 = vsel %vm743, 1.0, 0.0
      %v869 = vsel %vm744, 1.0, 0.0
      %v870 = vsel %vm745, 1.0, 0.0
      %v871 = vsel %vm746, 1.0, 0.0
      %v872 = vsel %vm747, 1.0, 0.0
      %v873 = vsel %vm748, 1.0, 0.0
      %v874 = vsel %vm749, 1.0, 0.0
      %v875 = vsel %vm750, 1.0, 0.0
      %v876 = vsel %vm751, 1.0, 0.0
      %v877 = vsel %vm752, 1.0, 0.0
      %v878 = vsel %vm753, 1.0, 0.0
      %v879 = vsel %vm754, 1.0, 0.0
      %v880 = vsel %vm755, 1.0, 0.0
      %v881 = vsel %vm756, 1.0, 0.0
      %v882 = vsel %vm757, 1.0, 0.0
      %v883 = vsel %vm758, 1.0, 0.0
      %v884 = vsel %vm759, 1.0, 0.0
      %v885 = vsel %vm760, 1.0, 0.0
      %v886 = vsel %vm761, 1.0, 0.0
      %v887 = vsel %vm762, 1.0, 0.0
      %v888 = vsel %vm763, 1.0, 0.0
      %v889 = vsel %vm764, 1.0, 0.0
      %v890 = vsel %vm765, 1.0, 0.0
      %v891 = vsel %vm766, 1.0, 0.0
      %v892 = vsel %vm767, 1.0, 0.0
      %v893 = vsel %vm768, 1.0, 0.0
      %v894 = vsel %vm769, 1.0, 0.0
      %v895 = vsel %vm770, 1.0, 0.0
      %v896 = vsel %vm771, 1.0, 0.0
      %v897 = vsel %vm772, 1.0, 0.0
      %v898 = vsel %vm773, 1.0, 0.0
      %v899 = vsel %vm774, 1.0, 0.0
      %v900 = vsel %vm775, 1.0, 0.0
      %v901 = vsel %vm776, 1.0, 0.0
      %v902 = vsel %vm777, 1.0, 0.0
      %v903 = vsel %vm778, 1.0, 0.0
      %v904 = vsel %vm779, 1.0, 0.0
      %v905 = vsel %vm780, 1.0, 0.0
      %v906 = vsel %vm781, 1.0, 0.0
      %v907 = vsel %vm782, 1.0, 0.0
      %v908 = vsel %vm783, 1.0, 0.0
      %v909 = vsel %vm784, 1.0, 0.0
      %v910 = vsel %vm785, 1.0, 0.0
      %v911 = vsel %vm786, 1.0, 0.0
      %v912 = vsel %vm787, 1.0, 0.0
      %v913 = vsel %vm788, 1.0, 0.0
      %v914 = vsel %vm789, 1.0, 0.0
      %v915 = vsel %vm790, 1.0, 0.0
      %v916 = vsel %vm791, 1.0, 0.0
      %v917 = vsel %vm792, 1.0, 0.0
      %v918 = vsel %vm793, 1.0, 0.0
      %v919 = vsel %vm794, 1.0, 0.0
      %v920 = vsel %vm795, 1.0, 0.0
      %v921 = vsel %vm796, 1.0, 0.0
      %v922 = vsel %vm797, 1.0, 0.0
      %v923 = vsel %vm798, 1.0, 0.0
      %v924 = vsel %vm799, 1.0, 0.0
      %v925 = vsel %vm800, 1.0, 0.0
      %v926 = vsel %vm801, 1.0, 0.0
      %v927 = vsel %vm802, 1.0, 0.0
      %v928 = vsel %vm803, 1.0, 0.0
      %v929 = vsel %vm804, 1.0, 0.0
      %v930 = vsel %vm805, 1.0, 0.0
      %v931 = vsel %vm806, 1.0, 0.0
      %v932 = vsel %vm807, 1.0, 0.0
      %v933 = vsel %vm808, 1.0, 0.0
      %v934 = vsel %vm809, 1.0, 0.0
      %v935 = vsel %vm810, 1.0, 0.0
      %v936 = vsel %vm811, 1.0, 0.0
      %v937 = vsel %vm812, 1.0, 0.0
      %v938 = vsel %vm813, 1.0, 0.0
      %v939 = vsel %vm814, 1.0, 0.0
      %v940 = vsel %vm815, 1.0, 0.0
      %v941 = vsel %vm816, 1.0, 0.0
      %v942 = vsel %vm817, 1.0, 0.0
      %v943 = vsel %vm818, 1.0, 0.0
      %v944 = vsel %vm819, 1.0, 0.0
      %v945 = vsel %vm820, 1.0, 0.0
      %v946 = vsel %vm821, 1.0, 0.0
      %v947 = vsel %vm822, 1.0, 0.0
      %v948 = vsel %vm823, 1.0, 0.0
      %v949 = vsel %vm824, 1.0, 0.0
      %v950 = vsel %vm825, 1.0, 0.0
      %v951 = vpack.c.bf16 %v827, %v826
      %v952 = vpack.c.bf16 %v829, %v828
      %v953 = vpack.c.bf16 %v831, %v830
      %v954 = vpack.c.bf16 %v833, %v832
      %v955 = vpack.c.bf16 %v835, %v834
      %v956 = vpack.c.bf16 %v837, %v836
      %v957 = vpack.c.bf16 %v839, %v838
      %v958 = vpack.c.bf16 %v841, %v840
      %v959 = vpack.c.bf16 %v843, %v842
      %v960 = vpack.c.bf16 %v845, %v844
      %v961 = vpack.c.bf16 %v847, %v846
      %v962 = vpack.c.bf16 %v849, %v848
      %v963 = vpack.c.bf16 %v851, %v850
      %v964 = vpack.c.bf16 %v853, %v852
      %v965 = vpack.c.bf16 %v855, %v854
      %v966 = vpack.c.bf16 %v857, %v856
      %v967 = vpack.c.bf16 %v859, %v858
      %v968 = vpack.c.bf16 %v861, %v860
      %v969 = vpack.c.bf16 %v863, %v862
      %v970 = vpack.c.bf16 %v865, %v864
      %v971 = vpack.c.bf16 %v867, %v866
      %v972 = vpack.c.bf16 %v869, %v868
      %v973 = vpack.c.bf16 %v871, %v870
      %v974 = vpack.c.bf16 %v873, %v872
      %v975 = vpack.c.bf16 %v875, %v874
      %v976 = vpack.c.bf16 %v877, %v876
      %v977 = vpack.c.bf16 %v879, %v878
      %v978 = vpack.c.bf16 %v881, %v880
      %v979 = vpack.c.bf16 %v883, %v882
      %v980 = vpack.c.bf16 %v885, %v884
      %v981 = vpack.c.bf16 %v887, %v886
      %v982 = vpack.c.bf16 %v889, %v888
      %v983 = vpack.c.bf16 %v891, %v890
      %v984 = vpack.c.bf16 %v893, %v892
      %v985 = vpack.c.bf16 %v895, %v894
      %v986 = vpack.c.bf16 %v897, %v896
      %v987 = vpack.c.bf16 %v899, %v898
      %v988 = vpack.c.bf16 %v901, %v900
      %v989 = vpack.c.bf16 %v903, %v902
      %v990 = vpack.c.bf16 %v905, %v904
      %v991 = vpack.c.bf16 %v907, %v906
      %v992 = vpack.c.bf16 %v909, %v908
      %v993 = vpack.c.bf16 %v911, %v910
      %v994 = vpack.c.bf16 %v913, %v912
      %v995 = vpack.c.bf16 %v915, %v914
      %v996 = vpack.c.bf16 %v917, %v916
      %v997 = vpack.c.bf16 %v919, %v918
      %v998 = vpack.c.bf16 %v921, %v920
      %v999 = vpack.c.bf16 %v923, %v922
      %v1000 = vpack.c.bf16 %v925, %v924
      %v1001 = vpack.c.bf16 %v927, %v926
      %v1002 = vpack.c.bf16 %v929, %v928
      %v1003 = vpack.c.bf16 %v931, %v930
      %v1004 = vpack.c.bf16 %v933, %v932
      %v1005 = vpack.c.bf16 %v935, %v934
      %v1006 = vpack.c.bf16 %v937, %v936
      %v1007 = vpack.c.bf16 %v939, %v938
      %v1008 = vpack.c.bf16 %v941, %v940
      %v1009 = vpack.c.bf16 %v943, %v942
      %v1010 = vpack.c.bf16 %v945, %v944
      %v1011 = vpack.c.bf16 %v947, %v946
      %v1012 = vpack.c.bf16 %v949, %v948
      %v1013 = vpack.c.bf16 %v950, %v950
      %v1014 = vld [vmem:[%s1] sm:$0xf]
      %v1015 = vld [vmem:[%s1 + $0x4] sm:$0xf]
      %v1016 = vld [vmem:[%s1 + $0x8] sm:$0xf]
      %v1017 = vld [vmem:[%s1 + $0xc] sm:$0xf]
      %v1022 = vunpack.c.l.b16 %v1014
      %v1023 = vunpack.c.l.b16 %v1015
      %v1024 = vunpack.c.l.b16 %v1016
      %v1025 = vunpack.c.l.b16 %v1017
      %v1026 = vpack.c.b16 %v1023, %v1022
      %v1027 = vpack.c.b16 %v1025, %v1024
      %vm1030 = vcmask 261120
      %v1032 = vsel %vm1030, %v951, 0
      %v1035 = vsel %vm1030, %v952, 0
      %v1038 = vsel %vm1030, %v953, 0
      %v1041 = vsel %vm1030, %v954, 0
      %v1044 = vsel %vm1030, %v955, 0
      %v1047 = vsel %vm1030, %v956, 0
      %v1050 = vsel %vm1030, %v957, 0
      %v1053 = vsel %vm1030, %v958, 0
      %v1056 = vsel %vm1030, %v959, 0
      %v1059 = vsel %vm1030, %v960, 0
      %v1062 = vsel %vm1030, %v961, 0
      %v1065 = vsel %vm1030, %v962, 0
      %v1068 = vsel %vm1030, %v963, 0
      %v1071 = vsel %vm1030, %v964, 0
      %v1074 = vsel %vm1030, %v965, 0
      %v1077 = vsel %vm1030, %v966, 0
      %v1080 = vsel %vm1030, %v967, 0
      %v1083 = vsel %vm1030, %v968, 0
      %v1086 = vsel %vm1030, %v969, 0
      %v1089 = vsel %vm1030, %v970, 0
      %v1092 = vsel %vm1030, %v971, 0
      %v1095 = vsel %vm1030, %v972, 0
      %v1098 = vsel %vm1030, %v973, 0
      %v1101 = vsel %vm1030, %v974, 0
      %v1104 = vsel %vm1030, %v975, 0
      %v1107 = vsel %vm1030, %v976, 0
      %v1110 = vsel %vm1030, %v977, 0
      %v1113 = vsel %vm1030, %v978, 0
      %v1116 = vsel %vm1030, %v979, 0
      %v1119 = vsel %vm1030, %v980, 0
      %v1122 = vsel %vm1030, %v981, 0
      %v1125 = vsel %vm1030, %v982, 0
      %v1128 = vsel %vm1030, %v983, 0
      %v1131 = vsel %vm1030, %v984, 0
      %v1134 = vsel %vm1030, %v985, 0
      %v1137 = vsel %vm1030, %v986, 0
      %v1140 = vsel %vm1030, %v987, 0
      %v1143 = vsel %vm1030, %v988, 0
      %v1146 = vsel %vm1030, %v989, 0
      %v1149 = vsel %vm1030, %v990, 0
      %v1152 = vsel %vm1030, %v991, 0
      %v1155 = vsel %vm1030, %v992, 0
      %v1158 = vsel %vm1030, %v993, 0
      %v1161 = vsel %vm1030, %v994, 0
      %v1164 = vsel %vm1030, %v995, 0
      %v1167 = vsel %vm1030, %v996, 0
      %v1170 = vsel %vm1030, %v997, 0
      %v1173 = vsel %vm1030, %v998, 0
      %v1176 = vsel %vm1030, %v999, 0
      %v1179 = vsel %vm1030, %v1000, 0
      %v1182 = vsel %vm1030, %v1001, 0
      %v1185 = vsel %vm1030, %v1002, 0
      %v1188 = vsel %vm1030, %v1003, 0
      %v1191 = vsel %vm1030, %v1004, 0
      %v1194 = vsel %vm1030, %v1005, 0
      %v1197 = vsel %vm1030, %v1006, 0
      %v1200 = vsel %vm1030, %v1007, 0
      %v1203 = vsel %vm1030, %v1008, 0
      %v1206 = vsel %vm1030, %v1009, 0
      %v1209 = vsel %vm1030, %v1010, 0
      %v1212 = vsel %vm1030, %v1011, 0
      %v1215 = vsel %vm1030, %v1012, 0
      %v1218 = vsel %vm1030, %v1013, 0
      %1220 = vmatprep.subr.bf16.mxu0 0
      %1221 = vmatpush1.bf16.msra.mxu0 %v1026
      %1222 = vmatprep.subr.bf16.mxu0 0
      %1223 = vmatpush1.bf16.msra.mxu0 %v1027
      %1224 = vmatprep.subr.bf16.mxu0 0
      %1225 = vmatpush1.bf16.msra.mxu0 0
      %1226 = vmatprep.subr.bf16.mxu0 0
      %1227 = vmatpush1.bf16.msra.mxu0 0
      %1228 = vmatprep.subr.bf16.mxu0 0
      %1229 = vmatpush1.bf16.msra.mxu0 0
      %1230 = vmatprep.subr.bf16.mxu0 0
      %1231 = vmatpush1.bf16.msra.mxu0 0
      %1232 = vmatprep.subr.bf16.mxu0 0
      %1233 = vmatpush1.bf16.msra.mxu0 0
      %1234 = vmatprep.subr.bf16.mxu0 0
      %1235 = vmatpush1.bf16.msra.mxu0 0
      %1236 = vmatprep.subr.bf16.mxu0 0
      %1237 = vmatpush1.bf16.msra.mxu0 0
      %1238 = vmatprep.subr.bf16.mxu0 0
      %1239 = vmatpush1.bf16.msra.mxu0 0
      %1240 = vmatprep.subr.bf16.mxu0 0
      %1241 = vmatpush1.bf16.msra.mxu0 0
      %1242 = vmatprep.subr.bf16.mxu0 0
      %1243 = vmatpush1.bf16.msra.mxu0 0
      %1244 = vmatprep.subr.bf16.mxu0 0
      %1245 = vmatpush1.bf16.msra.mxu0 0
      %1246 = vmatprep.subr.bf16.mxu0 0
      %1247 = vmatpush1.bf16.msra.mxu0 0
      %1248 = vmatprep.subr.bf16.mxu0 0
      %1249 = vmatpush1.bf16.msra.mxu0 0
      %1250 = vmatprep.subr.bf16.mxu0 0
      %1251 = vmatpush1.bf16.msra.mxu0 0
      %1252 = vmatprep.mubr.bf16.mxu0 0
      %1253 = vmatmul.mubr.bf16.gmra.mrb[0].mxu0 %v1032
      %v1254 = vpop.f32.mrb[0].mxu0
      %v1255 = vadd.f32 0.0, %v1254
      %v1256 = vpop.f32.mrb[0].mxu0
      %v1257 = vpop.f32.mrb[0].mxu0
      %v1258 = vadd.f32 0.0, %v1257
      %v1259 = vpop.f32.mrb[0].mxu0
      %1260 = vmatprep.mubr.bf16.mxu0 0
      %1261 = vmatmul.mubr.bf16.gmra.mrb[0].mxu0 %v1035
      %v1262 = vpop.f32.mrb[0].mxu0
      %v1263 = vadd.f32 0.0, %v1262
      %v1264 = vpop.f32.mrb[0].mxu0
      %v1265 = vpop.f32.mrb[0].mxu0
      %v1266 = vadd.f32 0.0, %v1265
      %v1267 = vpop.f32.mrb[0].mxu0
      %1268 = vmatprep.mubr.bf16.mxu0 0
      %1269 = vmatmul.mubr.bf16.gmra.mrb[0].mxu0 %v1038
      %v1270 = vpop.f32.mrb[0].mxu0
      %v1271 = vadd.f32 0.0, %v1270
      %v1272 = vpop.f32.mrb[0].mxu0
      %v1273 = vpop.f32.mrb[0].mxu0
      %v1274 = vadd.f32 0.0, %v1273
      %v1275 = vpop.f32.mrb[0].mxu0
      %1276 = vmatprep.mubr.bf16.mxu0 0
      %1277 = vmatmul.mubr.bf16.gmra.mrb[0].mxu0 %v1041
      %v1278 = vpop.f32.mrb[0].mxu0
      %v1279 = vadd.f32 0.0, %v1278
      %v1280 = vpop.f32.mrb[0].mxu0
      %v1281 = vpop.f32.mrb[0].mxu0
      %v1282 = vadd.f32 0.0, %v1281
      %v1283 = vpop.f32.mrb[0].mxu0
      %1284 = vmatprep.mubr.bf16.mxu0 0
      %1285 = vmatmul.mubr.bf16.gmra.mrb[0].mxu0 %v1044
      %v1286 = vpop.f32.mrb[0].mxu0
      %v1287 = vadd.f32 0.0, %v1286
      %v1288 = vpop.f32.mrb[0].mxu0
      %v1289 = vpop.f32.mrb[0].mxu0
      %v1290 = vadd.f32 0.0, %v1289
      %v1291 = vpop.f32.mrb[0].mxu0
      %1292 = vmatprep.mubr.bf16.mxu0 0
      %1293 = vmatmul.mubr.bf16.gmra.mrb[0].mxu0 %v1047
      %v1294 = vpop.f32.mrb[0].mxu0
      %v1295 = vadd.f32 0.0, %v1294
      %v1296 = vpop.f32.mrb[0].mxu0
      %v1297 = vpop.f32.mrb[0].mxu0
      %v1298 = vadd.f32 0.0, %v1297
      %v1299 = vpop.f32.mrb[0].mxu0
      %1300 = vmatprep.mubr.bf16.mxu0 0
      %1301 = vmatmul.mubr.bf16.gmra.mrb[0].mxu0 %v1050
      %v1302 = vpop.f32.mrb[0].mxu0
      %v1303 = vadd.f32 0.0, %v1302
      %v1304 = vpop.f32.mrb[0].mxu0
      %v1305 = vpop.f32.mrb[0].mxu0
      %v1306 = vadd.f32 0.0, %v1305
      %v1307 = vpop.f32.mrb[0].mxu0
      %1308 = vmatprep.mubr.bf16.mxu0 0
      %1309 = vmatmul.mubr.bf16.gmra.mrb[0].mxu0 %v1053
      %v1310 = vpop.f32.mrb[0].mxu0
      %v1311 = vadd.f32 0.0, %v1310
      %v1312 = vpop.f32.mrb[0].mxu0
      %v1313 = vpop.f32.mrb[0].mxu0
      %v1314 = vadd.f32 0.0, %v1313
      %v1315 = vpop.f32.mrb[0].mxu0
      %1316 = vmatprep.mubr.bf16.mxu0 0
      %1317 = vmatmul.mubr.bf16.gmra.mrb[0].mxu0 %v1056
      %v1318 = vpop.f32.mrb[0].mxu0
      %v1319 = vadd.f32 0.0, %v1318
      %v1320 = vpop.f32.mrb[0].mxu0
      %v1321 = vpop.f32.mrb[0].mxu0
      %v1322 = vadd.f32 0.0, %v1321
      %v1323 = vpop.f32.mrb[0].mxu0
      %1324 = vmatprep.mubr.bf16.mxu0 0
      %1325 = vmatmul.mubr.bf16.gmra.mrb[0].mxu0 %v1059
      %v1326 = vpop.f32.mrb[0].mxu0
      %v1327 = vadd.f32 0.0, %v1326
      %v1328 = vpop.f32.mrb[0].mxu0
      %v1329 = vpop.f32.mrb[0].mxu0
      %v1330 = vadd.f32 0.0, %v1329
      %v1331 = vpop.f32.mrb[0].mxu0
      %1332 = vmatprep.mubr.bf16.mxu0 0
      %1333 = vmatmul.mubr.bf16.gmra.mrb[0].mxu0 %v1062
      %v1334 = vpop.f32.mrb[0].mxu0
      %v1335 = vadd.f32 0.0, %v1334
      %v1336 = vpop.f32.mrb[0].mxu0
      %v1337 = vpop.f32.mrb[0].mxu0
      %v1338 = vadd.f32 0.0, %v1337
      %v1339 = vpop.f32.mrb[0].mxu0
      %1340 = vmatprep.mubr.bf16.mxu0 0
      %1341 = vmatmul.mubr.bf16.gmra.mrb[0].mxu0 %v1065
      %v1342 = vpop.f32.mrb[0].mxu0
      %v1343 = vadd.f32 0.0, %v1342
      %v1344 = vpop.f32.mrb[0].mxu0
      %v1345 = vpop.f32.mrb[0].mxu0
      %v1346 = vadd.f32 0.0, %v1345
      %v1347 = vpop.f32.mrb[0].mxu0
      %1348 = vmatprep.mubr.bf16.mxu0 0
      %1349 = vmatmul.mubr.bf16.gmra.mrb[0].mxu0 %v1068
      %v1350 = vpop.f32.mrb[0].mxu0
      %v1351 = vadd.f32 0.0, %v1350
      %v1352 = vpop.f32.mrb[0].mxu0
      %v1353 = vpop.f32.mrb[0].mxu0
      %v1354 = vadd.f32 0.0, %v1353
      %v1355 = vpop.f32.mrb[0].mxu0
      %1356 = vmatprep.mubr.bf16.mxu0 0
      %1357 = vmatmul.mubr.bf16.gmra.mrb[0].mxu0 %v1071
      %v1358 = vpop.f32.mrb[0].mxu0
      %v1359 = vadd.f32 0.0, %v1358
      %v1360 = vpop.f32.mrb[0].mxu0
      %v1361 = vpop.f32.mrb[0].mxu0
      %v1362 = vadd.f32 0.0, %v1361
      %v1363 = vpop.f32.mrb[0].mxu0
      %1364 = vmatprep.mubr.bf16.mxu0 0
      %1365 = vmatmul.mubr.bf16.gmra.mrb[0].mxu0 %v1074
      %v1366 = vpop.f32.mrb[0].mxu0
      %v1367 = vadd.f32 0.0, %v1366
      %v1368 = vpop.f32.mrb[0].mxu0
      %v1369 = vpop.f32.mrb[0].mxu0
      %v1370 = vadd.f32 0.0, %v1369
      %v1371 = vpop.f32.mrb[0].mxu0
      %1372 = vmatprep.mubr.bf16.mxu0 0
      %1373 = vmatmul.mubr.bf16.gmra.mrb[0].mxu0 %v1077
      %v1374 = vpop.f32.mrb[0].mxu0
      %v1375 = vadd.f32 0.0, %v1374
      %v1376 = vpop.f32.mrb[0].mxu0
      %v1377 = vpop.f32.mrb[0].mxu0
      %v1378 = vadd.f32 0.0, %v1377
      %v1379 = vpop.f32.mrb[0].mxu0
      %1380 = vmatprep.mubr.bf16.mxu0 0
      %1381 = vmatmul.mubr.bf16.gmra.mrb[0].mxu0 %v1080
      %v1382 = vpop.f32.mrb[0].mxu0
      %v1383 = vadd.f32 0.0, %v1382
      %v1384 = vpop.f32.mrb[0].mxu0
      %v1385 = vpop.f32.mrb[0].mxu0
      %v1386 = vadd.f32 0.0, %v1385
      %v1387 = vpop.f32.mrb[0].mxu0
      %1388 = vmatprep.mubr.bf16.mxu0 0
      %1389 = vmatmul.mubr.bf16.gmra.mrb[0].mxu0 %v1083
      %v1390 = vpop.f32.mrb[0].mxu0
      %v1391 = vadd.f32 0.0, %v1390
      %v1392 = vpop.f32.mrb[0].mxu0
      %v1393 = vpop.f32.mrb[0].mxu0
      %v1394 = vadd.f32 0.0, %v1393
      %v1395 = vpop.f32.mrb[0].mxu0
      %1396 = vmatprep.mubr.bf16.mxu0 0
      %1397 = vmatmul.mubr.bf16.gmra.mrb[0].mxu0 %v1086
      %v1398 = vpop.f32.mrb[0].mxu0
      %v1399 = vadd.f32 0.0, %v1398
      %v1400 = vpop.f32.mrb[0].mxu0
      %v1401 = vpop.f32.mrb[0].mxu0
      %v1402 = vadd.f32 0.0, %v1401
      %v1403 = vpop.f32.mrb[0].mxu0
      %1404 = vmatprep.mubr.bf16.mxu0 0
      %1405 = vmatmul.mubr.bf16.gmra.mrb[0].mxu0 %v1089
      %v1406 = vpop.f32.mrb[0].mxu0
      %v1407 = vadd.f32 0.0, %v1406
      %v1408 = vpop.f32.mrb[0].mxu0
      %v1409 = vpop.f32.mrb[0].mxu0
      %v1410 = vadd.f32 0.0, %v1409
      %v1411 = vpop.f32.mrb[0].mxu0
      %1412 = vmatprep.mubr.bf16.mxu0 0
      %1413 = vmatmul.mubr.bf16.gmra.mrb[0].mxu0 %v1092
      %v1414 = vpop.f32.mrb[0].mxu0
      %v1415 = vadd.f32 0.0, %v1414
      %v1416 = vpop.f32.mrb[0].mxu0
      %v1417 = vpop.f32.mrb[0].mxu0
      %v1418 = vadd.f32 0.0, %v1417
      %v1419 = vpop.f32.mrb[0].mxu0
      %1420 = vmatprep.mubr.bf16.mxu0 0
      %1421 = vmatmul.mubr.bf16.gmra.mrb[0].mxu0 %v1095
      %v1422 = vpop.f32.mrb[0].mxu0
      %v1423 = vadd.f32 0.0, %v1422
      %v1424 = vpop.f32.mrb[0].mxu0
      %v1425 = vpop.f32.mrb[0].mxu0
      %v1426 = vadd.f32 0.0, %v1425
      %v1427 = vpop.f32.mrb[0].mxu0
      %1428 = vmatprep.mubr.bf16.mxu0 0
      %1429 = vmatmul.mubr.bf16.gmra.mrb[0].mxu0 %v1098
      %v1430 = vpop.f32.mrb[0].mxu0
      %v1431 = vadd.f32 0.0, %v1430
      %v1432 = vpop.f32.mrb[0].mxu0
      %v1433 = vpop.f32.mrb[0].mxu0
      %v1434 = vadd.f32 0.0, %v1433
      %v1435 = vpop.f32.mrb[0].mxu0
      %1436 = vmatprep.mubr.bf16.mxu0 0
      %1437 = vmatmul.mubr.bf16.gmra.mrb[0].mxu0 %v1101
      %v1438 = vpop.f32.mrb[0].mxu0
      %v1439 = vadd.f32 0.0, %v1438
      %v1440 = vpop.f32.mrb[0].mxu0
      %v1441 = vpop.f32.mrb[0].mxu0
      %v1442 = vadd.f32 0.0, %v1441
      %v1443 = vpop.f32.mrb[0].mxu0
      %1444 = vmatprep.mubr.bf16.mxu0 0
      %1445 = vmatmul.mubr.bf16.gmra.mrb[0].mxu0 %v1104
      %v1446 = vpop.f32.mrb[0].mxu0
      %v1447 = vadd.f32 0.0, %v1446
      %v1448 = vpop.f32.mrb[0].mxu0
      %v1449 = vpop.f32.mrb[0].mxu0
      %v1450 = vadd.f32 0.0, %v1449
      %v1451 = vpop.f32.mrb[0].mxu0
      %1452 = vmatprep.mubr.bf16.mxu0 0
      %1453 = vmatmul.mubr.bf16.gmra.mrb[0].mxu0 %v1107
      %v1454 = vpop.f32.mrb[0].mxu0
      %v1455 = vadd.f32 0.0, %v1454
      %v1456 = vpop.f32.mrb[0].mxu0
      %v1457 = vpop.f32.mrb[0].mxu0
      %v1458 = vadd.f32 0.0, %v1457
      %v1459 = vpop.f32.mrb[0].mxu0
      %1460 = vmatprep.mubr.bf16.mxu0 0
      %1461 = vmatmul.mubr.bf16.gmra.mrb[0].mxu0 %v1110
      %v1462 = vpop.f32.mrb[0].mxu0
      %v1463 = vadd.f32 0.0, %v1462
      %v1464 = vpop.f32.mrb[0].mxu0
      %v1465 = vpop.f32.mrb[0].mxu0
      %v1466 = vadd.f32 0.0, %v1465
      %v1467 = vpop.f32.mrb[0].mxu0
      %1468 = vmatprep.mubr.bf16.mxu0 0
      %1469 = vmatmul.mubr.bf16.gmra.mrb[0].mxu0 %v1113
      %v1470 = vpop.f32.mrb[0].mxu0
      %v1471 = vadd.f32 0.0, %v1470
      %v1472 = vpop.f32.mrb[0].mxu0
      %v1473 = vpop.f32.mrb[0].mxu0
      %v1474 = vadd.f32 0.0, %v1473
      %v1475 = vpop.f32.mrb[0].mxu0
      %1476 = vmatprep.mubr.bf16.mxu0 0
      %1477 = vmatmul.mubr.bf16.gmra.mrb[0].mxu0 %v1116
      %v1478 = vpop.f32.mrb[0].mxu0
      %v1479 = vadd.f32 0.0, %v1478
      %v1480 = vpop.f32.mrb[0].mxu0
      %v1481 = vpop.f32.mrb[0].mxu0
      %v1482 = vadd.f32 0.0, %v1481
      %v1483 = vpop.f32.mrb[0].mxu0
      %1484 = vmatprep.mubr.bf16.mxu0 0
      %1485 = vmatmul.mubr.bf16.gmra.mrb[0].mxu0 %v1119
      %v1486 = vpop.f32.mrb[0].mxu0
      %v1487 = vadd.f32 0.0, %v1486
      %v1488 = vpop.f32.mrb[0].mxu0
      %v1489 = vpop.f32.mrb[0].mxu0
      %v1490 = vadd.f32 0.0, %v1489
      %v1491 = vpop.f32.mrb[0].mxu0
      %1492 = vmatprep.mubr.bf16.mxu0 0
      %1493 = vmatmul.mubr.bf16.gmra.mrb[0].mxu0 %v1122
      %v1494 = vpop.f32.mrb[0].mxu0
      %v1495 = vadd.f32 0.0, %v1494
      %v1496 = vpop.f32.mrb[0].mxu0
      %v1497 = vpop.f32.mrb[0].mxu0
      %v1498 = vadd.f32 0.0, %v1497
      %v1499 = vpop.f32.mrb[0].mxu0
      %1500 = vmatprep.mubr.bf16.mxu0 0
      %1501 = vmatmul.mubr.bf16.gmra.mrb[0].mxu0 %v1125
      %v1502 = vpop.f32.mrb[0].mxu0
      %v1503 = vadd.f32 0.0, %v1502
      %v1504 = vpop.f32.mrb[0].mxu0
      %v1505 = vpop.f32.mrb[0].mxu0
      %v1506 = vadd.f32 0.0, %v1505
      %v1507 = vpop.f32.mrb[0].mxu0
      %1508 = vmatprep.mubr.bf16.mxu0 0
      %1509 = vmatmul.mubr.bf16.gmra.mrb[0].mxu0 %v1128
      %v1510 = vpop.f32.mrb[0].mxu0
      %v1511 = vadd.f32 0.0, %v1510
      %v1512 = vpop.f32.mrb[0].mxu0
      %v1513 = vpop.f32.mrb[0].mxu0
      %v1514 = vadd.f32 0.0, %v1513
      %v1515 = vpop.f32.mrb[0].mxu0
      %1516 = vmatprep.mubr.bf16.mxu0 0
      %1517 = vmatmul.mubr.bf16.gmra.mrb[0].mxu0 %v1131
      %v1518 = vpop.f32.mrb[0].mxu0
      %v1519 = vadd.f32 0.0, %v1518
      %v1520 = vpop.f32.mrb[0].mxu0
      %v1521 = vpop.f32.mrb[0].mxu0
      %v1522 = vadd.f32 0.0, %v1521
      %v1523 = vpop.f32.mrb[0].mxu0
      %1524 = vmatprep.mubr.bf16.mxu0 0
      %1525 = vmatmul.mubr.bf16.gmra.mrb[0].mxu0 %v1134
      %v1526 = vpop.f32.mrb[0].mxu0
      %v1527 = vadd.f32 0.0, %v1526
      %v1528 = vpop.f32.mrb[0].mxu0
      %v1529 = vpop.f32.mrb[0].mxu0
      %v1530 = vadd.f32 0.0, %v1529
      %v1531 = vpop.f32.mrb[0].mxu0
      %1532 = vmatprep.mubr.bf16.mxu0 0
      %1533 = vmatmul.mubr.bf16.gmra.mrb[0].mxu0 %v1137
      %v1534 = vpop.f32.mrb[0].mxu0
      %v1535 = vadd.f32 0.0, %v1534
      %v1536 = vpop.f32.mrb[0].mxu0
      %v1537 = vpop.f32.mrb[0].mxu0
      %v1538 = vadd.f32 0.0, %v1537
      %v1539 = vpop.f32.mrb[0].mxu0
      %1540 = vmatprep.mubr.bf16.mxu0 0
      %1541 = vmatmul.mubr.bf16.gmra.mrb[0].mxu0 %v1140
      %v1542 = vpop.f32.mrb[0].mxu0
      %v1543 = vadd.f32 0.0, %v1542
      %v1544 = vpop.f32.mrb[0].mxu0
      %v1545 = vpop.f32.mrb[0].mxu0
      %v1546 = vadd.f32 0.0, %v1545
      %v1547 = vpop.f32.mrb[0].mxu0
      %1548 = vmatprep.mubr.bf16.mxu0 0
      %1549 = vmatmul.mubr.bf16.gmra.mrb[0].mxu0 %v1143
      %v1550 = vpop.f32.mrb[0].mxu0
      %v1551 = vadd.f32 0.0, %v1550
      %v1552 = vpop.f32.mrb[0].mxu0
      %v1553 = vpop.f32.mrb[0].mxu0
      %v1554 = vadd.f32 0.0, %v1553
      %v1555 = vpop.f32.mrb[0].mxu0
      %1556 = vmatprep.mubr.bf16.mxu0 0
      %1557 = vmatmul.mubr.bf16.gmra.mrb[0].mxu0 %v1146
      %v1558 = vpop.f32.mrb[0].mxu0
      %v1559 = vadd.f32 0.0, %v1558
      %v1560 = vpop.f32.mrb[0].mxu0
      %v1561 = vpop.f32.mrb[0].mxu0
      %v1562 = vadd.f32 0.0, %v1561
      %v1563 = vpop.f32.mrb[0].mxu0
      %1564 = vmatprep.mubr.bf16.mxu0 0
      %1565 = vmatmul.mubr.bf16.gmra.mrb[0].mxu0 %v1149
      %v1566 = vpop.f32.mrb[0].mxu0
      %v1567 = vadd.f32 0.0, %v1566
      %v1568 = vpop.f32.mrb[0].mxu0
      %v1569 = vpop.f32.mrb[0].mxu0
      %v1570 = vadd.f32 0.0, %v1569
      %v1571 = vpop.f32.mrb[0].mxu0
      %1572 = vmatprep.mubr.bf16.mxu0 0
      %1573 = vmatmul.mubr.bf16.gmra.mrb[0].mxu0 %v1152
      %v1574 = vpop.f32.mrb[0].mxu0
      %v1575 = vadd.f32 0.0, %v1574
      %v1576 = vpop.f32.mrb[0].mxu0
      %v1577 = vpop.f32.mrb[0].mxu0
      %v1578 = vadd.f32 0.0, %v1577
      %v1579 = vpop.f32.mrb[0].mxu0
      %1580 = vmatprep.mubr.bf16.mxu0 0
      %1581 = vmatmul.mubr.bf16.gmra.mrb[0].mxu0 %v1155
      %v1582 = vpop.f32.mrb[0].mxu0
      %v1583 = vadd.f32 0.0, %v1582
      %v1584 = vpop.f32.mrb[0].mxu0
      %v1585 = vpop.f32.mrb[0].mxu0
      %v1586 = vadd.f32 0.0, %v1585
      %v1587 = vpop.f32.mrb[0].mxu0
      %1588 = vmatprep.mubr.bf16.mxu0 0
      %1589 = vmatmul.mubr.bf16.gmra.mrb[0].mxu0 %v1158
      %v1590 = vpop.f32.mrb[0].mxu0
      %v1591 = vadd.f32 0.0, %v1590
      %v1592 = vpop.f32.mrb[0].mxu0
      %v1593 = vpop.f32.mrb[0].mxu0
      %v1594 = vadd.f32 0.0, %v1593
      %v1595 = vpop.f32.mrb[0].mxu0
      %1596 = vmatprep.mubr.bf16.mxu0 0
      %1597 = vmatmul.mubr.bf16.gmra.mrb[0].mxu0 %v1161
      %v1598 = vpop.f32.mrb[0].mxu0
      %v1599 = vadd.f32 0.0, %v1598
      %v1600 = vpop.f32.mrb[0].mxu0
      %v1601 = vpop.f32.mrb[0].mxu0
      %v1602 = vadd.f32 0.0, %v1601
      %v1603 = vpop.f32.mrb[0].mxu0
      %1604 = vmatprep.mubr.bf16.mxu0 0
      %1605 = vmatmul.mubr.bf16.gmra.mrb[0].mxu0 %v1164
      %v1606 = vpop.f32.mrb[0].mxu0
      %v1607 = vadd.f32 0.0, %v1606
      %v1608 = vpop.f32.mrb[0].mxu0
      %v1609 = vpop.f32.mrb[0].mxu0
      %v1610 = vadd.f32 0.0, %v1609
      %v1611 = vpop.f32.mrb[0].mxu0
      %1612 = vmatprep.mubr.bf16.mxu0 0
      %1613 = vmatmul.mubr.bf16.gmra.mrb[0].mxu0 %v1167
      %v1614 = vpop.f32.mrb[0].mxu0
      %v1615 = vadd.f32 0.0, %v1614
      %v1616 = vpop.f32.mrb[0].mxu0
      %v1617 = vpop.f32.mrb[0].mxu0
      %v1618 = vadd.f32 0.0, %v1617
      %v1619 = vpop.f32.mrb[0].mxu0
      %1620 = vmatprep.mubr.bf16.mxu0 0
      %1621 = vmatmul.mubr.bf16.gmra.mrb[0].mxu0 %v1170
      %v1622 = vpop.f32.mrb[0].mxu0
      %v1623 = vadd.f32 0.0, %v1622
      %v1624 = vpop.f32.mrb[0].mxu0
      %v1625 = vpop.f32.mrb[0].mxu0
      %v1626 = vadd.f32 0.0, %v1625
      %v1627 = vpop.f32.mrb[0].mxu0
      %1628 = vmatprep.mubr.bf16.mxu0 0
      %1629 = vmatmul.mubr.bf16.gmra.mrb[0].mxu0 %v1173
      %v1630 = vpop.f32.mrb[0].mxu0
      %v1631 = vadd.f32 0.0, %v1630
      %v1632 = vpop.f32.mrb[0].mxu0
      %v1633 = vpop.f32.mrb[0].mxu0
      %v1634 = vadd.f32 0.0, %v1633
      %v1635 = vpop.f32.mrb[0].mxu0
      %1636 = vmatprep.mubr.bf16.mxu0 0
      %1637 = vmatmul.mubr.bf16.gmra.mrb[0].mxu0 %v1176
      %v1638 = vpop.f32.mrb[0].mxu0
      %v1639 = vadd.f32 0.0, %v1638
      %v1640 = vpop.f32.mrb[0].mxu0
      %v1641 = vpop.f32.mrb[0].mxu0
      %v1642 = vadd.f32 0.0, %v1641
      %v1643 = vpop.f32.mrb[0].mxu0
      %1644 = vmatprep.mubr.bf16.mxu0 0
      %1645 = vmatmul.mubr.bf16.gmra.mrb[0].mxu0 %v1179
      %v1646 = vpop.f32.mrb[0].mxu0
      %v1647 = vadd.f32 0.0, %v1646
      %v1648 = vpop.f32.mrb[0].mxu0
      %v1649 = vpop.f32.mrb[0].mxu0
      %v1650 = vadd.f32 0.0, %v1649
      %v1651 = vpop.f32.mrb[0].mxu0
      %1652 = vmatprep.mubr.bf16.mxu0 0
      %1653 = vmatmul.mubr.bf16.gmra.mrb[0].mxu0 %v1182
      %v1654 = vpop.f32.mrb[0].mxu0
      %v1655 = vadd.f32 0.0, %v1654
      %v1656 = vpop.f32.mrb[0].mxu0
      %v1657 = vpop.f32.mrb[0].mxu0
      %v1658 = vadd.f32 0.0, %v1657
      %v1659 = vpop.f32.mrb[0].mxu0
      %1660 = vmatprep.mubr.bf16.mxu0 0
      %1661 = vmatmul.mubr.bf16.gmra.mrb[0].mxu0 %v1185
      %v1662 = vpop.f32.mrb[0].mxu0
      %v1663 = vadd.f32 0.0, %v1662
      %v1664 = vpop.f32.mrb[0].mxu0
      %v1665 = vpop.f32.mrb[0].mxu0
      %v1666 = vadd.f32 0.0, %v1665
      %v1667 = vpop.f32.mrb[0].mxu0
      %1668 = vmatprep.mubr.bf16.mxu0 0
      %1669 = vmatmul.mubr.bf16.gmra.mrb[0].mxu0 %v1188
      %v1670 = vpop.f32.mrb[0].mxu0
      %v1671 = vadd.f32 0.0, %v1670
      %v1672 = vpop.f32.mrb[0].mxu0
      %v1673 = vpop.f32.mrb[0].mxu0
      %v1674 = vadd.f32 0.0, %v1673
      %v1675 = vpop.f32.mrb[0].mxu0
      %1676 = vmatprep.mubr.bf16.mxu0 0
      %1677 = vmatmul.mubr.bf16.gmra.mrb[0].mxu0 %v1191
      %v1678 = vpop.f32.mrb[0].mxu0
      %v1679 = vadd.f32 0.0, %v1678
      %v1680 = vpop.f32.mrb[0].mxu0
      %v1681 = vpop.f32.mrb[0].mxu0
      %v1682 = vadd.f32 0.0, %v1681
      %v1683 = vpop.f32.mrb[0].mxu0
      %1684 = vmatprep.mubr.bf16.mxu0 0
      %1685 = vmatmul.mubr.bf16.gmra.mrb[0].mxu0 %v1194
      %v1686 = vpop.f32.mrb[0].mxu0
      %v1687 = vadd.f32 0.0, %v1686
      %v1688 = vpop.f32.mrb[0].mxu0
      %v1689 = vpop.f32.mrb[0].mxu0
      %v1690 = vadd.f32 0.0, %v1689
      %v1691 = vpop.f32.mrb[0].mxu0
      %1692 = vmatprep.mubr.bf16.mxu0 0
      %1693 = vmatmul.mubr.bf16.gmra.mrb[0].mxu0 %v1197
      %v1694 = vpop.f32.mrb[0].mxu0
      %v1695 = vadd.f32 0.0, %v1694
      %v1696 = vpop.f32.mrb[0].mxu0
      %v1697 = vpop.f32.mrb[0].mxu0
      %v1698 = vadd.f32 0.0, %v1697
      %v1699 = vpop.f32.mrb[0].mxu0
      %1700 = vmatprep.mubr.bf16.mxu0 0
      %1701 = vmatmul.mubr.bf16.gmra.mrb[0].mxu0 %v1200
      %v1702 = vpop.f32.mrb[0].mxu0
      %v1703 = vadd.f32 0.0, %v1702
      %v1704 = vpop.f32.mrb[0].mxu0
      %v1705 = vpop.f32.mrb[0].mxu0
      %v1706 = vadd.f32 0.0, %v1705
      %v1707 = vpop.f32.mrb[0].mxu0
      %1708 = vmatprep.mubr.bf16.mxu0 0
      %1709 = vmatmul.mubr.bf16.gmra.mrb[0].mxu0 %v1203
      %v1710 = vpop.f32.mrb[0].mxu0
      %v1711 = vadd.f32 0.0, %v1710
      %v1712 = vpop.f32.mrb[0].mxu0
      %v1713 = vpop.f32.mrb[0].mxu0
      %v1714 = vadd.f32 0.0, %v1713
      %v1715 = vpop.f32.mrb[0].mxu0
      %1716 = vmatprep.mubr.bf16.mxu0 0
      %1717 = vmatmul.mubr.bf16.gmra.mrb[0].mxu0 %v1206
      %v1718 = vpop.f32.mrb[0].mxu0
      %v1719 = vadd.f32 0.0, %v1718
      %v1720 = vpop.f32.mrb[0].mxu0
      %v1721 = vpop.f32.mrb[0].mxu0
      %v1722 = vadd.f32 0.0, %v1721
      %v1723 = vpop.f32.mrb[0].mxu0
      %1724 = vmatprep.mubr.bf16.mxu0 0
      %1725 = vmatmul.mubr.bf16.gmra.mrb[0].mxu0 %v1209
      %v1726 = vpop.f32.mrb[0].mxu0
      %v1727 = vadd.f32 0.0, %v1726
      %v1728 = vpop.f32.mrb[0].mxu0
      %v1729 = vpop.f32.mrb[0].mxu0
      %v1730 = vadd.f32 0.0, %v1729
      %v1731 = vpop.f32.mrb[0].mxu0
      %1732 = vmatprep.mubr.bf16.mxu0 0
      %1733 = vmatmul.mubr.bf16.gmra.mrb[0].mxu0 %v1212
      %v1734 = vpop.f32.mrb[0].mxu0
      %v1735 = vadd.f32 0.0, %v1734
      %v1736 = vpop.f32.mrb[0].mxu0
      %v1737 = vpop.f32.mrb[0].mxu0
      %v1738 = vadd.f32 0.0, %v1737
      %v1739 = vpop.f32.mrb[0].mxu0
      %1740 = vmatprep.mubr.bf16.mxu0 0
      %1741 = vmatmul.mubr.bf16.gmra.mrb[0].mxu0 %v1215
      %v1742 = vpop.f32.mrb[0].mxu0
      %v1743 = vadd.f32 0.0, %v1742
      %v1744 = vpop.f32.mrb[0].mxu0
      %v1745 = vpop.f32.mrb[0].mxu0
      %v1746 = vadd.f32 0.0, %v1745
      %v1747 = vpop.f32.mrb[0].mxu0
      %1748 = vmatprep.mubr.bf16.mxu0 0
      %1749 = vmatmul.mubr.bf16.gmra.mrb[0].mxu0 %v1218
      %v1750 = vpop.f32.mrb[0].mxu0
      %v1751 = vadd.f32 0.0, %v1750
      %v1752 = vpop.f32.mrb[0].mxu0
      %v1753 = vpop.f32.mrb[0].mxu0
      %v1754 = vpop.f32.mrb[0].mxu0
      %1755 = vdwg.mxu0
      %v1756 = vpack.c.bf16 %v1258, %v1255
      %v1757 = vpack.c.bf16 %v1266, %v1263
      %v1758 = vpack.c.bf16 %v1274, %v1271
      %v1759 = vpack.c.bf16 %v1282, %v1279
      %v1760 = vpack.c.bf16 %v1290, %v1287
      %v1761 = vpack.c.bf16 %v1298, %v1295
      %v1762 = vpack.c.bf16 %v1306, %v1303
      %v1763 = vpack.c.bf16 %v1314, %v1311
      %v1764 = vpack.c.bf16 %v1322, %v1319
      %v1765 = vpack.c.bf16 %v1330, %v1327
      %v1766 = vpack.c.bf16 %v1338, %v1335
      %v1767 = vpack.c.bf16 %v1346, %v1343
      %v1768 = vpack.c.bf16 %v1354, %v1351
      %v1769 = vpack.c.bf16 %v1362, %v1359
      %v1770 = vpack.c.bf16 %v1370, %v1367
      %v1771 = vpack.c.bf16 %v1378, %v1375
      %v1772 = vpack.c.bf16 %v1386, %v1383
      %v1773 = vpack.c.bf16 %v1394, %v1391
      %v1774 = vpack.c.bf16 %v1402, %v1399
      %v1775 = vpack.c.bf16 %v1410, %v1407
      %v1776 = vpack.c.bf16 %v1418, %v1415
      %v1777 = vpack.c.bf16 %v1426, %v1423
      %v1778 = vpack.c.bf16 %v1434, %v1431
      %v1779 = vpack.c.bf16 %v1442, %v1439
      %v1780 = vpack.c.bf16 %v1450, %v1447
      %v1781 = vpack.c.bf16 %v1458, %v1455
      %v1782 = vpack.c.bf16 %v1466, %v1463
      %v1783 = vpack.c.bf16 %v1474, %v1471
      %v1784 = vpack.c.bf16 %v1482, %v1479
      %v1785 = vpack.c.bf16 %v1490, %v1487
      %v1786 = vpack.c.bf16 %v1498, %v1495
      %v1787 = vpack.c.bf16 %v1506, %v1503
      %v1788 = vpack.c.bf16 %v1514, %v1511
      %v1789 = vpack.c.bf16 %v1522, %v1519
      %v1790 = vpack.c.bf16 %v1530, %v1527
      %v1791 = vpack.c.bf16 %v1538, %v1535
      %v1792 = vpack.c.bf16 %v1546, %v1543
      %v1793 = vpack.c.bf16 %v1554, %v1551
      %v1794 = vpack.c.bf16 %v1562, %v1559
      %v1795 = vpack.c.bf16 %v1570, %v1567
      %v1796 = vpack.c.bf16 %v1578, %v1575
      %v1797 = vpack.c.bf16 %v1586, %v1583
      %v1798 = vpack.c.bf16 %v1594, %v1591
      %v1799 = vpack.c.bf16 %v1602, %v1599
      %v1800 = vpack.c.bf16 %v1610, %v1607
      %v1801 = vpack.c.bf16 %v1618, %v1615
      %v1802 = vpack.c.bf16 %v1626, %v1623
      %v1803 = vpack.c.bf16 %v1634, %v1631
      %v1804 = vpack.c.bf16 %v1642, %v1639
      %v1805 = vpack.c.bf16 %v1650, %v1647
      %v1806 = vpack.c.bf16 %v1658, %v1655
      %v1807 = vpack.c.bf16 %v1666, %v1663
      %v1808 = vpack.c.bf16 %v1674, %v1671
      %v1809 = vpack.c.bf16 %v1682, %v1679
      %v1810 = vpack.c.bf16 %v1690, %v1687
      %v1811 = vpack.c.bf16 %v1698, %v1695
      %v1812 = vpack.c.bf16 %v1706, %v1703
      %v1813 = vpack.c.bf16 %v1714, %v1711
      %v1814 = vpack.c.bf16 %v1722, %v1719
      %v1815 = vpack.c.bf16 %v1730, %v1727
      %v1816 = vpack.c.bf16 %v1738, %v1735
      %v1817 = vpack.c.bf16 %v1746, %v1743
      %v1818 = vpack.c.bf16 %v1751, %v1751
      %v1819 = vld [vmem:[%s2] sm:$0xff]
      %v1820 = vld [vmem:[%s2 + $0x8] sm:$0xff]
      %v1821 = vld [vmem:[%s2 + $0x10] sm:$0xff]
      %v1822 = vld [vmem:[%s2 + $0x18] sm:$0xff]
      %v1823 = vld [vmem:[%s2 + $0x20] sm:$0xff]
      %v1824 = vld [vmem:[%s2 + $0x28] sm:$0xff]
      %v1825 = vld [vmem:[%s2 + $0x30] sm:$0xff]
      %v1826 = vld [vmem:[%s2 + $0x38] sm:$0xff]
      %v1827 = vld [vmem:[%s2 + $0x40] sm:$0xff]
      %v1828 = vld [vmem:[%s2 + $0x48] sm:$0xff]
      %v1829 = vld [vmem:[%s2 + $0x50] sm:$0xff]
      %v1830 = vld [vmem:[%s2 + $0x58] sm:$0xff]
      %v1831 = vld [vmem:[%s2 + $0x60] sm:$0xff]
      %v1832 = vld [vmem:[%s2 + $0x68] sm:$0xff]
      %v1833 = vld [vmem:[%s2 + $0x70] sm:$0xff]
      %v1834 = vld [vmem:[%s2 + $0x78] sm:$0xff]
      %v1835 = vld [vmem:[%s2 + $0x80] sm:$0xff]
      %v1836 = vld [vmem:[%s2 + $0x88] sm:$0xff]
      %v1837 = vld [vmem:[%s2 + $0x90] sm:$0xff]
      %v1838 = vld [vmem:[%s2 + $0x98] sm:$0xff]
      %v1839 = vld [vmem:[%s2 + $0xa0] sm:$0xff]
      %v1840 = vld [vmem:[%s2 + $0xa8] sm:$0xff]
      %v1841 = vld [vmem:[%s2 + $0xb0] sm:$0xff]
      %v1842 = vld [vmem:[%s2 + $0xb8] sm:$0xff]
      %v1843 = vld [vmem:[%s2 + $0xc0] sm:$0xff]
      %v1844 = vld [vmem:[%s2 + $0xc8] sm:$0xff]
      %v1845 = vld [vmem:[%s2 + $0xd0] sm:$0xff]
      %v1846 = vld [vmem:[%s2 + $0xd8] sm:$0xff]
      %v1847 = vld [vmem:[%s2 + $0xe0] sm:$0xff]
      %v1848 = vld [vmem:[%s2 + $0xe8] sm:$0xff]
      %v1849 = vld [vmem:[%s2 + $0xf0] sm:$0xff]
      %v1850 = vld [vmem:[%s2 + $0xf8] sm:$0xff]
      %v1851 = vld [vmem:[%s2 + $0x100] sm:$0xff]
      %v1852 = vld [vmem:[%s2 + $0x108] sm:$0xff]
      %v1853 = vld [vmem:[%s2 + $0x110] sm:$0xff]
      %v1854 = vld [vmem:[%s2 + $0x118] sm:$0xff]
      %v1855 = vld [vmem:[%s2 + $0x120] sm:$0xff]
      %v1856 = vld [vmem:[%s2 + $0x128] sm:$0xff]
      %v1857 = vld [vmem:[%s2 + $0x130] sm:$0xff]
      %v1858 = vld [vmem:[%s2 + $0x138] sm:$0xff]
      %v1859 = vld [vmem:[%s2 + $0x140] sm:$0xff]
      %v1860 = vld [vmem:[%s2 + $0x148] sm:$0xff]
      %v1861 = vld [vmem:[%s2 + $0x150] sm:$0xff]
      %v1862 = vld [vmem:[%s2 + $0x158] sm:$0xff]
      %v1863 = vld [vmem:[%s2 + $0x160] sm:$0xff]
      %v1864 = vld [vmem:[%s2 + $0x168] sm:$0xff]
      %v1865 = vld [vmem:[%s2 + $0x170] sm:$0xff]
      %v1866 = vld [vmem:[%s2 + $0x178] sm:$0xff]
      %v1867 = vld [vmem:[%s2 + $0x180] sm:$0xff]
      %v1868 = vld [vmem:[%s2 + $0x188] sm:$0xff]
      %v1869 = vld [vmem:[%s2 + $0x190] sm:$0xff]
      %v1870 = vld [vmem:[%s2 + $0x198] sm:$0xff]
      %v1871 = vld [vmem:[%s2 + $0x1a0] sm:$0xff]
      %v1872 = vld [vmem:[%s2 + $0x1a8] sm:$0xff]
      %v1873 = vld [vmem:[%s2 + $0x1b0] sm:$0xff]
      %v1874 = vld [vmem:[%s2 + $0x1b8] sm:$0xff]
      %v1875 = vld [vmem:[%s2 + $0x1c0] sm:$0xff]
      %v1876 = vld [vmem:[%s2 + $0x1c8] sm:$0xff]
      %v1877 = vld [vmem:[%s2 + $0x1d0] sm:$0xff]
      %v1878 = vld [vmem:[%s2 + $0x1d8] sm:$0xff]
      %v1879 = vld [vmem:[%s2 + $0x1e0] sm:$0xff]
      %v1880 = vld [vmem:[%s2 + $0x1e8] sm:$0xff]
      %v1881 = vld [vmem:[%s2 + $0x1f0] sm:$0xff]
      %v1882 = vld [vmem:[%s2 + $0x1f8] sm:$0xff]
      %v1883 = vld [vmem:[%s2 + $0x200] sm:$0xff]
      %v1884 = vld [vmem:[%s2 + $0x208] sm:$0xff]
      %v1885 = vld [vmem:[%s2 + $0x210] sm:$0xff]
      %v1886 = vld [vmem:[%s2 + $0x218] sm:$0xff]
      %v1887 = vld [vmem:[%s2 + $0x220] sm:$0xff]
      %v1888 = vld [vmem:[%s2 + $0x228] sm:$0xff]
      %v1889 = vld [vmem:[%s2 + $0x230] sm:$0xff]
      %v1890 = vld [vmem:[%s2 + $0x238] sm:$0xff]
      %v1891 = vld [vmem:[%s2 + $0x240] sm:$0xff]
      %v1892 = vld [vmem:[%s2 + $0x248] sm:$0xff]
      %v1893 = vld [vmem:[%s2 + $0x250] sm:$0xff]
      %v1894 = vld [vmem:[%s2 + $0x258] sm:$0xff]
      %v1895 = vld [vmem:[%s2 + $0x260] sm:$0xff]
      %v1896 = vld [vmem:[%s2 + $0x268] sm:$0xff]
      %v1897 = vld [vmem:[%s2 + $0x270] sm:$0xff]
      %v1898 = vld [vmem:[%s2 + $0x278] sm:$0xff]
      %v1899 = vld [vmem:[%s2 + $0x280] sm:$0xff]
      %v1900 = vld [vmem:[%s2 + $0x288] sm:$0xff]
      %v1901 = vld [vmem:[%s2 + $0x290] sm:$0xff]
      %v1902 = vld [vmem:[%s2 + $0x298] sm:$0xff]
      %v1903 = vld [vmem:[%s2 + $0x2a0] sm:$0xff]
      %v1904 = vld [vmem:[%s2 + $0x2a8] sm:$0xff]
      %v1905 = vld [vmem:[%s2 + $0x2b0] sm:$0xff]
      %v1906 = vld [vmem:[%s2 + $0x2b8] sm:$0xff]
      %v1907 = vld [vmem:[%s2 + $0x2c0] sm:$0xff]
      %v1908 = vld [vmem:[%s2 + $0x2c8] sm:$0xff]
      %v1909 = vld [vmem:[%s2 + $0x2d0] sm:$0xff]
      %v1910 = vld [vmem:[%s2 + $0x2d8] sm:$0xff]
      %v1911 = vld [vmem:[%s2 + $0x2e0] sm:$0xff]
      %v1912 = vld [vmem:[%s2 + $0x2e8] sm:$0xff]
      %v1913 = vld [vmem:[%s2 + $0x2f0] sm:$0xff]
      %v1914 = vld [vmem:[%s2 + $0x2f8] sm:$0xff]
      %v1915 = vld [vmem:[%s2 + $0x300] sm:$0xff]
      %v1916 = vld [vmem:[%s2 + $0x308] sm:$0xff]
      %v1917 = vld [vmem:[%s2 + $0x310] sm:$0xff]
      %v1918 = vld [vmem:[%s2 + $0x318] sm:$0xff]
      %v1919 = vld [vmem:[%s2 + $0x320] sm:$0xff]
      %v1920 = vld [vmem:[%s2 + $0x328] sm:$0xff]
      %v1921 = vld [vmem:[%s2 + $0x330] sm:$0xff]
      %v1922 = vld [vmem:[%s2 + $0x338] sm:$0xff]
      %v1923 = vld [vmem:[%s2 + $0x340] sm:$0xff]
      %v1924 = vld [vmem:[%s2 + $0x348] sm:$0xff]
      %v1925 = vld [vmem:[%s2 + $0x350] sm:$0xff]
      %v1926 = vld [vmem:[%s2 + $0x358] sm:$0xff]
      %v1927 = vld [vmem:[%s2 + $0x360] sm:$0xff]
      %v1928 = vld [vmem:[%s2 + $0x368] sm:$0xff]
      %v1929 = vld [vmem:[%s2 + $0x370] sm:$0xff]
      %v1930 = vld [vmem:[%s2 + $0x378] sm:$0xff]
      %v1931 = vld [vmem:[%s2 + $0x380] sm:$0xff]
      %v1932 = vld [vmem:[%s2 + $0x388] sm:$0xff]
      %v1933 = vld [vmem:[%s2 + $0x390] sm:$0xff]
      %v1934 = vld [vmem:[%s2 + $0x398] sm:$0xff]
      %v1935 = vld [vmem:[%s2 + $0x3a0] sm:$0xff]
      %v1936 = vld [vmem:[%s2 + $0x3a8] sm:$0xff]
      %v1937 = vld [vmem:[%s2 + $0x3b0] sm:$0xff]
      %v1938 = vld [vmem:[%s2 + $0x3b8] sm:$0xff]
      %v1939 = vld [vmem:[%s2 + $0x3c0] sm:$0xff]
      %v1940 = vld [vmem:[%s2 + $0x3c8] sm:$0xff]
      %v1941 = vld [vmem:[%s2 + $0x3d0] sm:$0xff]
      %v1942 = vld [vmem:[%s2 + $0x3d8] sm:$0xff]
      %v1943 = vld [vmem:[%s2 + $0x3e0] sm:$0xff]
      %v1944 = vld [vmem:[%s2 + $0x3e8] sm:$0xff]
      %v1945 = vld [vmem:[%s2 + $0x3f0] sm:$0xff]
      %v1946 = vld [vmem:[%s2 + $0x3f8] sm:$0xff]
      %v2075 = vunpack.c.l.b16 %v1819
      %v2076 = vunpack.c.h.b16 %v1819
      %v2077 = vunpack.c.l.b16 %v1820
      %v2078 = vunpack.c.h.b16 %v1820
      %v2079 = vunpack.c.l.b16 %v1821
      %v2080 = vunpack.c.h.b16 %v1821
      %v2081 = vunpack.c.l.b16 %v1822
      %v2082 = vunpack.c.h.b16 %v1822
      %v2083 = vunpack.c.l.b16 %v1823
      %v2084 = vunpack.c.h.b16 %v1823
      %v2085 = vunpack.c.l.b16 %v1824
      %v2086 = vunpack.c.h.b16 %v1824
      %v2087 = vunpack.c.l.b16 %v1825
      %v2088 = vunpack.c.h.b16 %v1825
      %v2089 = vunpack.c.l.b16 %v1826
      %v2090 = vunpack.c.h.b16 %v1826
      %v2091 = vunpack.c.l.b16 %v1827
      %v2092 = vunpack.c.h.b16 %v1827
      %v2093 = vunpack.c.l.b16 %v1828
      %v2094 = vunpack.c.h.b16 %v1828
      %v2095 = vunpack.c.l.b16 %v1829
      %v2096 = vunpack.c.h.b16 %v1829
      %v2097 = vunpack.c.l.b16 %v1830
      %v2098 = vunpack.c.h.b16 %v1830
      %v2099 = vunpack.c.l.b16 %v1831
      %v2100 = vunpack.c.h.b16 %v1831
      %v2101 = vunpack.c.l.b16 %v1832
      %v2102 = vunpack.c.h.b16 %v1832
      %v2103 = vunpack.c.l.b16 %v1833
      %v2104 = vunpack.c.h.b16 %v1833
      %v2105 = vunpack.c.l.b16 %v1834
      %v2106 = vunpack.c.h.b16 %v1834
      %v2107 = vunpack.c.l.b16 %v1835
      %v2108 = vunpack.c.h.b16 %v1835
      %v2109 = vunpack.c.l.b16 %v1836
      %v2110 = vunpack.c.h.b16 %v1836
      %v2111 = vunpack.c.l.b16 %v1837
      %v2112 = vunpack.c.h.b16 %v1837
      %v2113 = vunpack.c.l.b16 %v1838
      %v2114 = vunpack.c.h.b16 %v1838
      %v2115 = vunpack.c.l.b16 %v1839
      %v2116 = vunpack.c.h.b16 %v1839
      %v2117 = vunpack.c.l.b16 %v1840
      %v2118 = vunpack.c.h.b16 %v1840
      %v2119 = vunpack.c.l.b16 %v1841
      %v2120 = vunpack.c.h.b16 %v1841
      %v2121 = vunpack.c.l.b16 %v1842
      %v2122 = vunpack.c.h.b16 %v1842
      %v2123 = vunpack.c.l.b16 %v1843
      %v2124 = vunpack.c.h.b16 %v1843
      %v2125 = vunpack.c.l.b16 %v1844
      %v2126 = vunpack.c.h.b16 %v1844
      %v2127 = vunpack.c.l.b16 %v1845
      %v2128 = vunpack.c.h.b16 %v1845
      %v2129 = vunpack.c.l.b16 %v1846
      %v2130 = vunpack.c.h.b16 %v1846
      %v2131 = vunpack.c.l.b16 %v1847
      %v2132 = vunpack.c.h.b16 %v1847
      %v2133 = vunpack.c.l.b16 %v1848
      %v2134 = vunpack.c.h.b16 %v1848
      %v2135 = vunpack.c.l.b16 %v1849
      %v2136 = vunpack.c.h.b16 %v1849
      %v2137 = vunpack.c.l.b16 %v1850
      %v2138 = vunpack.c.h.b16 %v1850
      %v2139 = vunpack.c.l.b16 %v1851
      %v2140 = vunpack.c.h.b16 %v1851
      %v2141 = vunpack.c.l.b16 %v1852
      %v2142 = vunpack.c.h.b16 %v1852
      %v2143 = vunpack.c.l.b16 %v1853
      %v2144 = vunpack.c.h.b16 %v1853
      %v2145 = vunpack.c.l.b16 %v1854
      %v2146 = vunpack.c.h.b16 %v1854
      %v2147 = vunpack.c.l.b16 %v1855
      %v2148 = vunpack.c.h.b16 %v1855
      %v2149 = vunpack.c.l.b16 %v1856
      %v2150 = vunpack.c.h.b16 %v1856
      %v2151 = vunpack.c.l.b16 %v1857
      %v2152 = vunpack.c.h.b16 %v1857
      %v2153 = vunpack.c.l.b16 %v1858
      %v2154 = vunpack.c.h.b16 %v1858
      %v2155 = vunpack.c.l.b16 %v1859
      %v2156 = vunpack.c.h.b16 %v1859
      %v2157 = vunpack.c.l.b16 %v1860
      %v2158 = vunpack.c.h.b16 %v1860
      %v2159 = vunpack.c.l.b16 %v1861
      %v2160 = vunpack.c.h.b16 %v1861
      %v2161 = vunpack.c.l.b16 %v1862
      %v2162 = vunpack.c.h.b16 %v1862
      %v2163 = vunpack.c.l.b16 %v1863
      %v2164 = vunpack.c.h.b16 %v1863
      %v2165 = vunpack.c.l.b16 %v1864
      %v2166 = vunpack.c.h.b16 %v1864
      %v2167 = vunpack.c.l.b16 %v1865
      %v2168 = vunpack.c.h.b16 %v1865
      %v2169 = vunpack.c.l.b16 %v1866
      %v2170 = vunpack.c.h.b16 %v1866
      %v2171 = vunpack.c.l.b16 %v1867
      %v2172 = vunpack.c.h.b16 %v1867
      %v2173 = vunpack.c.l.b16 %v1868
      %v2174 = vunpack.c.h.b16 %v1868
      %v2175 = vunpack.c.l.b16 %v1869
      %v2176 = vunpack.c.h.b16 %v1869
      %v2177 = vunpack.c.l.b16 %v1870
      %v2178 = vunpack.c.h.b16 %v1870
      %v2179 = vunpack.c.l.b16 %v1871
      %v2180 = vunpack.c.h.b16 %v1871
      %v2181 = vunpack.c.l.b16 %v1872
      %v2182 = vunpack.c.h.b16 %v1872
      %v2183 = vunpack.c.l.b16 %v1873
      %v2184 = vunpack.c.h.b16 %v1873
      %v2185 = vunpack.c.l.b16 %v1874
      %v2186 = vunpack.c.h.b16 %v1874
      %v2187 = vunpack.c.l.b16 %v1875
      %v2188 = vunpack.c.h.b16 %v1875
      %v2189 = vunpack.c.l.b16 %v1876
      %v2190 = vunpack.c.h.b16 %v1876
      %v2191 = vunpack.c.l.b16 %v1877
      %v2192 = vunpack.c.h.b16 %v1877
      %v2193 = vunpack.c.l.b16 %v1878
      %v2194 = vunpack.c.h.b16 %v1878
      %v2195 = vunpack.c.l.b16 %v1879
      %v2196 = vunpack.c.h.b16 %v1879
      %v2197 = vunpack.c.l.b16 %v1880
      %v2198 = vunpack.c.h.b16 %v1880
      %v2199 = vunpack.c.l.b16 %v1881
      %v2200 = vunpack.c.h.b16 %v1881
      %v2201 = vunpack.c.l.b16 %v1882
      %v2202 = vunpack.c.h.b16 %v1882
      %v2203 = vunpack.c.l.b16 %v1883
      %v2204 = vunpack.c.h.b16 %v1883
      %v2205 = vunpack.c.l.b16 %v1884
      %v2206 = vunpack.c.h.b16 %v1884
      %v2207 = vunpack.c.l.b16 %v1885
      %v2208 = vunpack.c.h.b16 %v1885
      %v2209 = vunpack.c.l.b16 %v1886
      %v2210 = vunpack.c.h.b16 %v1886
      %v2211 = vunpack.c.l.b16 %v1887
      %v2212 = vunpack.c.h.b16 %v1887
      %v2213 = vunpack.c.l.b16 %v1888
      %v2214 = vunpack.c.h.b16 %v1888
      %v2215 = vunpack.c.l.b16 %v1889
      %v2216 = vunpack.c.h.b16 %v1889
      %v2217 = vunpack.c.l.b16 %v1890
      %v2218 = vunpack.c.h.b16 %v1890
      %v2219 = vunpack.c.l.b16 %v1891
      %v2220 = vunpack.c.h.b16 %v1891
      %v2221 = vunpack.c.l.b16 %v1892
      %v2222 = vunpack.c.h.b16 %v1892
      %v2223 = vunpack.c.l.b16 %v1893
      %v2224 = vunpack.c.h.b16 %v1893
      %v2225 = vunpack.c.l.b16 %v1894
      %v2226 = vunpack.c.h.b16 %v1894
      %v2227 = vunpack.c.l.b16 %v1895
      %v2228 = vunpack.c.h.b16 %v1895
      %v2229 = vunpack.c.l.b16 %v1896
      %v2230 = vunpack.c.h.b16 %v1896
      %v2231 = vunpack.c.l.b16 %v1897
      %v2232 = vunpack.c.h.b16 %v1897
      %v2233 = vunpack.c.l.b16 %v1898
      %v2234 = vunpack.c.h.b16 %v1898
      %v2235 = vunpack.c.l.b16 %v1899
      %v2236 = vunpack.c.h.b16 %v1899
      %v2237 = vunpack.c.l.b16 %v1900
      %v2238 = vunpack.c.h.b16 %v1900
      %v2239 = vunpack.c.l.b16 %v1901
      %v2240 = vunpack.c.h.b16 %v1901
      %v2241 = vunpack.c.l.b16 %v1902
      %v2242 = vunpack.c.h.b16 %v1902
      %v2243 = vunpack.c.l.b16 %v1903
      %v2244 = vunpack.c.h.b16 %v1903
      %v2245 = vunpack.c.l.b16 %v1904
      %v2246 = vunpack.c.h.b16 %v1904
      %v2247 = vunpack.c.l.b16 %v1905
      %v2248 = vunpack.c.h.b16 %v1905
      %v2249 = vunpack.c.l.b16 %v1906
      %v2250 = vunpack.c.h.b16 %v1906
      %v2251 = vunpack.c.l.b16 %v1907
      %v2252 = vunpack.c.h.b16 %v1907
      %v2253 = vunpack.c.l.b16 %v1908
      %v2254 = vunpack.c.h.b16 %v1908
      %v2255 = vunpack.c.l.b16 %v1909
      %v2256 = vunpack.c.h.b16 %v1909
      %v2257 = vunpack.c.l.b16 %v1910
      %v2258 = vunpack.c.h.b16 %v1910
      %v2259 = vunpack.c.l.b16 %v1911
      %v2260 = vunpack.c.h.b16 %v1911
      %v2261 = vunpack.c.l.b16 %v1912
      %v2262 = vunpack.c.h.b16 %v1912
      %v2263 = vunpack.c.l.b16 %v1913
      %v2264 = vunpack.c.h.b16 %v1913
      %v2265 = vunpack.c.l.b16 %v1914
      %v2266 = vunpack.c.h.b16 %v1914
      %v2267 = vunpack.c.l.b16 %v1915
      %v2268 = vunpack.c.h.b16 %v1915
      %v2269 = vunpack.c.l.b16 %v1916
      %v2270 = vunpack.c.h.b16 %v1916
      %v2271 = vunpack.c.l.b16 %v1917
      %v2272 = vunpack.c.h.b16 %v1917
      %v2273 = vunpack.c.l.b16 %v1918
      %v2274 = vunpack.c.h.b16 %v1918
      %v2275 = vunpack.c.l.b16 %v1919
      %v2276 = vunpack.c.h.b16 %v1919
      %v2277 = vunpack.c.l.b16 %v1920
      %v2278 = vunpack.c.h.b16 %v1920
      %v2279 = vunpack.c.l.b16 %v1921
      %v2280 = vunpack.c.h.b16 %v1921
      %v2281 = vunpack.c.l.b16 %v1922
      %v2282 = vunpack.c.h.b16 %v1922
      %v2283 = vunpack.c.l.b16 %v1923
      %v2284 = vunpack.c.h.b16 %v1923
      %v2285 = vunpack.c.l.b16 %v1924
      %v2286 = vunpack.c.h.b16 %v1924
      %v2287 = vunpack.c.l.b16 %v1925
      %v2288 = vunpack.c.h.b16 %v1925
      %v2289 = vunpack.c.l.b16 %v1926
      %v2290 = vunpack.c.h.b16 %v1926
      %v2291 = vunpack.c.l.b16 %v1927
      %v2292 = vunpack.c.h.b16 %v1927
      %v2293 = vunpack.c.l.b16 %v1928
      %v2294 = vunpack.c.h.b16 %v1928
      %v2295 = vunpack.c.l.b16 %v1929
      %v2296 = vunpack.c.h.b16 %v1929
      %v2297 = vunpack.c.l.b16 %v1930
      %v2298 = vunpack.c.h.b16 %v1930
      %v2299 = vunpack.c.l.b16 %v1931
      %v2300 = vunpack.c.h.b16 %v1931
      %v2301 = vunpack.c.l.b16 %v1932
      %v2302 = vunpack.c.h.b16 %v1932
      %v2303 = vunpack.c.l.b16 %v1933
      %v2304 = vunpack.c.h.b16 %v1933
      %v2305 = vunpack.c.l.b16 %v1934
      %v2306 = vunpack.c.h.b16 %v1934
      %v2307 = vunpack.c.l.b16 %v1935
      %v2308 = vunpack.c.h.b16 %v1935
      %v2309 = vunpack.c.l.b16 %v1936
      %v2310 = vunpack.c.h.b16 %v1936
      %v2311 = vunpack.c.l.b16 %v1937
      %v2312 = vunpack.c.h.b16 %v1937
      %v2313 = vunpack.c.l.b16 %v1938
      %v2314 = vunpack.c.h.b16 %v1938
      %v2315 = vunpack.c.l.b16 %v1939
      %v2316 = vunpack.c.h.b16 %v1939
      %v2317 = vunpack.c.l.b16 %v1940
      %v2318 = vunpack.c.h.b16 %v1940
      %v2319 = vunpack.c.l.b16 %v1941
      %v2320 = vunpack.c.h.b16 %v1941
      %v2321 = vunpack.c.l.b16 %v1942
      %v2322 = vunpack.c.h.b16 %v1942
      %v2323 = vunpack.c.l.b16 %v1943
      %v2324 = vunpack.c.h.b16 %v1943
      %v2325 = vunpack.c.l.b16 %v1944
      %v2326 = vunpack.c.h.b16 %v1944
      %v2327 = vunpack.c.l.b16 %v1945
      %v2328 = vunpack.c.h.b16 %v1945
      %v2329 = vunpack.c.l.b16 %v1946
      %v2330 = vunpack.c.h.b16 %v1946
      %v2331 = vpack.c.b16 %v2083, %v2075
      %v2332 = vpack.c.b16 %v2084, %v2076
      %v2333 = vpack.c.b16 %v2085, %v2077
      %v2334 = vpack.c.b16 %v2086, %v2078
      %v2335 = vpack.c.b16 %v2087, %v2079
      %v2336 = vpack.c.b16 %v2088, %v2080
      %v2337 = vpack.c.b16 %v2089, %v2081
      %v2338 = vpack.c.b16 %v2090, %v2082
      %v2339 = vpack.c.b16 %v2099, %v2091
      %v2340 = vpack.c.b16 %v2100, %v2092
      %v2341 = vpack.c.b16 %v2101, %v2093
      %v2342 = vpack.c.b16 %v2102, %v2094
      %v2343 = vpack.c.b16 %v2103, %v2095
      %v2344 = vpack.c.b16 %v2104, %v2096
      %v2345 = vpack.c.b16 %v2105, %v2097
      %v2346 = vpack.c.b16 %v2106, %v2098
      %v2347 = vpack.c.b16 %v2115, %v2107
      %v2348 = vpack.c.b16 %v2116, %v2108
      %v2349 = vpack.c.b16 %v2117, %v2109
      %v2350 = vpack.c.b16 %v2118, %v2110
      %v2351 = vpack.c.b16 %v2119, %v2111
      %v2352 = vpack.c.b16 %v2120, %v2112
      %v2353 = vpack.c.b16 %v2121, %v2113
      %v2354 = vpack.c.b16 %v2122, %v2114
      %v2355 = vpack.c.b16 %v2131, %v2123
      %v2356 = vpack.c.b16 %v2132, %v2124
      %v2357 = vpack.c.b16 %v2133, %v2125
      %v2358 = vpack.c.b16 %v2134, %v2126
      %v2359 = vpack.c.b16 %v2135, %v2127
      %v2360 = vpack.c.b16 %v2136, %v2128
      %v2361 = vpack.c.b16 %v2137, %v2129
      %v2362 = vpack.c.b16 %v2138, %v2130
      %v2363 = vpack.c.b16 %v2147, %v2139
      %v2364 = vpack.c.b16 %v2148, %v2140
      %v2365 = vpack.c.b16 %v2149, %v2141
      %v2366 = vpack.c.b16 %v2150, %v2142
      %v2367 = vpack.c.b16 %v2151, %v2143
      %v2368 = vpack.c.b16 %v2152, %v2144
      %v2369 = vpack.c.b16 %v2153, %v2145
      %v2370 = vpack.c.b16 %v2154, %v2146
      %v2371 = vpack.c.b16 %v2163, %v2155
      %v2372 = vpack.c.b16 %v2164, %v2156
      %v2373 = vpack.c.b16 %v2165, %v2157
      %v2374 = vpack.c.b16 %v2166, %v2158
      %v2375 = vpack.c.b16 %v2167, %v2159
      %v2376 = vpack.c.b16 %v2168, %v2160
      %v2377 = vpack.c.b16 %v2169, %v2161
      %v2378 = vpack.c.b16 %v2170, %v2162
      %v2379 = vpack.c.b16 %v2179, %v2171
      %v2380 = vpack.c.b16 %v2180, %v2172
      %v2381 = vpack.c.b16 %v2181, %v2173
      %v2382 = vpack.c.b16 %v2182, %v2174
      %v2383 = vpack.c.b16 %v2183, %v2175
      %v2384 = vpack.c.b16 %v2184, %v2176
      %v2385 = vpack.c.b16 %v2185, %v2177
      %v2386 = vpack.c.b16 %v2186, %v2178
      %v2387 = vpack.c.b16 %v2195, %v2187
      %v2388 = vpack.c.b16 %v2196, %v2188
      %v2389 = vpack.c.b16 %v2197, %v2189
      %v2390 = vpack.c.b16 %v2198, %v2190
      %v2391 = vpack.c.b16 %v2199, %v2191
      %v2392 = vpack.c.b16 %v2200, %v2192
      %v2393 = vpack.c.b16 %v2201, %v2193
      %v2394 = vpack.c.b16 %v2202, %v2194
      %v2395 = vpack.c.b16 %v2211, %v2203
      %v2396 = vpack.c.b16 %v2212, %v2204
      %v2397 = vpack.c.b16 %v2213, %v2205
      %v2398 = vpack.c.b16 %v2214, %v2206
      %v2399 = vpack.c.b16 %v2215, %v2207
      %v2400 = vpack.c.b16 %v2216, %v2208
      %v2401 = vpack.c.b16 %v2217, %v2209
      %v2402 = vpack.c.b16 %v2218, %v2210
      %v2403 = vpack.c.b16 %v2227, %v2219
      %v2404 = vpack.c.b16 %v2228, %v2220
      %v2405 = vpack.c.b16 %v2229, %v2221
      %v2406 = vpack.c.b16 %v2230, %v2222
      %v2407 = vpack.c.b16 %v2231, %v2223
      %v2408 = vpack.c.b16 %v2232, %v2224
      %v2409 = vpack.c.b16 %v2233, %v2225
      %v2410 = vpack.c.b16 %v2234, %v2226
      %v2411 = vpack.c.b16 %v2243, %v2235
      %v2412 = vpack.c.b16 %v2244, %v2236
      %v2413 = vpack.c.b16 %v2245, %v2237
      %v2414 = vpack.c.b16 %v2246, %v2238
      %v2415 = vpack.c.b16 %v2247, %v2239
      %v2416 = vpack.c.b16 %v2248, %v2240
      %v2417 = vpack.c.b16 %v2249, %v2241
      %v2418 = vpack.c.b16 %v2250, %v2242
      %v2419 = vpack.c.b16 %v2259, %v2251
      %v2420 = vpack.c.b16 %v2260, %v2252
      %v2421 = vpack.c.b16 %v2261, %v2253
      %v2422 = vpack.c.b16 %v2262, %v2254
      %v2423 = vpack.c.b16 %v2263, %v2255
      %v2424 = vpack.c.b16 %v2264, %v2256
      %v2425 = vpack.c.b16 %v2265, %v2257
      %v2426 = vpack.c.b16 %v2266, %v2258
      %v2427 = vpack.c.b16 %v2275, %v2267
      %v2428 = vpack.c.b16 %v2276, %v2268
      %v2429 = vpack.c.b16 %v2277, %v2269
      %v2430 = vpack.c.b16 %v2278, %v2270
      %v2431 = vpack.c.b16 %v2279, %v2271
      %v2432 = vpack.c.b16 %v2280, %v2272
      %v2433 = vpack.c.b16 %v2281, %v2273
      %v2434 = vpack.c.b16 %v2282, %v2274
      %v2435 = vpack.c.b16 %v2291, %v2283
      %v2436 = vpack.c.b16 %v2292, %v2284
      %v2437 = vpack.c.b16 %v2293, %v2285
      %v2438 = vpack.c.b16 %v2294, %v2286
      %v2439 = vpack.c.b16 %v2295, %v2287
      %v2440 = vpack.c.b16 %v2296, %v2288
      %v2441 = vpack.c.b16 %v2297, %v2289
      %v2442 = vpack.c.b16 %v2298, %v2290
      %v2443 = vpack.c.b16 %v2307, %v2299
      %v2444 = vpack.c.b16 %v2308, %v2300
      %v2445 = vpack.c.b16 %v2309, %v2301
      %v2446 = vpack.c.b16 %v2310, %v2302
      %v2447 = vpack.c.b16 %v2311, %v2303
      %v2448 = vpack.c.b16 %v2312, %v2304
      %v2449 = vpack.c.b16 %v2313, %v2305
      %v2450 = vpack.c.b16 %v2314, %v2306
      %v2451 = vpack.c.b16 %v2323, %v2315
      %v2452 = vpack.c.b16 %v2324, %v2316
      %v2453 = vpack.c.b16 %v2325, %v2317
      %v2454 = vpack.c.b16 %v2326, %v2318
      %v2455 = vpack.c.b16 %v2327, %v2319
      %v2456 = vpack.c.b16 %v2328, %v2320
      %v2457 = vpack.c.b16 %v2329, %v2321
      %v2458 = vpack.c.b16 %v2330, %v2322
      %vm2571 = vcmask 850944
      %v2573 = vsel %vm2571, %v2338, 0
      %v2576 = vsel %vm2571, %v2346, 0
      %v2579 = vsel %vm2571, %v2354, 0
      %v2582 = vsel %vm2571, %v2362, 0
      %v2585 = vsel %vm2571, %v2370, 0
      %v2588 = vsel %vm2571, %v2378, 0
      %v2591 = vsel %vm2571, %v2386, 0
      %v2594 = vsel %vm2571, %v2394, 0
      %v2597 = vsel %vm2571, %v2402, 0
      %v2600 = vsel %vm2571, %v2410, 0
      %v2603 = vsel %vm2571, %v2418, 0
      %v2606 = vsel %vm2571, %v2426, 0
      %v2609 = vsel %vm2571, %v2434, 0
      %v2612 = vsel %vm2571, %v2442, 0
      %v2615 = vsel %vm2571, %v2450, 0
      %v2618 = vsel %vm2571, %v2458, 0
      %vm2620 = vcmask 1043456
      %v2622 = vsel %vm2620, %v1818, 0
      %2624 = vmatprep.subr.bf16.mxu0 0
      %2625 = vmatpush1.bf16.msra.mxu0 %v1756
      %2626 = vmatprep.subr.bf16.mxu0 0
      %2627 = vmatpush1.bf16.msra.mxu0 %v1757
      %2628 = vmatprep.subr.bf16.mxu0 0
      %2629 = vmatpush1.bf16.msra.mxu0 %v1758
      %2630 = vmatprep.subr.bf16.mxu0 0
      %2631 = vmatpush1.bf16.msra.mxu0 %v1759
      %2632 = vmatprep.subr.bf16.mxu0 0
      %2633 = vmatpush1.bf16.msra.mxu0 %v1760
      %2634 = vmatprep.subr.bf16.mxu0 0
      %2635 = vmatpush1.bf16.msra.mxu0 %v1761
      %2636 = vmatprep.subr.bf16.mxu0 0
      %2637 = vmatpush1.bf16.msra.mxu0 %v1762
      %2638 = vmatprep.subr.bf16.mxu0 0
      %2639 = vmatpush1.bf16.msra.mxu0 %v1763
      %2640 = vmatprep.subr.bf16.mxu0 0
      %2641 = vmatpush1.bf16.msra.mxu0 %v1764
      %2642 = vmatprep.subr.bf16.mxu0 0
      %2643 = vmatpush1.bf16.msra.mxu0 %v1765
      %2644 = vmatprep.subr.bf16.mxu0 0
      %2645 = vmatpush1.bf16.msra.mxu0 %v1766
      %2646 = vmatprep.subr.bf16.mxu0 0
      %2647 = vmatpush1.bf16.msra.mxu0 %v1767
      %2648 = vmatprep.subr.bf16.mxu0 0
      %2649 = vmatpush1.bf16.msra.mxu0 %v1768
      %2650 = vmatprep.subr.bf16.mxu0 0
      %2651 = vmatpush1.bf16.msra.mxu0 %v1769
      %2652 = vmatprep.subr.bf16.mxu0 0
      %2653 = vmatpush1.bf16.msra.mxu0 %v1770
      %2654 = vmatprep.subr.bf16.mxu0 0
      %2655 = vmatpush1.bf16.msra.mxu0 %v1771
      %2656 = vmatprep.mubr.bf16.mxu0 %v2332
      %2657 = vmatmul.mubr.bf16.gmra.mrb[0].mxu0 %v2331
      %v2658 = vpop.f32.mrb[0].mxu0
      %v2659 = vadd.f32 0.0, %v2658
      %v2660 = vpop.f32.mrb[0].mxu0
      %v2661 = vpop.f32.mrb[0].mxu0
      %v2662 = vadd.f32 0.0, %v2661
      %v2663 = vpop.f32.mrb[0].mxu0
      %2664 = vmatprep.mubr.bf16.mxu0 %v2340
      %2665 = vmatmul.mubr.bf16.gmra.mrb[0].mxu0 %v2339
      %v2666 = vpop.f32.mrb[0].mxu0
      %v2667 = vadd.f32 0.0, %v2666
      %v2668 = vpop.f32.mrb[0].mxu0
      %v2669 = vpop.f32.mrb[0].mxu0
      %v2670 = vadd.f32 0.0, %v2669
      %v2671 = vpop.f32.mrb[0].mxu0
      %2672 = vmatprep.mubr.bf16.mxu0 %v2348
      %2673 = vmatmul.mubr.bf16.gmra.mrb[0].mxu0 %v2347
      %v2674 = vpop.f32.mrb[0].mxu0
      %v2675 = vadd.f32 0.0, %v2674
      %v2676 = vpop.f32.mrb[0].mxu0
      %v2677 = vpop.f32.mrb[0].mxu0
      %v2678 = vadd.f32 0.0, %v2677
      %v2679 = vpop.f32.mrb[0].mxu0
      %2680 = vmatprep.mubr.bf16.mxu0 %v2356
      %2681 = vmatmul.mubr.bf16.gmra.mrb[0].mxu0 %v2355
      %v2682 = vpop.f32.mrb[0].mxu0
      %v2683 = vadd.f32 0.0, %v2682
      %v2684 = vpop.f32.mrb[0].mxu0
      %v2685 = vpop.f32.mrb[0].mxu0
      %v2686 = vadd.f32 0.0, %v2685
      %v2687 = vpop.f32.mrb[0].mxu0
      %2688 = vmatprep.mubr.bf16.mxu0 %v2364
      %2689 = vmatmul.mubr.bf16.gmra.mrb[0].mxu0 %v2363
      %v2690 = vpop.f32.mrb[0].mxu0
      %v2691 = vadd.f32 0.0, %v2690
      %v2692 = vpop.f32.mrb[0].mxu0
      %v2693 = vpop.f32.mrb[0].mxu0
      %v2694 = vadd.f32 0.0, %v2693
      %v2695 = vpop.f32.mrb[0].mxu0
      %2696 = vmatprep.mubr.bf16.mxu0 %v2372
      %2697 = vmatmul.mubr.bf16.gmra.mrb[0].mxu0 %v2371
      %v2698 = vpop.f32.mrb[0].mxu0
      %v2699 = vadd.f32 0.0, %v2698
      %v2700 = vpop.f32.mrb[0].mxu0
      %v2701 = vpop.f32.mrb[0].mxu0
      %v2702 = vadd.f32 0.0, %v2701
      %v2703 = vpop.f32.mrb[0].mxu0
      %2704 = vmatprep.mubr.bf16.mxu0 %v2380
      %2705 = vmatmul.mubr.bf16.gmra.mrb[0].mxu0 %v2379
      %v2706 = vpop.f32.mrb[0].mxu0
      %v2707 = vadd.f32 0.0, %v2706
      %v2708 = vpop.f32.mrb[0].mxu0
      %v2709 = vpop.f32.mrb[0].mxu0
      %v2710 = vadd.f32 0.0, %v2709
      %v2711 = vpop.f32.mrb[0].mxu0
      %2712 = vmatprep.mubr.bf16.mxu0 %v2388
      %2713 = vmatmul.mubr.bf16.gmra.mrb[0].mxu0 %v2387
      %v2714 = vpop.f32.mrb[0].mxu0
      %v2715 = vadd.f32 0.0, %v2714
      %v2716 = vpop.f32.mrb[0].mxu0
      %v2717 = vpop.f32.mrb[0].mxu0
      %v2718 = vadd.f32 0.0, %v2717
      %v2719 = vpop.f32.mrb[0].mxu0
      %2720 = vmatprep.mubr.bf16.mxu0 %v2396
      %2721 = vmatmul.mubr.bf16.gmra.mrb[0].mxu0 %v2395
      %v2722 = vpop.f32.mrb[0].mxu0
      %v2723 = vadd.f32 0.0, %v2722
      %v2724 = vpop.f32.mrb[0].mxu0
      %v2725 = vpop.f32.mrb[0].mxu0
      %v2726 = vadd.f32 0.0, %v2725
      %v2727 = vpop.f32.mrb[0].mxu0
      %2728 = vmatprep.mubr.bf16.mxu0 %v2404
      %2729 = vmatmul.mubr.bf16.gmra.mrb[0].mxu0 %v2403
      %v2730 = vpop.f32.mrb[0].mxu0
      %v2731 = vadd.f32 0.0, %v2730
      %v2732 = vpop.f32.mrb[0].mxu0
      %v2733 = vpop.f32.mrb[0].mxu0
      %v2734 = vadd.f32 0.0, %v2733
      %v2735 = vpop.f32.mrb[0].mxu0
      %2736 = vmatprep.mubr.bf16.mxu0 %v2412
      %2737 = vmatmul.mubr.bf16.gmra.mrb[0].mxu0 %v2411
      %v2738 = vpop.f32.mrb[0].mxu0
      %v2739 = vadd.f32 0.0, %v2738
      %v2740 = vpop.f32.mrb[0].mxu0
      %v2741 = vpop.f32.mrb[0].mxu0
      %v2742 = vadd.f32 0.0, %v2741
      %v2743 = vpop.f32.mrb[0].mxu0
      %2744 = vmatprep.mubr.bf16.mxu0 %v2420
      %2745 = vmatmul.mubr.bf16.gmra.mrb[0].mxu0 %v2419
      %v2746 = vpop.f32.mrb[0].mxu0
      %v2747 = vadd.f32 0.0, %v2746
      %v2748 = vpop.f32.mrb[0].mxu0
      %v2749 = vpop.f32.mrb[0].mxu0
      %v2750 = vadd.f32 0.0, %v2749
      %v2751 = vpop.f32.mrb[0].mxu0
      %2752 = vmatprep.mubr.bf16.mxu0 %v2428
      %2753 = vmatmul.mubr.bf16.gmra.mrb[0].mxu0 %v2427
      %v2754 = vpop.f32.mrb[0].mxu0
      %v2755 = vadd.f32 0.0, %v2754
      %v2756 = vpop.f32.mrb[0].mxu0
      %v2757 = vpop.f32.mrb[0].mxu0
      %v2758 = vadd.f32 0.0, %v2757
      %v2759 = vpop.f32.mrb[0].mxu0
      %2760 = vmatprep.mubr.bf16.mxu0 %v2436
      %2761 = vmatmul.mubr.bf16.gmra.mrb[0].mxu0 %v2435
      %v2762 = vpop.f32.mrb[0].mxu0
      %v2763 = vadd.f32 0.0, %v2762
      %v2764 = vpop.f32.mrb[0].mxu0
      %v2765 = vpop.f32.mrb[0].mxu0
      %v2766 = vadd.f32 0.0, %v2765
      %v2767 = vpop.f32.mrb[0].mxu0
      %2768 = vmatprep.mubr.bf16.mxu0 %v2444
      %2769 = vmatmul.mubr.bf16.gmra.mrb[0].mxu0 %v2443
      %v2770 = vpop.f32.mrb[0].mxu0
      %v2771 = vadd.f32 0.0, %v2770
      %v2772 = vpop.f32.mrb[0].mxu0
      %v2773 = vpop.f32.mrb[0].mxu0
      %v2774 = vadd.f32 0.0, %v2773
      %v2775 = vpop.f32.mrb[0].mxu0
      %2776 = vmatprep.mubr.bf16.mxu0 %v2452
      %2777 = vmatmul.mubr.bf16.gmra.mrb[0].mxu0 %v2451
      %v2778 = vpop.f32.mrb[0].mxu0
      %v2779 = vadd.f32 0.0, %v2778
      %v2780 = vpop.f32.mrb[0].mxu0
      %v2781 = vpop.f32.mrb[0].mxu0
      %v2782 = vadd.f32 0.0, %v2781
      %v2783 = vpop.f32.mrb[0].mxu0
      %2784 = vdwg.mxu0
      %2785 = vmatprep.subr.bf16.mxu0 0
      %2786 = vmatpush1.bf16.msra.mxu0 %v1772
      %2787 = vmatprep.subr.bf16.mxu0 0
      %2788 = vmatpush1.bf16.msra.mxu0 %v1773
      %2789 = vmatprep.subr.bf16.mxu0 0
      %2790 = vmatpush1.bf16.msra.mxu0 %v1774
      %2791 = vmatprep.subr.bf16.mxu0 0
      %2792 = vmatpush1.bf16.msra.mxu0 %v1775
      %2793 = vmatprep.subr.bf16.mxu0 0
      %2794 = vmatpush1.bf16.msra.mxu0 %v1776
      %2795 = vmatprep.subr.bf16.mxu0 0
      %2796 = vmatpush1.bf16.msra.mxu0 %v1777
      %2797 = vmatprep.subr.bf16.mxu0 0
      %2798 = vmatpush1.bf16.msra.mxu0 %v1778
      %2799 = vmatprep.subr.bf16.mxu0 0
      %2800 = vmatpush1.bf16.msra.mxu0 %v1779
      %2801 = vmatprep.subr.bf16.mxu0 0
      %2802 = vmatpush1.bf16.msra.mxu0 %v1780
      %2803 = vmatprep.subr.bf16.mxu0 0
      %2804 = vmatpush1.bf16.msra.mxu0 %v1781
      %2805 = vmatprep.subr.bf16.mxu0 0
      %2806 = vmatpush1.bf16.msra.mxu0 %v1782
      %2807 = vmatprep.subr.bf16.mxu0 0
      %2808 = vmatpush1.bf16.msra.mxu0 %v1783
      %2809 = vmatprep.subr.bf16.mxu0 0
      %2810 = vmatpush1.bf16.msra.mxu0 %v1784
      %2811 = vmatprep.subr.bf16.mxu0 0
      %2812 = vmatpush1.bf16.msra.mxu0 %v1785
      %2813 = vmatprep.subr.bf16.mxu0 0
      %2814 = vmatpush1.bf16.msra.mxu0 %v1786
      %2815 = vmatprep.subr.bf16.mxu0 0
      %2816 = vmatpush1.bf16.msra.mxu0 %v1787
      %2817 = vmatprep.mubr.bf16.mxu0 %v2334
      %2818 = vmatmul.mubr.bf16.gmra.mrb[0].mxu0 %v2333
      %v2819 = vpop.f32.mrb[0].mxu0
      %v2820 = vadd.f32 %v2659, %v2819
      %v2821 = vpop.f32.mrb[0].mxu0
      %v2822 = vpop.f32.mrb[0].mxu0
      %v2823 = vadd.f32 %v2662, %v2822
      %v2824 = vpop.f32.mrb[0].mxu0
      %2825 = vmatprep.mubr.bf16.mxu0 %v2342
      %2826 = vmatmul.mubr.bf16.gmra.mrb[0].mxu0 %v2341
      %v2827 = vpop.f32.mrb[0].mxu0
      %v2828 = vadd.f32 %v2667, %v2827
      %v2829 = vpop.f32.mrb[0].mxu0
      %v2830 = vpop.f32.mrb[0].mxu0
      %v2831 = vadd.f32 %v2670, %v2830
      %v2832 = vpop.f32.mrb[0].mxu0
      %2833 = vmatprep.mubr.bf16.mxu0 %v2350
      %2834 = vmatmul.mubr.bf16.gmra.mrb[0].mxu0 %v2349
      %v2835 = vpop.f32.mrb[0].mxu0
      %v2836 = vadd.f32 %v2675, %v2835
      %v2837 = vpop.f32.mrb[0].mxu0
      %v2838 = vpop.f32.mrb[0].mxu0
      %v2839 = vadd.f32 %v2678, %v2838
      %v2840 = vpop.f32.mrb[0].mxu0
      %2841 = vmatprep.mubr.bf16.mxu0 %v2358
      %2842 = vmatmul.mubr.bf16.gmra.mrb[0].mxu0 %v2357
      %v2843 = vpop.f32.mrb[0].mxu0
      %v2844 = vadd.f32 %v2683, %v2843
      %v2845 = vpop.f32.mrb[0].mxu0
      %v2846 = vpop.f32.mrb[0].mxu0
      %v2847 = vadd.f32 %v2686, %v2846
      %v2848 = vpop.f32.mrb[0].mxu0
      %2849 = vmatprep.mubr.bf16.mxu0 %v2366
      %2850 = vmatmul.mubr.bf16.gmra.mrb[0].mxu0 %v2365
      %v2851 = vpop.f32.mrb[0].mxu0
      %v2852 = vadd.f32 %v2691, %v2851
      %v2853 = vpop.f32.mrb[0].mxu0
      %v2854 = vpop.f32.mrb[0].mxu0
      %v2855 = vadd.f32 %v2694, %v2854
      %v2856 = vpop.f32.mrb[0].mxu0
      %2857 = vmatprep.mubr.bf16.mxu0 %v2374
      %2858 = vmatmul.mubr.bf16.gmra.mrb[0].mxu0 %v2373
      %v2859 = vpop.f32.mrb[0].mxu0
      %v2860 = vadd.f32 %v2699, %v2859
      %v2861 = vpop.f32.mrb[0].mxu0
      %v2862 = vpop.f32.mrb[0].mxu0
      %v2863 = vadd.f32 %v2702, %v2862
      %v2864 = vpop.f32.mrb[0].mxu0
      %2865 = vmatprep.mubr.bf16.mxu0 %v2382
      %2866 = vmatmul.mubr.bf16.gmra.mrb[0].mxu0 %v2381
      %v2867 = vpop.f32.mrb[0].mxu0
      %v2868 = vadd.f32 %v2707, %v2867
      %v2869 = vpop.f32.mrb[0].mxu0
      %v2870 = vpop.f32.mrb[0].mxu0
      %v2871 = vadd.f32 %v2710, %v2870
      %v2872 = vpop.f32.mrb[0].mxu0
      %2873 = vmatprep.mubr.bf16.mxu0 %v2390
      %2874 = vmatmul.mubr.bf16.gmra.mrb[0].mxu0 %v2389
      %v2875 = vpop.f32.mrb[0].mxu0
      %v2876 = vadd.f32 %v2715, %v2875
      %v2877 = vpop.f32.mrb[0].mxu0
      %v2878 = vpop.f32.mrb[0].mxu0
      %v2879 = vadd.f32 %v2718, %v2878
      %v2880 = vpop.f32.mrb[0].mxu0
      %2881 = vmatprep.mubr.bf16.mxu0 %v2398
      %2882 = vmatmul.mubr.bf16.gmra.mrb[0].mxu0 %v2397
      %v2883 = vpop.f32.mrb[0].mxu0
      %v2884 = vadd.f32 %v2723, %v2883
      %v2885 = vpop.f32.mrb[0].mxu0
      %v2886 = vpop.f32.mrb[0].mxu0
      %v2887 = vadd.f32 %v2726, %v2886
      %v2888 = vpop.f32.mrb[0].mxu0
      %2889 = vmatprep.mubr.bf16.mxu0 %v2406
      %2890 = vmatmul.mubr.bf16.gmra.mrb[0].mxu0 %v2405
      %v2891 = vpop.f32.mrb[0].mxu0
      %v2892 = vadd.f32 %v2731, %v2891
      %v2893 = vpop.f32.mrb[0].mxu0
      %v2894 = vpop.f32.mrb[0].mxu0
      %v2895 = vadd.f32 %v2734, %v2894
      %v2896 = vpop.f32.mrb[0].mxu0
      %2897 = vmatprep.mubr.bf16.mxu0 %v2414
      %2898 = vmatmul.mubr.bf16.gmra.mrb[0].mxu0 %v2413
      %v2899 = vpop.f32.mrb[0].mxu0
      %v2900 = vadd.f32 %v2739, %v2899
      %v2901 = vpop.f32.mrb[0].mxu0
      %v2902 = vpop.f32.mrb[0].mxu0
      %v2903 = vadd.f32 %v2742, %v2902
      %v2904 = vpop.f32.mrb[0].mxu0
      %2905 = vmatprep.mubr.bf16.mxu0 %v2422
      %2906 = vmatmul.mubr.bf16.gmra.mrb[0].mxu0 %v2421
      %v2907 = vpop.f32.mrb[0].mxu0
      %v2908 = vadd.f32 %v2747, %v2907
      %v2909 = vpop.f32.mrb[0].mxu0
      %v2910 = vpop.f32.mrb[0].mxu0
      %v2911 = vadd.f32 %v2750, %v2910
      %v2912 = vpop.f32.mrb[0].mxu0
      %2913 = vmatprep.mubr.bf16.mxu0 %v2430
      %2914 = vmatmul.mubr.bf16.gmra.mrb[0].mxu0 %v2429
      %v2915 = vpop.f32.mrb[0].mxu0
      %v2916 = vadd.f32 %v2755, %v2915
      %v2917 = vpop.f32.mrb[0].mxu0
      %v2918 = vpop.f32.mrb[0].mxu0
      %v2919 = vadd.f32 %v2758, %v2918
      %v2920 = vpop.f32.mrb[0].mxu0
      %2921 = vmatprep.mubr.bf16.mxu0 %v2438
      %2922 = vmatmul.mubr.bf16.gmra.mrb[0].mxu0 %v2437
      %v2923 = vpop.f32.mrb[0].mxu0
      %v2924 = vadd.f32 %v2763, %v2923
      %v2925 = vpop.f32.mrb[0].mxu0
      %v2926 = vpop.f32.mrb[0].mxu0
      %v2927 = vadd.f32 %v2766, %v2926
      %v2928 = vpop.f32.mrb[0].mxu0
      %2929 = vmatprep.mubr.bf16.mxu0 %v2446
      %2930 = vmatmul.mubr.bf16.gmra.mrb[0].mxu0 %v2445
      %v2931 = vpop.f32.mrb[0].mxu0
      %v2932 = vadd.f32 %v2771, %v2931
      %v2933 = vpop.f32.mrb[0].mxu0
      %v2934 = vpop.f32.mrb[0].mxu0
      %v2935 = vadd.f32 %v2774, %v2934
      %v2936 = vpop.f32.mrb[0].mxu0
      %2937 = vmatprep.mubr.bf16.mxu0 %v2454
      %2938 = vmatmul.mubr.bf16.gmra.mrb[0].mxu0 %v2453
      %v2939 = vpop.f32.mrb[0].mxu0
      %v2940 = vadd.f32 %v2779, %v2939
      %v2941 = vpop.f32.mrb[0].mxu0
      %v2942 = vpop.f32.mrb[0].mxu0
      %v2943 = vadd.f32 %v2782, %v2942
      %v2944 = vpop.f32.mrb[0].mxu0
      %2945 = vdwg.mxu0
      %2946 = vmatprep.subr.bf16.mxu0 0
      %2947 = vmatpush1.bf16.msra.mxu0 %v1788
      %2948 = vmatprep.subr.bf16.mxu0 0
      %2949 = vmatpush1.bf16.msra.mxu0 %v1789
      %2950 = vmatprep.subr.bf16.mxu0 0
      %2951 = vmatpush1.bf16.msra.mxu0 %v1790
      %2952 = vmatprep.subr.bf16.mxu0 0
      %2953 = vmatpush1.bf16.msra.mxu0 %v1791
      %2954 = vmatprep.subr.bf16.mxu0 0
      %2955 = vmatpush1.bf16.msra.mxu0 %v1792
      %2956 = vmatprep.subr.bf16.mxu0 0
      %2957 = vmatpush1.bf16.msra.mxu0 %v1793
      %2958 = vmatprep.subr.bf16.mxu0 0
      %2959 = vmatpush1.bf16.msra.mxu0 %v1794
      %2960 = vmatprep.subr.bf16.mxu0 0
      %2961 = vmatpush1.bf16.msra.mxu0 %v1795
      %2962 = vmatprep.subr.bf16.mxu0 0
      %2963 = vmatpush1.bf16.msra.mxu0 %v1796
      %2964 = vmatprep.subr.bf16.mxu0 0
      %2965 = vmatpush1.bf16.msra.mxu0 %v1797
      %2966 = vmatprep.subr.bf16.mxu0 0
      %2967 = vmatpush1.bf16.msra.mxu0 %v1798
      %2968 = vmatprep.subr.bf16.mxu0 0
      %2969 = vmatpush1.bf16.msra.mxu0 %v1799
      %2970 = vmatprep.subr.bf16.mxu0 0
      %2971 = vmatpush1.bf16.msra.mxu0 %v1800
      %2972 = vmatprep.subr.bf16.mxu0 0
      %2973 = vmatpush1.bf16.msra.mxu0 %v1801
      %2974 = vmatprep.subr.bf16.mxu0 0
      %2975 = vmatpush1.bf16.msra.mxu0 %v1802
      %2976 = vmatprep.subr.bf16.mxu0 0
      %2977 = vmatpush1.bf16.msra.mxu0 %v1803
      %2978 = vmatprep.mubr.bf16.mxu0 %v2336
      %2979 = vmatmul.mubr.bf16.gmra.mrb[0].mxu0 %v2335
      %v2980 = vpop.f32.mrb[0].mxu0
      %v2981 = vadd.f32 %v2820, %v2980
      %v2982 = vpop.f32.mrb[0].mxu0
      %v2983 = vpop.f32.mrb[0].mxu0
      %v2984 = vadd.f32 %v2823, %v2983
      %v2985 = vpop.f32.mrb[0].mxu0
      %2986 = vmatprep.mubr.bf16.mxu0 %v2344
      %2987 = vmatmul.mubr.bf16.gmra.mrb[0].mxu0 %v2343
      %v2988 = vpop.f32.mrb[0].mxu0
      %v2989 = vadd.f32 %v2828, %v2988
      %v2990 = vpop.f32.mrb[0].mxu0
      %v2991 = vpop.f32.mrb[0].mxu0
      %v2992 = vadd.f32 %v2831, %v2991
      %v2993 = vpop.f32.mrb[0].mxu0
      %2994 = vmatprep.mubr.bf16.mxu0 %v2352
      %2995 = vmatmul.mubr.bf16.gmra.mrb[0].mxu0 %v2351
      %v2996 = vpop.f32.mrb[0].mxu0
      %v2997 = vadd.f32 %v2836, %v2996
      %v2998 = vpop.f32.mrb[0].mxu0
      %v2999 = vpop.f32.mrb[0].mxu0
      %v3000 = vadd.f32 %v2839, %v2999
      %v3001 = vpop.f32.mrb[0].mxu0
      %3002 = vmatprep.mubr.bf16.mxu0 %v2360
      %3003 = vmatmul.mubr.bf16.gmra.mrb[0].mxu0 %v2359
      %v3004 = vpop.f32.mrb[0].mxu0
      %v3005 = vadd.f32 %v2844, %v3004
      %v3006 = vpop.f32.mrb[0].mxu0
      %v3007 = vpop.f32.mrb[0].mxu0
      %v3008 = vadd.f32 %v2847, %v3007
      %v3009 = vpop.f32.mrb[0].mxu0
      %3010 = vmatprep.mubr.bf16.mxu0 %v2368
      %3011 = vmatmul.mubr.bf16.gmra.mrb[0].mxu0 %v2367
      %v3012 = vpop.f32.mrb[0].mxu0
      %v3013 = vadd.f32 %v2852, %v3012
      %v3014 = vpop.f32.mrb[0].mxu0
      %v3015 = vpop.f32.mrb[0].mxu0
      %v3016 = vadd.f32 %v2855, %v3015
      %v3017 = vpop.f32.mrb[0].mxu0
      %3018 = vmatprep.mubr.bf16.mxu0 %v2376
      %3019 = vmatmul.mubr.bf16.gmra.mrb[0].mxu0 %v2375
      %v3020 = vpop.f32.mrb[0].mxu0
      %v3021 = vadd.f32 %v2860, %v3020
      %v3022 = vpop.f32.mrb[0].mxu0
      %v3023 = vpop.f32.mrb[0].mxu0
      %v3024 = vadd.f32 %v2863, %v3023
      %v3025 = vpop.f32.mrb[0].mxu0
      %3026 = vmatprep.mubr.bf16.mxu0 %v2384
      %3027 = vmatmul.mubr.bf16.gmra.mrb[0].mxu0 %v2383
      %v3028 = vpop.f32.mrb[0].mxu0
      %v3029 = vadd.f32 %v2868, %v3028
      %v3030 = vpop.f32.mrb[0].mxu0
      %v3031 = vpop.f32.mrb[0].mxu0
      %v3032 = vadd.f32 %v2871, %v3031
      %v3033 = vpop.f32.mrb[0].mxu0
      %3034 = vmatprep.mubr.bf16.mxu0 %v2392
      %3035 = vmatmul.mubr.bf16.gmra.mrb[0].mxu0 %v2391
      %v3036 = vpop.f32.mrb[0].mxu0
      %v3037 = vadd.f32 %v2876, %v3036
      %v3038 = vpop.f32.mrb[0].mxu0
      %v3039 = vpop.f32.mrb[0].mxu0
      %v3040 = vadd.f32 %v2879, %v3039
      %v3041 = vpop.f32.mrb[0].mxu0
      %3042 = vmatprep.mubr.bf16.mxu0 %v2400
      %3043 = vmatmul.mubr.bf16.gmra.mrb[0].mxu0 %v2399
      %v3044 = vpop.f32.mrb[0].mxu0
      %v3045 = vadd.f32 %v2884, %v3044
      %v3046 = vpop.f32.mrb[0].mxu0
      %v3047 = vpop.f32.mrb[0].mxu0
      %v3048 = vadd.f32 %v2887, %v3047
      %v3049 = vpop.f32.mrb[0].mxu0
      %3050 = vmatprep.mubr.bf16.mxu0 %v2408
      %3051 = vmatmul.mubr.bf16.gmra.mrb[0].mxu0 %v2407
      %v3052 = vpop.f32.mrb[0].mxu0
      %v3053 = vadd.f32 %v2892, %v3052
      %v3054 = vpop.f32.mrb[0].mxu0
      %v3055 = vpop.f32.mrb[0].mxu0
      %v3056 = vadd.f32 %v2895, %v3055
      %v3057 = vpop.f32.mrb[0].mxu0
      %3058 = vmatprep.mubr.bf16.mxu0 %v2416
      %3059 = vmatmul.mubr.bf16.gmra.mrb[0].mxu0 %v2415
      %v3060 = vpop.f32.mrb[0].mxu0
      %v3061 = vadd.f32 %v2900, %v3060
      %v3062 = vpop.f32.mrb[0].mxu0
      %v3063 = vpop.f32.mrb[0].mxu0
      %v3064 = vadd.f32 %v2903, %v3063
      %v3065 = vpop.f32.mrb[0].mxu0
      %3066 = vmatprep.mubr.bf16.mxu0 %v2424
      %3067 = vmatmul.mubr.bf16.gmra.mrb[0].mxu0 %v2423
      %v3068 = vpop.f32.mrb[0].mxu0
      %v3069 = vadd.f32 %v2908, %v3068
      %v3070 = vpop.f32.mrb[0].mxu0
      %v3071 = vpop.f32.mrb[0].mxu0
      %v3072 = vadd.f32 %v2911, %v3071
      %v3073 = vpop.f32.mrb[0].mxu0
      %3074 = vmatprep.mubr.bf16.mxu0 %v2432
      %3075 = vmatmul.mubr.bf16.gmra.mrb[0].mxu0 %v2431
      %v3076 = vpop.f32.mrb[0].mxu0
      %v3077 = vadd.f32 %v2916, %v3076
      %v3078 = vpop.f32.mrb[0].mxu0
      %v3079 = vpop.f32.mrb[0].mxu0
      %v3080 = vadd.f32 %v2919, %v3079
      %v3081 = vpop.f32.mrb[0].mxu0
      %3082 = vmatprep.mubr.bf16.mxu0 %v2440
      %3083 = vmatmul.mubr.bf16.gmra.mrb[0].mxu0 %v2439
      %v3084 = vpop.f32.mrb[0].mxu0
      %v3085 = vadd.f32 %v2924, %v3084
      %v3086 = vpop.f32.mrb[0].mxu0
      %v3087 = vpop.f32.mrb[0].mxu0
      %v3088 = vadd.f32 %v2927, %v3087
      %v3089 = vpop.f32.mrb[0].mxu0
      %3090 = vmatprep.mubr.bf16.mxu0 %v2448
      %3091 = vmatmul.mubr.bf16.gmra.mrb[0].mxu0 %v2447
      %v3092 = vpop.f32.mrb[0].mxu0
      %v3093 = vadd.f32 %v2932, %v3092
      %v3094 = vpop.f32.mrb[0].mxu0
      %v3095 = vpop.f32.mrb[0].mxu0
      %v3096 = vadd.f32 %v2935, %v3095
      %v3097 = vpop.f32.mrb[0].mxu0
      %3098 = vmatprep.mubr.bf16.mxu0 %v2456
      %3099 = vmatmul.mubr.bf16.gmra.mrb[0].mxu0 %v2455
      %v3100 = vpop.f32.mrb[0].mxu0
      %v3101 = vadd.f32 %v2940, %v3100
      %v3102 = vpop.f32.mrb[0].mxu0
      %v3103 = vpop.f32.mrb[0].mxu0
      %v3104 = vadd.f32 %v2943, %v3103
      %v3105 = vpop.f32.mrb[0].mxu0
      %3106 = vdwg.mxu0
      %3107 = vmatprep.subr.bf16.mxu0 0
      %3108 = vmatpush1.bf16.msra.mxu0 %v1804
      %3109 = vmatprep.subr.bf16.mxu0 0
      %3110 = vmatpush1.bf16.msra.mxu0 %v1805
      %3111 = vmatprep.subr.bf16.mxu0 0
      %3112 = vmatpush1.bf16.msra.mxu0 %v1806
      %3113 = vmatprep.subr.bf16.mxu0 0
      %3114 = vmatpush1.bf16.msra.mxu0 %v1807
      %3115 = vmatprep.subr.bf16.mxu0 0
      %3116 = vmatpush1.bf16.msra.mxu0 %v1808
      %3117 = vmatprep.subr.bf16.mxu0 0
      %3118 = vmatpush1.bf16.msra.mxu0 %v1809
      %3119 = vmatprep.subr.bf16.mxu0 0
      %3120 = vmatpush1.bf16.msra.mxu0 %v1810
      %3121 = vmatprep.subr.bf16.mxu0 0
      %3122 = vmatpush1.bf16.msra.mxu0 %v1811
      %3123 = vmatprep.subr.bf16.mxu0 0
      %3124 = vmatpush1.bf16.msra.mxu0 %v1812
      %3125 = vmatprep.subr.bf16.mxu0 0
      %3126 = vmatpush1.bf16.msra.mxu0 %v1813
      %3127 = vmatprep.subr.bf16.mxu0 0
      %3128 = vmatpush1.bf16.msra.mxu0 %v1814
      %3129 = vmatprep.subr.bf16.mxu0 0
      %3130 = vmatpush1.bf16.msra.mxu0 %v1815
      %3131 = vmatprep.subr.bf16.mxu0 0
      %3132 = vmatpush1.bf16.msra.mxu0 %v1816
      %3133 = vmatprep.subr.bf16.mxu0 0
      %3134 = vmatpush1.bf16.msra.mxu0 %v1817
      %3135 = vmatprep.subr.bf16.mxu0 0
      %3136 = vmatpush1.bf16.msra.mxu0 %v2622
      %3137 = vmatprep.subr.bf16.mxu0 0
      %3138 = vmatpush1.bf16.msra.mxu0 0
      %3139 = vmatprep.mubr.bf16.mxu0 %v2573
      %3140 = vmatmul.mubr.bf16.gmra.mrb[0].mxu0 %v2337
      %v3141 = vpop.f32.mrb[0].mxu0
      %v3142 = vadd.f32 %v2981, %v3141
      %v3143 = vpop.f32.mrb[0].mxu0
      %v3144 = vpop.f32.mrb[0].mxu0
      %v3145 = vadd.f32 %v2984, %v3144
      %v3146 = vpop.f32.mrb[0].mxu0
      %3147 = vmatprep.mubr.bf16.mxu0 %v2576
      %3148 = vmatmul.mubr.bf16.gmra.mrb[0].mxu0 %v2345
      %v3149 = vpop.f32.mrb[0].mxu0
      %v3150 = vadd.f32 %v2989, %v3149
      %v3151 = vpop.f32.mrb[0].mxu0
      %v3152 = vpop.f32.mrb[0].mxu0
      %v3153 = vadd.f32 %v2992, %v3152
      %v3154 = vpop.f32.mrb[0].mxu0
      %3155 = vmatprep.mubr.bf16.mxu0 %v2579
      %3156 = vmatmul.mubr.bf16.gmra.mrb[0].mxu0 %v2353
      %v3157 = vpop.f32.mrb[0].mxu0
      %v3158 = vadd.f32 %v2997, %v3157
      %v3159 = vpop.f32.mrb[0].mxu0
      %v3160 = vpop.f32.mrb[0].mxu0
      %v3161 = vadd.f32 %v3000, %v3160
      %v3162 = vpop.f32.mrb[0].mxu0
      %3163 = vmatprep.mubr.bf16.mxu0 %v2582
      %3164 = vmatmul.mubr.bf16.gmra.mrb[0].mxu0 %v2361
      %v3165 = vpop.f32.mrb[0].mxu0
      %v3166 = vadd.f32 %v3005, %v3165
      %v3167 = vpop.f32.mrb[0].mxu0
      %v3168 = vpop.f32.mrb[0].mxu0
      %v3169 = vadd.f32 %v3008, %v3168
      %v3170 = vpop.f32.mrb[0].mxu0
      %3171 = vmatprep.mubr.bf16.mxu0 %v2585
      %3172 = vmatmul.mubr.bf16.gmra.mrb[0].mxu0 %v2369
      %v3173 = vpop.f32.mrb[0].mxu0
      %v3174 = vadd.f32 %v3013, %v3173
      %v3175 = vpop.f32.mrb[0].mxu0
      %v3176 = vpop.f32.mrb[0].mxu0
      %v3177 = vadd.f32 %v3016, %v3176
      %v3178 = vpop.f32.mrb[0].mxu0
      %3179 = vmatprep.mubr.bf16.mxu0 %v2588
      %3180 = vmatmul.mubr.bf16.gmra.mrb[0].mxu0 %v2377
      %v3181 = vpop.f32.mrb[0].mxu0
      %v3182 = vadd.f32 %v3021, %v3181
      %v3183 = vpop.f32.mrb[0].mxu0
      %v3184 = vpop.f32.mrb[0].mxu0
      %v3185 = vadd.f32 %v3024, %v3184
      %v3186 = vpop.f32.mrb[0].mxu0
      %3187 = vmatprep.mubr.bf16.mxu0 %v2591
      %3188 = vmatmul.mubr.bf16.gmra.mrb[0].mxu0 %v2385
      %v3189 = vpop.f32.mrb[0].mxu0
      %v3190 = vadd.f32 %v3029, %v3189
      %v3191 = vpop.f32.mrb[0].mxu0
      %v3192 = vpop.f32.mrb[0].mxu0
      %v3193 = vadd.f32 %v3032, %v3192
      %v3194 = vpop.f32.mrb[0].mxu0
      %3195 = vmatprep.mubr.bf16.mxu0 %v2594
      %3196 = vmatmul.mubr.bf16.gmra.mrb[0].mxu0 %v2393
      %v3197 = vpop.f32.mrb[0].mxu0
      %v3198 = vadd.f32 %v3037, %v3197
      %v3199 = vpop.f32.mrb[0].mxu0
      %v3200 = vpop.f32.mrb[0].mxu0
      %v3201 = vadd.f32 %v3040, %v3200
      %v3202 = vpop.f32.mrb[0].mxu0
      %3203 = vmatprep.mubr.bf16.mxu0 %v2597
      %3204 = vmatmul.mubr.bf16.gmra.mrb[0].mxu0 %v2401
      %v3205 = vpop.f32.mrb[0].mxu0
      %v3206 = vadd.f32 %v3045, %v3205
      %v3207 = vpop.f32.mrb[0].mxu0
      %v3208 = vpop.f32.mrb[0].mxu0
      %v3209 = vadd.f32 %v3048, %v3208
      %v3210 = vpop.f32.mrb[0].mxu0
      %3211 = vmatprep.mubr.bf16.mxu0 %v2600
      %3212 = vmatmul.mubr.bf16.gmra.mrb[0].mxu0 %v2409
      %v3213 = vpop.f32.mrb[0].mxu0
      %v3214 = vadd.f32 %v3053, %v3213
      %v3215 = vpop.f32.mrb[0].mxu0
      %v3216 = vpop.f32.mrb[0].mxu0
      %v3217 = vadd.f32 %v3056, %v3216
      %v3218 = vpop.f32.mrb[0].mxu0
      %3219 = vmatprep.mubr.bf16.mxu0 %v2603
      %3220 = vmatmul.mubr.bf16.gmra.mrb[0].mxu0 %v2417
      %v3221 = vpop.f32.mrb[0].mxu0
      %v3222 = vadd.f32 %v3061, %v3221
      %v3223 = vpop.f32.mrb[0].mxu0
      %v3224 = vpop.f32.mrb[0].mxu0
      %v3225 = vadd.f32 %v3064, %v3224
      %v3226 = vpop.f32.mrb[0].mxu0
      %3227 = vmatprep.mubr.bf16.mxu0 %v2606
      %3228 = vmatmul.mubr.bf16.gmra.mrb[0].mxu0 %v2425
      %v3229 = vpop.f32.mrb[0].mxu0
      %v3230 = vadd.f32 %v3069, %v3229
      %v3231 = vpop.f32.mrb[0].mxu0
      %v3232 = vpop.f32.mrb[0].mxu0
      %v3233 = vadd.f32 %v3072, %v3232
      %v3234 = vpop.f32.mrb[0].mxu0
      %3235 = vmatprep.mubr.bf16.mxu0 %v2609
      %3236 = vmatmul.mubr.bf16.gmra.mrb[0].mxu0 %v2433
      %v3237 = vpop.f32.mrb[0].mxu0
      %v3238 = vadd.f32 %v3077, %v3237
      %v3239 = vpop.f32.mrb[0].mxu0
      %v3240 = vpop.f32.mrb[0].mxu0
      %v3241 = vadd.f32 %v3080, %v3240
      %v3242 = vpop.f32.mrb[0].mxu0
      %3243 = vmatprep.mubr.bf16.mxu0 %v2612
      %3244 = vmatmul.mubr.bf16.gmra.mrb[0].mxu0 %v2441
      %v3245 = vpop.f32.mrb[0].mxu0
      %v3246 = vadd.f32 %v3085, %v3245
      %v3247 = vpop.f32.mrb[0].mxu0
      %v3248 = vpop.f32.mrb[0].mxu0
      %v3249 = vadd.f32 %v3088, %v3248
      %v3250 = vpop.f32.mrb[0].mxu0
      %3251 = vmatprep.mubr.bf16.mxu0 %v2615
      %3252 = vmatmul.mubr.bf16.gmra.mrb[0].mxu0 %v2449
      %v3253 = vpop.f32.mrb[0].mxu0
      %v3254 = vadd.f32 %v3093, %v3253
      %v3255 = vpop.f32.mrb[0].mxu0
      %v3256 = vpop.f32.mrb[0].mxu0
      %v3257 = vadd.f32 %v3096, %v3256
      %v3258 = vpop.f32.mrb[0].mxu0
      %3259 = vmatprep.mubr.bf16.mxu0 %v2618
      %3260 = vmatmul.mubr.bf16.gmra.mrb[0].mxu0 %v2457
      %v3261 = vpop.f32.mrb[0].mxu0
      %v3262 = vadd.f32 %v3101, %v3261
      %v3263 = vpop.f32.mrb[0].mxu0
      %v3264 = vpop.f32.mrb[0].mxu0
      %v3265 = vadd.f32 %v3104, %v3264
      %v3266 = vpop.f32.mrb[0].mxu0
      %3267 = vdwg.mxu0
      %3272 = vrot.lane.b32.xlu0 %v3158, 127
      %v3273 = vpop.permute.xlu0 %3272
      %3274 = vrot.lane.b32.xlu0 %v3161, 127
      %v3275 = vpop.permute.xlu0 %3274
      %3276 = vrot.lane.b32.xlu0 %v3166, 127
      %v3277 = vpop.permute.xlu0 %3276
      %3278 = vrot.lane.b32.xlu0 %v3169, 127
      %v3279 = vpop.permute.xlu0 %3278
      %v3284 = vadd.f32 %v3142, %v3273
      %v3285 = vadd.f32 %v3145, %v3275
      %v3286 = vadd.f32 %v3150, %v3277
      %v3287 = vadd.f32 %v3153, %v3279
      %3292 = vrot.lane.b32.xlu0 %v3174, 126
      %v3293 = vpop.permute.xlu0 %3292
      %3294 = vrot.lane.b32.xlu0 %v3177, 126
      %v3295 = vpop.permute.xlu0 %3294
      %3296 = vrot.lane.b32.xlu0 %v3182, 126
      %v3297 = vpop.permute.xlu0 %3296
      %3298 = vrot.lane.b32.xlu0 %v3185, 126
      %v3299 = vpop.permute.xlu0 %3298
      %v3304 = vadd.f32 %v3284, %v3293
      %v3305 = vadd.f32 %v3285, %v3295
      %v3306 = vadd.f32 %v3286, %v3297
      %v3307 = vadd.f32 %v3287, %v3299
      %3312 = vrot.lane.b32.xlu0 %v3190, 125
      %v3313 = vpop.permute.xlu0 %3312
      %3314 = vrot.lane.b32.xlu0 %v3193, 125
      %v3315 = vpop.permute.xlu0 %3314
      %3316 = vrot.lane.b32.xlu0 %v3198, 125
      %v3317 = vpop.permute.xlu0 %3316
      %3318 = vrot.lane.b32.xlu0 %v3201, 125
      %v3319 = vpop.permute.xlu0 %3318
      %v3324 = vadd.f32 %v3304, %v3313
      %v3325 = vadd.f32 %v3305, %v3315
      %v3326 = vadd.f32 %v3306, %v3317
      %v3327 = vadd.f32 %v3307, %v3319
      %3332 = vrot.lane.b32.xlu0 %v3206, 124
      %v3333 = vpop.permute.xlu0 %3332
      %3334 = vrot.lane.b32.xlu0 %v3209, 124
      %v3335 = vpop.permute.xlu0 %3334
      %3336 = vrot.lane.b32.xlu0 %v3214, 124
      %v3337 = vpop.permute.xlu0 %3336
      %3338 = vrot.lane.b32.xlu0 %v3217, 124
      %v3339 = vpop.permute.xlu0 %3338
      %v3344 = vadd.f32 %v3324, %v3333
      %v3345 = vadd.f32 %v3325, %v3335
      %v3346 = vadd.f32 %v3326, %v3337
      %v3347 = vadd.f32 %v3327, %v3339
      %3352 = vrot.lane.b32.xlu0 %v3222, 123
      %v3353 = vpop.permute.xlu0 %3352
      %3354 = vrot.lane.b32.xlu0 %v3225, 123
      %v3355 = vpop.permute.xlu0 %3354
      %3356 = vrot.lane.b32.xlu0 %v3230, 123
      %v3357 = vpop.permute.xlu0 %3356
      %3358 = vrot.lane.b32.xlu0 %v3233, 123
      %v3359 = vpop.permute.xlu0 %3358
      %v3364 = vadd.f32 %v3344, %v3353
      %v3365 = vadd.f32 %v3345, %v3355
      %v3366 = vadd.f32 %v3346, %v3357
      %v3367 = vadd.f32 %v3347, %v3359
      %3372 = vrot.lane.b32.xlu0 %v3238, 122
      %v3373 = vpop.permute.xlu0 %3372
      %3374 = vrot.lane.b32.xlu0 %v3241, 122
      %v3375 = vpop.permute.xlu0 %3374
      %3376 = vrot.lane.b32.xlu0 %v3246, 122
      %v3377 = vpop.permute.xlu0 %3376
      %3378 = vrot.lane.b32.xlu0 %v3249, 122
      %v3379 = vpop.permute.xlu0 %3378
      %v3384 = vadd.f32 %v3364, %v3373
      %v3385 = vadd.f32 %v3365, %v3375
      %v3386 = vadd.f32 %v3366, %v3377
      %v3387 = vadd.f32 %v3367, %v3379
      %3392 = vrot.lane.b32.xlu0 %v3254, 121
      %v3393 = vpop.permute.xlu0 %3392
      %3394 = vrot.lane.b32.xlu0 %v3257, 121
      %v3395 = vpop.permute.xlu0 %3394
      %3396 = vrot.lane.b32.xlu0 %v3262, 121
      %v3397 = vpop.permute.xlu0 %3396
      %3398 = vrot.lane.b32.xlu0 %v3265, 121
      %v3399 = vpop.permute.xlu0 %3398
      %v3404 = vadd.f32 %v3384, %v3393
      %v3405 = vadd.f32 %v3385, %v3395
      %v3406 = vadd.f32 %v3386, %v3397
      %v3407 = vadd.f32 %v3387, %v3399
      %v3408 = vld [vmem:[%s3] sm:$0xff]
      %v3409 = vld [vmem:[%s3 + $0x8] sm:$0xff]
      %v3410 = vld [vmem:[%s3 + $0x10] sm:$0xff]
      %v3411 = vld [vmem:[%s3 + $0x18] sm:$0xff]
      %3413 = vset.pattern.permute.xlu0 0
      %3414 = vperm.xlu0 %3413, %v3408
      %v3415 = vpop.permute.xlu0 %3414
      %3418 = vset.pattern.permute.xlu0 0
      %3419 = vperm.xlu0 %3418, %v3409
      %v3420 = vpop.permute.xlu0 %3419
      %3423 = vset.pattern.permute.xlu0 0
      %3424 = vperm.xlu0 %3423, %v3410
      %v3425 = vpop.permute.xlu0 %3424
      %3428 = vset.pattern.permute.xlu0 0
      %3429 = vperm.xlu0 %3428, %v3411
      %v3430 = vpop.permute.xlu0 %3429
      %v3432 = vadd.f32 %v3404, %v3415
      %v3433 = vadd.f32 %v3405, %v3420
      %v3434 = vadd.f32 %v3406, %v3425
      %v3435 = vadd.f32 %v3407, %v3430
      %3436 = vst [vmem:[%s197] sm:$0xf] 0
      %3437 = vst [vmem:[%s197 + $0x4] sm:$0xf] 0
      %3438 = vst [vmem:[%s197 + $0x8] sm:$0xf] 0
      %3439 = vst [vmem:[%s197 + $0xc] sm:$0xf] 0
      %v3440 = vpack.c.bf16 %v3433, %v3432
      %v3441 = vpack.c.bf16 %v3435, %v3434
      %v3444 = vunpack.c.l.b16 %v3440
      %v3445 = vunpack.c.h.b16 %v3440
      %v3446 = vunpack.c.l.b16 %v3441
      %v3447 = vunpack.c.h.b16 %v3441
      %v3448 = vpack.c.b16 %v3444, %v3444
      %v3449 = vpack.c.b16 %v3445, %v3445
      %v3450 = vpack.c.b16 %v3446, %v3446
      %v3451 = vpack.c.b16 %v3447, %v3447
      %vm3456 = vcmask 986112
      %3457 = vst.msk [vmem:[%s197] sm:$0xf] %vm3456, %v3448
      %3458 = vst.msk [vmem:[%s197 + $0x4] sm:$0xf] %vm3456, %v3449
      %3459 = vst.msk [vmem:[%s197 + $0x8] sm:$0xf] %vm3456, %v3450
      %3460 = vst.msk [vmem:[%s197 + $0xc] sm:$0xf] %vm3456, %v3451
      %p3461 = scmp.lt.s32.totalorder %s15, 1
      %s3462 = scalar_select %p3461, %s15, 1
      %s3463 = smul.addr %s3462, 4
      %s3464 = smul.addr %s3463, 4
      %s3465 = scalar_lea.vmem %s4, %s3464
      // Predicated region
      $region37: #{conv1d_forward.2} parent=35 // pred_check
        %p3466 = pneg %p122
      $region38: #{conv1d_forward.2} parent=35 // pred_check_branch
        %3468 = sbr.rel (%p3466) target = $region40
      $region39: #{conv1d_forward.2} parent=35 // pred_region
        _
      $region40: #{conv1d_forward.2} parent=35 // pred_fallthru
        _
    $region36: #{conv1d_forward.2} parent=5 // pred_fallthru
      _
    %p3469 = scmp.le.s32.totalorder 2, %s10
    // Predicated region
    $region41: #{conv1d_forward.2} parent=5 // pred_check
      %p3470 = pneg %p3469
    $region42: #{conv1d_forward.2} parent=5 // pred_check_branch
      %3472 = sbr.rel (%p3470) target = $region44
    $region43: #{conv1d_forward.2} parent=5 // pred_region
      %s3473 = ssub.s32 %s10, 2
      // Predicated region
      $region45: #{conv1d_forward.2} parent=43 // pred_check
        %p3474 = pneg %p128
      $region46: #{conv1d_forward.2} parent=43 // pred_check_branch
        %3476 = sbr.rel (%p3474) target = $region48
      $region47: #{conv1d_forward.2} parent=43 // pred_region
        %p3477 = scmp.lt.s32.totalorder %s16, 1
        %s3478 = scalar_select %p3477, %s16, 1
        %s3479 = smul.addr %s3478, 4
        %s3480 = smul.addr %s3479, 4
        %s3481 = scalar_lea.vmem %s4, %s3480
      $region48: #{conv1d_forward.2} parent=43 // pred_fallthru
        _
    $region44: #{conv1d_forward.2} parent=5 // pred_fallthru
      _
  $region6: #{conv1d_forward.2} parent=0 // loop_footer
    %s14 = sadd.s32 1, %s10
  $region7: #{conv1d_forward.2} parent=0 // loop_footer_branch
    %9 = sbr.rel target = $region3
  $region8: #{conv1d_forward.2} parent=0 // loop_exit
    _

// kernel: conv1d_forward.3
$region0: #{conv1d_forward.3}
  #allocation0 [shape = 'u32[]', space=smem, size = 0x4, offset = 0x4, fixed_abs, tag = 'smem constant byte address 0x4 - core index']
  #allocation1 [shape = 'u32[144,128]{1,0:T(1,128)}', space=vmem, size = 0x12000, scoped, tag = 'internal scratch']
  %s0 = inlined_call_operand.vmem [shape: bf16[2,4096], index: 0, kind: input, shape index: {}]
  %s1 = inlined_call_operand.vmem [shape: bf16[4096,128], index: 1, kind: input, shape index: {}]
  %s2 = inlined_call_operand.vmem [shape: f32[1,128], index: 2, kind: input, shape index: {}]
  %s3 = inlined_call_operand.hbm [shape: f32[2,128], index: 3, kind: output, shape index: {}]
  %s4 = sld [smem:[#allocation0]]
  $region22: #{conv1d_forward.3} parent=0
    _
  %s6 = ssub.s32 1, %s4
  %s7 = scalar_select 0, %s6, %s4
  $region1: #{conv1d_forward.3} parent=0
    #allocation2 [shape = 'u8[1024]{0}', space=vmem, size = 0x400, scoped, tag = 'output window, operand 0, single buffered']
    #allocation3 [shape = 's32[1]{0}', space=sflag, size = 0x4, scoped, tag = 'scoped memory for conv1d_forward.3']
    %8 = vsyncpa [#allocation3], 0
    // Predicated region
    $region2: #{conv1d_forward.3} parent=1 // pred_check
      _
    $region3: #{conv1d_forward.3} parent=1 // pred_check_branch
      %10 = sbr.rel (0) target = $region5
    $region4: #{conv1d_forward.3} parent=1 // pred_region
      _
    $region5: #{conv1d_forward.3} parent=1 // pred_fallthru
      _
    // Predicated region
    $region6: #{conv1d_forward.3} parent=1 // pred_check
      _
    $region7: #{conv1d_forward.3} parent=1 // pred_check_branch
      %12 = sbr.rel (0) target = $region9
    $region8: #{conv1d_forward.3} parent=1 // pred_region
      _
    $region9: #{conv1d_forward.3} parent=1 // pred_fallthru
      _
    // Predicated region
    $region10: #{conv1d_forward.3} parent=1 // pred_check
      _
    $region11: #{conv1d_forward.3} parent=1 // pred_check_branch
      %14 = sbr.rel (0) target = $region13
    $region12: #{conv1d_forward.3} parent=1 // pred_region
      _
    $region13: #{conv1d_forward.3} parent=1 // pred_fallthru
      _
    %v16 = vld [vmem:[%s0] sm:$0xff]
    %v17 = vld [vmem:[%s0 + $0x8] sm:$0xff]
    %v18 = vld [vmem:[%s0 + $0x10] sm:$0xff]
    %v19 = vld [vmem:[%s0 + $0x18] sm:$0xff]
    %v20 = vld [vmem:[%s1] sm:$0xf]
    %v21 = vld [vmem:[%s1 + $0x4] sm:$0xf]
    %v22 = vld [vmem:[%s1 + $0x8] sm:$0xf]
    %v23 = vld [vmem:[%s1 + $0xc] sm:$0xf]
    %v24 = vld [vmem:[%s1 + $0x10] sm:$0xf]
    %v25 = vld [vmem:[%s1 + $0x14] sm:$0xf]
    %v26 = vld [vmem:[%s1 + $0x18] sm:$0xf]
    %v27 = vld [vmem:[%s1 + $0x1c] sm:$0xf]
    %v28 = vld [vmem:[%s1 + $0x20] sm:$0xf]
    %v29 = vld [vmem:[%s1 + $0x24] sm:$0xf]
    %v30 = vld [vmem:[%s1 + $0x28] sm:$0xf]
    %v31 = vld [vmem:[%s1 + $0x2c] sm:$0xf]
    %v32 = vld [vmem:[%s1 + $0x30] sm:$0xf]
    %v33 = vld [vmem:[%s1 + $0x34] sm:$0xf]
    %v34 = vld [vmem:[%s1 + $0x38] sm:$0xf]
    %v35 = vld [vmem:[%s1 + $0x3c] sm:$0xf]
    %v36 = vld [vmem:[%s1 + $0x40] sm:$0xf]
    %v37 = vld [vmem:[%s1 + $0x44] sm:$0xf]
    %v38 = vld [vmem:[%s1 + $0x48] sm:$0xf]
    %v39 = vld [vmem:[%s1 + $0x4c] sm:$0xf]
    %v40 = vld [vmem:[%s1 + $0x50] sm:$0xf]
    %v41 = vld [vmem:[%s1 + $0x54] sm:$0xf]
    %v42 = vld [vmem:[%s1 + $0x58] sm:$0xf]
    %v43 = vld [vmem:[%s1 + $0x5c] sm:$0xf]
    %v44 = vld [vmem:[%s1 + $0x60] sm:$0xf]
    %v45 = vld [vmem:[%s1 + $0x64] sm:$0xf]
    %v46 = vld [vmem:[%s1 + $0x68] sm:$0xf]
    %v47 = vld [vmem:[%s1 + $0x6c] sm:$0xf]
    %v48 = vld [vmem:[%s1 + $0x70] sm:$0xf]
    %v49 = vld [vmem:[%s1 + $0x74] sm:$0xf]
    %v50 = vld [vmem:[%s1 + $0x78] sm:$0xf]
    %v51 = vld [vmem:[%s1 + $0x7c] sm:$0xf]
    %v52 = vld [vmem:[%s1 + $0x80] sm:$0xf]
    %v53 = vld [vmem:[%s1 + $0x84] sm:$0xf]
    %v54 = vld [vmem:[%s1 + $0x88] sm:$0xf]
    %v55 = vld [vmem:[%s1 + $0x8c] sm:$0xf]
    %v56 = vld [vmem:[%s1 + $0x90] sm:$0xf]
    %v57 = vld [vmem:[%s1 + $0x94] sm:$0xf]
    %v58 = vld [vmem:[%s1 + $0x98] sm:$0xf]
    %v59 = vld [vmem:[%s1 + $0x9c] sm:$0xf]
    %v60 = vld [vmem:[%s1 + $0xa0] sm:$0xf]
    %v61 = vld [vmem:[%s1 + $0xa4] sm:$0xf]
    %v62 = vld [vmem:[%s1 + $0xa8] sm:$0xf]
    %v63 = vld [vmem:[%s1 + $0xac] sm:$0xf]
    %v64 = vld [vmem:[%s1 + $0xb0] sm:$0xf]
    %v65 = vld [vmem:[%s1 + $0xb4] sm:$0xf]
    %v66 = vld [vmem:[%s1 + $0xb8] sm:$0xf]
    %v67 = vld [vmem:[%s1 + $0xbc] sm:$0xf]
    %v68 = vld [vmem:[%s1 + $0xc0] sm:$0xf]
    %v69 = vld [vmem:[%s1 + $0xc4] sm:$0xf]
    %v70 = vld [vmem:[%s1 + $0xc8] sm:$0xf]
    %v71 = vld [vmem:[%s1 + $0xcc] sm:$0xf]
    %v72 = vld [vmem:[%s1 + $0xd0] sm:$0xf]
    %v73 = vld [vmem:[%s1 + $0xd4] sm:$0xf]
    %v74 = vld [vmem:[%s1 + $0xd8] sm:$0xf]
    %v75 = vld [vmem:[%s1 + $0xdc] sm:$0xf]
    %v76 = vld [vmem:[%s1 + $0xe0] sm:$0xf]
    %v77 = vld [vmem:[%s1 + $0xe4] sm:$0xf]
    %v78 = vld [vmem:[%s1 + $0xe8] sm:$0xf]
    %v79 = vld [vmem:[%s1 + $0xec] sm:$0xf]
    %v80 = vld [vmem:[%s1 + $0xf0] sm:$0xf]
    %v81 = vld [vmem:[%s1 + $0xf4] sm:$0xf]
    %v82 = vld [vmem:[%s1 + $0xf8] sm:$0xf]
    %v83 = vld [vmem:[%s1 + $0xfc] sm:$0xf]
    %v84 = vld [vmem:[%s1 + $0x100] sm:$0xf]
    %v85 = vld [vmem:[%s1 + $0x104] sm:$0xf]
    %v86 = vld [vmem:[%s1 + $0x108] sm:$0xf]
    %v87 = vld [vmem:[%s1 + $0x10c] sm:$0xf]
    %v88 = vld [vmem:[%s1 + $0x110] sm:$0xf]
    %v89 = vld [vmem:[%s1 + $0x114] sm:$0xf]
    %v90 = vld [vmem:[%s1 + $0x118] sm:$0xf]
    %v91 = vld [vmem:[%s1 + $0x11c] sm:$0xf]
    %v92 = vld [vmem:[%s1 + $0x120] sm:$0xf]
    %v93 = vld [vmem:[%s1 + $0x124] sm:$0xf]
    %v94 = vld [vmem:[%s1 + $0x128] sm:$0xf]
    %v95 = vld [vmem:[%s1 + $0x12c] sm:$0xf]
    %v96 = vld [vmem:[%s1 + $0x130] sm:$0xf]
    %v97 = vld [vmem:[%s1 + $0x134] sm:$0xf]
    %v98 = vld [vmem:[%s1 + $0x138] sm:$0xf]
    %v99 = vld [vmem:[%s1 + $0x13c] sm:$0xf]
    %v100 = vld [vmem:[%s1 + $0x140] sm:$0xf]
    %v101 = vld [vmem:[%s1 + $0x144] sm:$0xf]
    %v102 = vld [vmem:[%s1 + $0x148] sm:$0xf]
    %v103 = vld [vmem:[%s1 + $0x14c] sm:$0xf]
    %v104 = vld [vmem:[%s1 + $0x150] sm:$0xf]
    %v105 = vld [vmem:[%s1 + $0x154] sm:$0xf]
    %v106 = vld [vmem:[%s1 + $0x158] sm:$0xf]
    %v107 = vld [vmem:[%s1 + $0x15c] sm:$0xf]
    %v108 = vld [vmem:[%s1 + $0x160] sm:$0xf]
    %v109 = vld [vmem:[%s1 + $0x164] sm:$0xf]
    %v110 = vld [vmem:[%s1 + $0x168] sm:$0xf]
    %v111 = vld [vmem:[%s1 + $0x16c] sm:$0xf]
    %v112 = vld [vmem:[%s1 + $0x170] sm:$0xf]
    %v113 = vld [vmem:[%s1 + $0x174] sm:$0xf]
    %v114 = vld [vmem:[%s1 + $0x178] sm:$0xf]
    %v115 = vld [vmem:[%s1 + $0x17c] sm:$0xf]
    %v116 = vld [vmem:[%s1 + $0x180] sm:$0xf]
    %v117 = vld [vmem:[%s1 + $0x184] sm:$0xf]
    %v118 = vld [vmem:[%s1 + $0x188] sm:$0xf]
    %v119 = vld [vmem:[%s1 + $0x18c] sm:$0xf]
    %v120 = vld [vmem:[%s1 + $0x190] sm:$0xf]
    %v121 = vld [vmem:[%s1 + $0x194] sm:$0xf]
    %v122 = vld [vmem:[%s1 + $0x198] sm:$0xf]
    %v123 = vld [vmem:[%s1 + $0x19c] sm:$0xf]
    %v124 = vld [vmem:[%s1 + $0x1a0] sm:$0xf]
    %v125 = vld [vmem:[%s1 + $0x1a4] sm:$0xf]
    %v126 = vld [vmem:[%s1 + $0x1a8] sm:$0xf]
    %v127 = vld [vmem:[%s1 + $0x1ac] sm:$0xf]
    %v128 = vld [vmem:[%s1 + $0x1b0] sm:$0xf]
    %v129 = vld [vmem:[%s1 + $0x1b4] sm:$0xf]
    %v130 = vld [vmem:[%s1 + $0x1b8] sm:$0xf]
    %v131 = vld [vmem:[%s1 + $0x1bc] sm:$0xf]
    %v132 = vld [vmem:[%s1 + $0x1c0] sm:$0xf]
    %v133 = vld [vmem:[%s1 + $0x1c4] sm:$0xf]
    %v134 = vld [vmem:[%s1 + $0x1c8] sm:$0xf]
    %v135 = vld [vmem:[%s1 + $0x1cc] sm:$0xf]
    %v136 = vld [vmem:[%s1 + $0x1d0] sm:$0xf]
    %v137 = vld [vmem:[%s1 + $0x1d4] sm:$0xf]
    %v138 = vld [vmem:[%s1 + $0x1d8] sm:$0xf]
    %v139 = vld [vmem:[%s1 + $0x1dc] sm:$0xf]
    %v140 = vld [vmem:[%s1 + $0x1e0] sm:$0xf]
    %v141 = vld [vmem:[%s1 + $0x1e4] sm:$0xf]
    %v142 = vld [vmem:[%s1 + $0x1e8] sm:$0xf]
    %v143 = vld [vmem:[%s1 + $0x1ec] sm:$0xf]
    %v144 = vld [vmem:[%s1 + $0x1f0] sm:$0xf]
    %v145 = vld [vmem:[%s1 + $0x1f4] sm:$0xf]
    %v146 = vld [vmem:[%s1 + $0x1f8] sm:$0xf]
    %v147 = vld [vmem:[%s1 + $0x1fc] sm:$0xf]
    %v148 = vld [vmem:[%s1 + $0x200] sm:$0xf]
    %v149 = vld [vmem:[%s1 + $0x204] sm:$0xf]
    %v150 = vld [vmem:[%s1 + $0x208] sm:$0xf]
    %v151 = vld [vmem:[%s1 + $0x20c] sm:$0xf]
    %v152 = vld [vmem:[%s1 + $0x210] sm:$0xf]
    %v153 = vld [vmem:[%s1 + $0x214] sm:$0xf]
    %v154 = vld [vmem:[%s1 + $0x218] sm:$0xf]
    %v155 = vld [vmem:[%s1 + $0x21c] sm:$0xf]
    %v156 = vld [vmem:[%s1 + $0x220] sm:$0xf]
    %v157 = vld [vmem:[%s1 + $0x224] sm:$0xf]
    %v158 = vld [vmem:[%s1 + $0x228] sm:$0xf]
    %v159 = vld [vmem:[%s1 + $0x22c] sm:$0xf]
    %v160 = vld [vmem:[%s1 + $0x230] sm:$0xf]
    %v161 = vld [vmem:[%s1 + $0x234] sm:$0xf]
    %v162 = vld [vmem:[%s1 + $0x238] sm:$0xf]
    %v163 = vld [vmem:[%s1 + $0x23c] sm:$0xf]
    %v164 = vld [vmem:[%s1 + $0x240] sm:$0xf]
    %v165 = vld [vmem:[%s1 + $0x244] sm:$0xf]
    %v166 = vld [vmem:[%s1 + $0x248] sm:$0xf]
    %v167 = vld [vmem:[%s1 + $0x24c] sm:$0xf]
    %v168 = vld [vmem:[%s1 + $0x250] sm:$0xf]
    %v169 = vld [vmem:[%s1 + $0x254] sm:$0xf]
    %v170 = vld [vmem:[%s1 + $0x258] sm:$0xf]
    %v171 = vld [vmem:[%s1 + $0x25c] sm:$0xf]
    %v172 = vld [vmem:[%s1 + $0x260] sm:$0xf]
    %v173 = vld [vmem:[%s1 + $0x264] sm:$0xf]
    %v174 = vld [vmem:[%s1 + $0x268] sm:$0xf]
    %v175 = vld [vmem:[%s1 + $0x26c] sm:$0xf]
    %v176 = vld [vmem:[%s1 + $0x270] sm:$0xf]
    %v177 = vld [vmem:[%s1 + $0x274] sm:$0xf]
    %v178 = vld [vmem:[%s1 + $0x278] sm:$0xf]
    %v179 = vld [vmem:[%s1 + $0x27c] sm:$0xf]
    %v180 = vld [vmem:[%s1 + $0x280] sm:$0xf]
    %v181 = vld [vmem:[%s1 + $0x284] sm:$0xf]
    %v182 = vld [vmem:[%s1 + $0x288] sm:$0xf]
    %v183 = vld [vmem:[%s1 + $0x28c] sm:$0xf]
    %v184 = vld [vmem:[%s1 + $0x290] sm:$0xf]
    %v185 = vld [vmem:[%s1 + $0x294] sm:$0xf]
    %v186 = vld [vmem:[%s1 + $0x298] sm:$0xf]
    %v187 = vld [vmem:[%s1 + $0x29c] sm:$0xf]
    %v188 = vld [vmem:[%s1 + $0x2a0] sm:$0xf]
    %v189 = vld [vmem:[%s1 + $0x2a4] sm:$0xf]
    %v190 = vld [vmem:[%s1 + $0x2a8] sm:$0xf]
    %v191 = vld [vmem:[%s1 + $0x2ac] sm:$0xf]
    %v192 = vld [vmem:[%s1 + $0x2b0] sm:$0xf]
    %v193 = vld [vmem:[%s1 + $0x2b4] sm:$0xf]
    %v194 = vld [vmem:[%s1 + $0x2b8] sm:$0xf]
    %v195 = vld [vmem:[%s1 + $0x2bc] sm:$0xf]
    %v196 = vld [vmem:[%s1 + $0x2c0] sm:$0xf]
    %v197 = vld [vmem:[%s1 + $0x2c4] sm:$0xf]
    %v198 = vld [vmem:[%s1 + $0x2c8] sm:$0xf]
    %v199 = vld [vmem:[%s1 + $0x2cc] sm:$0xf]
    %v200 = vld [vmem:[%s1 + $0x2d0] sm:$0xf]
    %v201 = vld [vmem:[%s1 + $0x2d4] sm:$0xf]
    %v202 = vld [vmem:[%s1 + $0x2d8] sm:$0xf]
    %v203 = vld [vmem:[%s1 + $0x2dc] sm:$0xf]
    %v204 = vld [vmem:[%s1 + $0x2e0] sm:$0xf]
    %v205 = vld [vmem:[%s1 + $0x2e4] sm:$0xf]
    %v206 = vld [vmem:[%s1 + $0x2e8] sm:$0xf]
    %v207 = vld [vmem:[%s1 + $0x2ec] sm:$0xf]
    %v208 = vld [vmem:[%s1 + $0x2f0] sm:$0xf]
    %v209 = vld [vmem:[%s1 + $0x2f4] sm:$0xf]
    %v210 = vld [vmem:[%s1 + $0x2f8] sm:$0xf]
    %v211 = vld [vmem:[%s1 + $0x2fc] sm:$0xf]
    %v212 = vld [vmem:[%s1 + $0x300] sm:$0xf]
    %v213 = vld [vmem:[%s1 + $0x304] sm:$0xf]
    %v214 = vld [vmem:[%s1 + $0x308] sm:$0xf]
    %v215 = vld [vmem:[%s1 + $0x30c] sm:$0xf]
    %v216 = vld [vmem:[%s1 + $0x310] sm:$0xf]
    %v217 = vld [vmem:[%s1 + $0x314] sm:$0xf]
    %v218 = vld [vmem:[%s1 + $0x318] sm:$0xf]
    %v219 = vld [vmem:[%s1 + $0x31c] sm:$0xf]
    %v220 = vld [vmem:[%s1 + $0x320] sm:$0xf]
    %v221 = vld [vmem:[%s1 + $0x324] sm:$0xf]
    %v222 = vld [vmem:[%s1 + $0x328] sm:$0xf]
    %v223 = vld [vmem:[%s1 + $0x32c] sm:$0xf]
    %v224 = vld [vmem:[%s1 + $0x330] sm:$0xf]
    %v225 = vld [vmem:[%s1 + $0x334] sm:$0xf]
    %v226 = vld [vmem:[%s1 + $0x338] sm:$0xf]
    %v227 = vld [vmem:[%s1 + $0x33c] sm:$0xf]
    %v228 = vld [vmem:[%s1 + $0x340] sm:$0xf]
    %v229 = vld [vmem:[%s1 + $0x344] sm:$0xf]
    %v230 = vld [vmem:[%s1 + $0x348] sm:$0xf]
    %v231 = vld [vmem:[%s1 + $0x34c] sm:$0xf]
    %v232 = vld [vmem:[%s1 + $0x350] sm:$0xf]
    %v233 = vld [vmem:[%s1 + $0x354] sm:$0xf]
    %v234 = vld [vmem:[%s1 + $0x358] sm:$0xf]
    %v235 = vld [vmem:[%s1 + $0x35c] sm:$0xf]
    %v236 = vld [vmem:[%s1 + $0x360] sm:$0xf]
    %v237 = vld [vmem:[%s1 + $0x364] sm:$0xf]
    %v238 = vld [vmem:[%s1 + $0x368] sm:$0xf]
    %v239 = vld [vmem:[%s1 + $0x36c] sm:$0xf]
    %v240 = vld [vmem:[%s1 + $0x370] sm:$0xf]
    %v241 = vld [vmem:[%s1 + $0x374] sm:$0xf]
    %v242 = vld [vmem:[%s1 + $0x378] sm:$0xf]
    %v243 = vld [vmem:[%s1 + $0x37c] sm:$0xf]
    %v244 = vld [vmem:[%s1 + $0x380] sm:$0xf]
    %v245 = vld [vmem:[%s1 + $0x384] sm:$0xf]
    %v246 = vld [vmem:[%s1 + $0x388] sm:$0xf]
    %v247 = vld [vmem:[%s1 + $0x38c] sm:$0xf]
    %v248 = vld [vmem:[%s1 + $0x390] sm:$0xf]
    %v249 = vld [vmem:[%s1 + $0x394] sm:$0xf]
    %v250 = vld [vmem:[%s1 + $0x398] sm:$0xf]
    %v251 = vld [vmem:[%s1 + $0x39c] sm:$0xf]
    %v252 = vld [vmem:[%s1 + $0x3a0] sm:$0xf]
    %v253 = vld [vmem:[%s1 + $0x3a4] sm:$0xf]
    %v254 = vld [vmem:[%s1 + $0x3a8] sm:$0xf]
    %v255 = vld [vmem:[%s1 + $0x3ac] sm:$0xf]
    %v256 = vld [vmem:[%s1 + $0x3b0] sm:$0xf]
    %v257 = vld [vmem:[%s1 + $0x3b4] sm:$0xf]
    %v258 = vld [vmem:[%s1 + $0x3b8] sm:$0xf]
    %v259 = vld [vmem:[%s1 + $0x3bc] sm:$0xf]
    %v260 = vld [vmem:[%s1 + $0x3c0] sm:$0xf]
    %v261 = vld [vmem:[%s1 + $0x3c4] sm:$0xf]
    %v262 = vld [vmem:[%s1 + $0x3c8] sm:$0xf]
    %v263 = vld [vmem:[%s1 + $0x3cc] sm:$0xf]
    %v264 = vld [vmem:[%s1 + $0x3d0] sm:$0xf]
    %v265 = vld [vmem:[%s1 + $0x3d4] sm:$0xf]
    %v266 = vld [vmem:[%s1 + $0x3d8] sm:$0xf]
    %v267 = vld [vmem:[%s1 + $0x3dc] sm:$0xf]
    %v268 = vld [vmem:[%s1 + $0x3e0] sm:$0xf]
    %v269 = vld [vmem:[%s1 + $0x3e4] sm:$0xf]
    %v270 = vld [vmem:[%s1 + $0x3e8] sm:$0xf]
    %v271 = vld [vmem:[%s1 + $0x3ec] sm:$0xf]
    %v272 = vld [vmem:[%s1 + $0x3f0] sm:$0xf]
    %v273 = vld [vmem:[%s1 + $0x3f4] sm:$0xf]
    %v274 = vld [vmem:[%s1 + $0x3f8] sm:$0xf]
    %v275 = vld [vmem:[%s1 + $0x3fc] sm:$0xf]
    %v276 = vld [vmem:[%s1 + $0x400] sm:$0xf]
    %v277 = vld [vmem:[%s1 + $0x404] sm:$0xf]
    %v278 = vld [vmem:[%s1 + $0x408] sm:$0xf]
    %v279 = vld [vmem:[%s1 + $0x40c] sm:$0xf]
    %v280 = vld [vmem:[%s1 + $0x410] sm:$0xf]
    %v281 = vld [vmem:[%s1 + $0x414] sm:$0xf]
    %v282 = vld [vmem:[%s1 + $0x418] sm:$0xf]
    %v283 = vld [vmem:[%s1 + $0x41c] sm:$0xf]
    %v284 = vld [vmem:[%s1 + $0x420] sm:$0xf]
    %v285 = vld [vmem:[%s1 + $0x424] sm:$0xf]
    %v286 = vld [vmem:[%s1 + $0x428] sm:$0xf]
    %v287 = vld [vmem:[%s1 + $0x42c] sm:$0xf]
    %v288 = vld [vmem:[%s1 + $0x430] sm:$0xf]
    %v289 = vld [vmem:[%s1 + $0x434] sm:$0xf]
    %v290 = vld [vmem:[%s1 + $0x438] sm:$0xf]
    %v291 = vld [vmem:[%s1 + $0x43c] sm:$0xf]
    %v292 = vld [vmem:[%s1 + $0x440] sm:$0xf]
    %v293 = vld [vmem:[%s1 + $0x444] sm:$0xf]
    %v294 = vld [vmem:[%s1 + $0x448] sm:$0xf]
    %v295 = vld [vmem:[%s1 + $0x44c] sm:$0xf]
    %v296 = vld [vmem:[%s1 + $0x450] sm:$0xf]
    %v297 = vld [vmem:[%s1 + $0x454] sm:$0xf]
    %v298 = vld [vmem:[%s1 + $0x458] sm:$0xf]
    %v299 = vld [vmem:[%s1 + $0x45c] sm:$0xf]
    %v300 = vld [vmem:[%s1 + $0x460] sm:$0xf]
    %v301 = vld [vmem:[%s1 + $0x464] sm:$0xf]
    %v302 = vld [vmem:[%s1 + $0x468] sm:$0xf]
    %v303 = vld [vmem:[%s1 + $0x46c] sm:$0xf]
    %v304 = vld [vmem:[%s1 + $0x470] sm:$0xf]
    %v305 = vld [vmem:[%s1 + $0x474] sm:$0xf]
    %v306 = vld [vmem:[%s1 + $0x478] sm:$0xf]
    %v307 = vld [vmem:[%s1 + $0x47c] sm:$0xf]
    %v308 = vld [vmem:[%s1 + $0x480] sm:$0xf]
    %v309 = vld [vmem:[%s1 + $0x484] sm:$0xf]
    %v310 = vld [vmem:[%s1 + $0x488] sm:$0xf]
    %v311 = vld [vmem:[%s1 + $0x48c] sm:$0xf]
    %v312 = vld [vmem:[%s1 + $0x490] sm:$0xf]
    %v313 = vld [vmem:[%s1 + $0x494] sm:$0xf]
    %v314 = vld [vmem:[%s1 + $0x498] sm:$0xf]
    %v315 = vld [vmem:[%s1 + $0x49c] sm:$0xf]
    %v316 = vld [vmem:[%s1 + $0x4a0] sm:$0xf]
    %v317 = vld [vmem:[%s1 + $0x4a4] sm:$0xf]
    %v318 = vld [vmem:[%s1 + $0x4a8] sm:$0xf]
    %v319 = vld [vmem:[%s1 + $0x4ac] sm:$0xf]
    %v320 = vld [vmem:[%s1 + $0x4b0] sm:$0xf]
    %v321 = vld [vmem:[%s1 + $0x4b4] sm:$0xf]
    %v322 = vld [vmem:[%s1 + $0x4b8] sm:$0xf]
    %v323 = vld [vmem:[%s1 + $0x4bc] sm:$0xf]
    %v324 = vld [vmem:[%s1 + $0x4c0] sm:$0xf]
    %v325 = vld [vmem:[%s1 + $0x4c4] sm:$0xf]
    %v326 = vld [vmem:[%s1 + $0x4c8] sm:$0xf]
    %v327 = vld [vmem:[%s1 + $0x4cc] sm:$0xf]
    %v328 = vld [vmem:[%s1 + $0x4d0] sm:$0xf]
    %v329 = vld [vmem:[%s1 + $0x4d4] sm:$0xf]
    %v330 = vld [vmem:[%s1 + $0x4d8] sm:$0xf]
    %v331 = vld [vmem:[%s1 + $0x4dc] sm:$0xf]
    %v332 = vld [vmem:[%s1 + $0x4e0] sm:$0xf]
    %v333 = vld [vmem:[%s1 + $0x4e4] sm:$0xf]
    %v334 = vld [vmem:[%s1 + $0x4e8] sm:$0xf]
    %v335 = vld [vmem:[%s1 + $0x4ec] sm:$0xf]
    %v336 = vld [vmem:[%s1 + $0x4f0] sm:$0xf]
    %v337 = vld [vmem:[%s1 + $0x4f4] sm:$0xf]
    %v338 = vld [vmem:[%s1 + $0x4f8] sm:$0xf]
    %v339 = vld [vmem:[%s1 + $0x4fc] sm:$0xf]
    %v340 = vld [vmem:[%s1 + $0x500] sm:$0xf]
    %v341 = vld [vmem:[%s1 + $0x504] sm:$0xf]
    %v342 = vld [vmem:[%s1 + $0x508] sm:$0xf]
    %v343 = vld [vmem:[%s1 + $0x50c] sm:$0xf]
    %v344 = vld [vmem:[%s1 + $0x510] sm:$0xf]
    %v345 = vld [vmem:[%s1 + $0x514] sm:$0xf]
    %v346 = vld [vmem:[%s1 + $0x518] sm:$0xf]
    %v347 = vld [vmem:[%s1 + $0x51c] sm:$0xf]
    %v348 = vld [vmem:[%s1 + $0x520] sm:$0xf]
    %v349 = vld [vmem:[%s1 + $0x524] sm:$0xf]
    %v350 = vld [vmem:[%s1 + $0x528] sm:$0xf]
    %v351 = vld [vmem:[%s1 + $0x52c] sm:$0xf]
    %v352 = vld [vmem:[%s1 + $0x530] sm:$0xf]
    %v353 = vld [vmem:[%s1 + $0x534] sm:$0xf]
    %v354 = vld [vmem:[%s1 + $0x538] sm:$0xf]
    %v355 = vld [vmem:[%s1 + $0x53c] sm:$0xf]
    %v356 = vld [vmem:[%s1 + $0x540] sm:$0xf]
    %v357 = vld [vmem:[%s1 + $0x544] sm:$0xf]
    %v358 = vld [vmem:[%s1 + $0x548] sm:$0xf]
    %v359 = vld [vmem:[%s1 + $0x54c] sm:$0xf]
    %v360 = vld [vmem:[%s1 + $0x550] sm:$0xf]
    %v361 = vld [vmem:[%s1 + $0x554] sm:$0xf]
    %v362 = vld [vmem:[%s1 + $0x558] sm:$0xf]
    %v363 = vld [vmem:[%s1 + $0x55c] sm:$0xf]
    %v364 = vld [vmem:[%s1 + $0x560] sm:$0xf]
    %v365 = vld [vmem:[%s1 + $0x564] sm:$0xf]
    %v366 = vld [vmem:[%s1 + $0x568] sm:$0xf]
    %v367 = vld [vmem:[%s1 + $0x56c] sm:$0xf]
    %v368 = vld [vmem:[%s1 + $0x570] sm:$0xf]
    %v369 = vld [vmem:[%s1 + $0x574] sm:$0xf]
    %v370 = vld [vmem:[%s1 + $0x578] sm:$0xf]
    %v371 = vld [vmem:[%s1 + $0x57c] sm:$0xf]
    %v372 = vld [vmem:[%s1 + $0x580] sm:$0xf]
    %v373 = vld [vmem:[%s1 + $0x584] sm:$0xf]
    %v374 = vld [vmem:[%s1 + $0x588] sm:$0xf]
    %v375 = vld [vmem:[%s1 + $0x58c] sm:$0xf]
    %v376 = vld [vmem:[%s1 + $0x590] sm:$0xf]
    %v377 = vld [vmem:[%s1 + $0x594] sm:$0xf]
    %v378 = vld [vmem:[%s1 + $0x598] sm:$0xf]
    %v379 = vld [vmem:[%s1 + $0x59c] sm:$0xf]
    %v380 = vld [vmem:[%s1 + $0x5a0] sm:$0xf]
    %v381 = vld [vmem:[%s1 + $0x5a4] sm:$0xf]
    %v382 = vld [vmem:[%s1 + $0x5a8] sm:$0xf]
    %v383 = vld [vmem:[%s1 + $0x5ac] sm:$0xf]
    %v384 = vld [vmem:[%s1 + $0x5b0] sm:$0xf]
    %v385 = vld [vmem:[%s1 + $0x5b4] sm:$0xf]
    %v386 = vld [vmem:[%s1 + $0x5b8] sm:$0xf]
    %v387 = vld [vmem:[%s1 + $0x5bc] sm:$0xf]
    %v388 = vld [vmem:[%s1 + $0x5c0] sm:$0xf]
    %v389 = vld [vmem:[%s1 + $0x5c4] sm:$0xf]
    %v390 = vld [vmem:[%s1 + $0x5c8] sm:$0xf]
    %v391 = vld [vmem:[%s1 + $0x5cc] sm:$0xf]
    %v392 = vld [vmem:[%s1 + $0x5d0] sm:$0xf]
    %v393 = vld [vmem:[%s1 + $0x5d4] sm:$0xf]
    %v394 = vld [vmem:[%s1 + $0x5d8] sm:$0xf]
    %v395 = vld [vmem:[%s1 + $0x5dc] sm:$0xf]
    %v396 = vld [vmem:[%s1 + $0x5e0] sm:$0xf]
    %v397 = vld [vmem:[%s1 + $0x5e4] sm:$0xf]
    %v398 = vld [vmem:[%s1 + $0x5e8] sm:$0xf]
    %v399 = vld [vmem:[%s1 + $0x5ec] sm:$0xf]
    %v400 = vld [vmem:[%s1 + $0x5f0] sm:$0xf]
    %v401 = vld [vmem:[%s1 + $0x5f4] sm:$0xf]
    %v402 = vld [vmem:[%s1 + $0x5f8] sm:$0xf]
    %v403 = vld [vmem:[%s1 + $0x5fc] sm:$0xf]
    %v404 = vld [vmem:[%s1 + $0x600] sm:$0xf]
    %v405 = vld [vmem:[%s1 + $0x604] sm:$0xf]
    %v406 = vld [vmem:[%s1 + $0x608] sm:$0xf]
    %v407 = vld [vmem:[%s1 + $0x60c] sm:$0xf]
    %v408 = vld [vmem:[%s1 + $0x610] sm:$0xf]
    %v409 = vld [vmem:[%s1 + $0x614] sm:$0xf]
    %v410 = vld [vmem:[%s1 + $0x618] sm:$0xf]
    %v411 = vld [vmem:[%s1 + $0x61c] sm:$0xf]
    %v412 = vld [vmem:[%s1 + $0x620] sm:$0xf]
    %v413 = vld [vmem:[%s1 + $0x624] sm:$0xf]
    %v414 = vld [vmem:[%s1 + $0x628] sm:$0xf]
    %v415 = vld [vmem:[%s1 + $0x62c] sm:$0xf]
    %v416 = vld [vmem:[%s1 + $0x630] sm:$0xf]
    %v417 = vld [vmem:[%s1 + $0x634] sm:$0xf]
    %v418 = vld [vmem:[%s1 + $0x638] sm:$0xf]
    %v419 = vld [vmem:[%s1 + $0x63c] sm:$0xf]
    %v420 = vld [vmem:[%s1 + $0x640] sm:$0xf]
    %v421 = vld [vmem:[%s1 + $0x644] sm:$0xf]
    %v422 = vld [vmem:[%s1 + $0x648] sm:$0xf]
    %v423 = vld [vmem:[%s1 + $0x64c] sm:$0xf]
    %v424 = vld [vmem:[%s1 + $0x650] sm:$0xf]
    %v425 = vld [vmem:[%s1 + $0x654] sm:$0xf]
    %v426 = vld [vmem:[%s1 + $0x658] sm:$0xf]
    %v427 = vld [vmem:[%s1 + $0x65c] sm:$0xf]
    %v428 = vld [vmem:[%s1 + $0x660] sm:$0xf]
    %v429 = vld [vmem:[%s1 + $0x664] sm:$0xf]
    %v430 = vld [vmem:[%s1 + $0x668] sm:$0xf]
    %v431 = vld [vmem:[%s1 + $0x66c] sm:$0xf]
    %v432 = vld [vmem:[%s1 + $0x670] sm:$0xf]
    %v433 = vld [vmem:[%s1 + $0x674] sm:$0xf]
    %v434 = vld [vmem:[%s1 + $0x678] sm:$0xf]
    %v435 = vld [vmem:[%s1 + $0x67c] sm:$0xf]
    %v436 = vld [vmem:[%s1 + $0x680] sm:$0xf]
    %v437 = vld [vmem:[%s1 + $0x684] sm:$0xf]
    %v438 = vld [vmem:[%s1 + $0x688] sm:$0xf]
    %v439 = vld [vmem:[%s1 + $0x68c] sm:$0xf]
    %v440 = vld [vmem:[%s1 + $0x690] sm:$0xf]
    %v441 = vld [vmem:[%s1 + $0x694] sm:$0xf]
    %v442 = vld [vmem:[%s1 + $0x698] sm:$0xf]
    %v443 = vld [vmem:[%s1 + $0x69c] sm:$0xf]
    %v444 = vld [vmem:[%s1 + $0x6a0] sm:$0xf]
    %v445 = vld [vmem:[%s1 + $0x6a4] sm:$0xf]
    %v446 = vld [vmem:[%s1 + $0x6a8] sm:$0xf]
    %v447 = vld [vmem:[%s1 + $0x6ac] sm:$0xf]
    %v448 = vld [vmem:[%s1 + $0x6b0] sm:$0xf]
    %v449 = vld [vmem:[%s1 + $0x6b4] sm:$0xf]
    %v450 = vld [vmem:[%s1 + $0x6b8] sm:$0xf]
    %v451 = vld [vmem:[%s1 + $0x6bc] sm:$0xf]
    %v452 = vld [vmem:[%s1 + $0x6c0] sm:$0xf]
    %v453 = vld [vmem:[%s1 + $0x6c4] sm:$0xf]
    %v454 = vld [vmem:[%s1 + $0x6c8] sm:$0xf]
    %v455 = vld [vmem:[%s1 + $0x6cc] sm:$0xf]
    %v456 = vld [vmem:[%s1 + $0x6d0] sm:$0xf]
    %v457 = vld [vmem:[%s1 + $0x6d4] sm:$0xf]
    %v458 = vld [vmem:[%s1 + $0x6d8] sm:$0xf]
    %v459 = vld [vmem:[%s1 + $0x6dc] sm:$0xf]
    %v460 = vld [vmem:[%s1 + $0x6e0] sm:$0xf]
    %v461 = vld [vmem:[%s1 + $0x6e4] sm:$0xf]
    %v462 = vld [vmem:[%s1 + $0x6e8] sm:$0xf]
    %v463 = vld [vmem:[%s1 + $0x6ec] sm:$0xf]
    %v464 = vld [vmem:[%s1 + $0x6f0] sm:$0xf]
    %v465 = vld [vmem:[%s1 + $0x6f4] sm:$0xf]
    %v466 = vld [vmem:[%s1 + $0x6f8] sm:$0xf]
    %v467 = vld [vmem:[%s1 + $0x6fc] sm:$0xf]
    %v468 = vld [vmem:[%s1 + $0x700] sm:$0xf]
    %v469 = vld [vmem:[%s1 + $0x704] sm:$0xf]
    %v470 = vld [vmem:[%s1 + $0x708] sm:$0xf]
    %v471 = vld [vmem:[%s1 + $0x70c] sm:$0xf]
    %v472 = vld [vmem:[%s1 + $0x710] sm:$0xf]
    %v473 = vld [vmem:[%s1 + $0x714] sm:$0xf]
    %v474 = vld [vmem:[%s1 + $0x718] sm:$0xf]
    %v475 = vld [vmem:[%s1 + $0x71c] sm:$0xf]
    %v476 = vld [vmem:[%s1 + $0x720] sm:$0xf]
    %v477 = vld [vmem:[%s1 + $0x724] sm:$0xf]
    %v478 = vld [vmem:[%s1 + $0x728] sm:$0xf]
    %v479 = vld [vmem:[%s1 + $0x72c] sm:$0xf]
    %v480 = vld [vmem:[%s1 + $0x730] sm:$0xf]
    %v481 = vld [vmem:[%s1 + $0x734] sm:$0xf]
    %v482 = vld [vmem:[%s1 + $0x738] sm:$0xf]
    %v483 = vld [vmem:[%s1 + $0x73c] sm:$0xf]
    %v484 = vld [vmem:[%s1 + $0x740] sm:$0xf]
    %v485 = vld [vmem:[%s1 + $0x744] sm:$0xf]
    %v486 = vld [vmem:[%s1 + $0x748] sm:$0xf]
    %v487 = vld [vmem:[%s1 + $0x74c] sm:$0xf]
    %v488 = vld [vmem:[%s1 + $0x750] sm:$0xf]
    %v489 = vld [vmem:[%s1 + $0x754] sm:$0xf]
    %v490 = vld [vmem:[%s1 + $0x758] sm:$0xf]
    %v491 = vld [vmem:[%s1 + $0x75c] sm:$0xf]
    %v492 = vld [vmem:[%s1 + $0x760] sm:$0xf]
    %v493 = vld [vmem:[%s1 + $0x764] sm:$0xf]
    %v494 = vld [vmem:[%s1 + $0x768] sm:$0xf]
    %v495 = vld [vmem:[%s1 + $0x76c] sm:$0xf]
    %v496 = vld [vmem:[%s1 + $0x770] sm:$0xf]
    %v497 = vld [vmem:[%s1 + $0x774] sm:$0xf]
    %v498 = vld [vmem:[%s1 + $0x778] sm:$0xf]
    %v499 = vld [vmem:[%s1 + $0x77c] sm:$0xf]
    %v500 = vld [vmem:[%s1 + $0x780] sm:$0xf]
    %v501 = vld [vmem:[%s1 + $0x784] sm:$0xf]
    %v502 = vld [vmem:[%s1 + $0x788] sm:$0xf]
    %v503 = vld [vmem:[%s1 + $0x78c] sm:$0xf]
    %v504 = vld [vmem:[%s1 + $0x790] sm:$0xf]
    %v505 = vld [vmem:[%s1 + $0x794] sm:$0xf]
    %v506 = vld [vmem:[%s1 + $0x798] sm:$0xf]
    %v507 = vld [vmem:[%s1 + $0x79c] sm:$0xf]
    %v508 = vld [vmem:[%s1 + $0x7a0] sm:$0xf]
    %v509 = vld [vmem:[%s1 + $0x7a4] sm:$0xf]
    %v510 = vld [vmem:[%s1 + $0x7a8] sm:$0xf]
    %v511 = vld [vmem:[%s1 + $0x7ac] sm:$0xf]
    %v512 = vld [vmem:[%s1 + $0x7b0] sm:$0xf]
    %v513 = vld [vmem:[%s1 + $0x7b4] sm:$0xf]
    %v514 = vld [vmem:[%s1 + $0x7b8] sm:$0xf]
    %v515 = vld [vmem:[%s1 + $0x7bc] sm:$0xf]
    %v516 = vld [vmem:[%s1 + $0x7c0] sm:$0xf]
    %v517 = vld [vmem:[%s1 + $0x7c4] sm:$0xf]
    %v518 = vld [vmem:[%s1 + $0x7c8] sm:$0xf]
    %v519 = vld [vmem:[%s1 + $0x7cc] sm:$0xf]
    %v520 = vld [vmem:[%s1 + $0x7d0] sm:$0xf]
    %v521 = vld [vmem:[%s1 + $0x7d4] sm:$0xf]
    %v522 = vld [vmem:[%s1 + $0x7d8] sm:$0xf]
    %v523 = vld [vmem:[%s1 + $0x7dc] sm:$0xf]
    %v524 = vld [vmem:[%s1 + $0x7e0] sm:$0xf]
    %v525 = vld [vmem:[%s1 + $0x7e4] sm:$0xf]
    %v526 = vld [vmem:[%s1 + $0x7e8] sm:$0xf]
    %v527 = vld [vmem:[%s1 + $0x7ec] sm:$0xf]
    %v528 = vld [vmem:[%s1 + $0x7f0] sm:$0xf]
    %v529 = vld [vmem:[%s1 + $0x7f4] sm:$0xf]
    %v530 = vld [vmem:[%s1 + $0x7f8] sm:$0xf]
    %v531 = vld [vmem:[%s1 + $0x7fc] sm:$0xf]
    %v532 = vld [vmem:[%s2] sm:$0x1]
    %v534 = vlaneseq
    %v535 = vshrl.u32 %v534, 7
    %v536 = vsub.s32 0, %v535
    %v537 = vrot.slane %v532, %v536
    %v543 = vcombine.high %v16, %v16
    %v545 = vunpack.c.l.s4 1966171168
    %v546 = vunpack.c.0.s8 %v545
    %v547 = vlaneseq
    %v548 = vshrl.u32 %v547, 7
    %v549 = vsub.s32 %v546, %v548
    %v550 = vrot.slane %v16, %v549
    %v552 = vunpack.c.l.s4 1966171168
    %v553 = vunpack.c.0.s8 %v552
    %v554 = vlaneseq
    %v555 = vshrl.u32 %v554, 7
    %v556 = vsub.s32 %v553, %v555
    %v557 = vrot.slane %v543, %v556
    %v558 = vcombine.high %v550, %v550
    %v559 = vcombine.high %v557, %v557
    %v561 = vunpack.c.l.s4 1966171168
    %v562 = vunpack.c.0.s8 %v561
    %v563 = vlaneseq
    %v564 = vshrl.u32 %v563, 7
    %v565 = vsub.s32 %v562, %v564
    %v566 = vrot.slane %v550, %v565
    %v568 = vunpack.c.l.s4 1966171168
    %v569 = vunpack.c.0.s8 %v568
    %v570 = vlaneseq
    %v571 = vshrl.u32 %v570, 7
    %v572 = vsub.s32 %v569, %v571
    %v573 = vrot.slane %v557, %v572
    %v575 = vunpack.c.l.s4 1966171168
    %v576 = vunpack.c.0.s8 %v575
    %v577 = vlaneseq
    %v578 = vshrl.u32 %v577, 7
    %v579 = vsub.s32 %v576, %v578
    %v580 = vrot.slane %v558, %v579
    %v582 = vunpack.c.l.s4 1966171168
    %v583 = vunpack.c.0.s8 %v582
    %v584 = vlaneseq
    %v585 = vshrl.u32 %v584, 7
    %v586 = vsub.s32 %v583, %v585
    %v587 = vrot.slane %v559, %v586
    %v588 = vcombine.high %v566, %v566
    %v589 = vcombine.high %v573, %v573
    %v590 = vcombine.high %v580, %v580
    %v591 = vcombine.high %v587, %v587
    %v592 = vcombine.high %v17, %v17
    %v594 = vunpack.c.l.s4 1966171168
    %v595 = vunpack.c.0.s8 %v594
    %v596 = vlaneseq
    %v597 = vshrl.u32 %v596, 7
    %v598 = vsub.s32 %v595, %v597
    %v599 = vrot.slane %v17, %v598
    %v601 = vunpack.c.l.s4 1966171168
    %v602 = vunpack.c.0.s8 %v601
    %v603 = vlaneseq
    %v604 = vshrl.u32 %v603, 7
    %v605 = vsub.s32 %v602, %v604
    %v606 = vrot.slane %v592, %v605
    %v607 = vcombine.high %v599, %v599
    %v608 = vcombine.high %v606, %v606
    %v610 = vunpack.c.l.s4 1966171168
    %v611 = vunpack.c.0.s8 %v610
    %v612 = vlaneseq
    %v613 = vshrl.u32 %v612, 7
    %v614 = vsub.s32 %v611, %v613
    %v615 = vrot.slane %v599, %v614
    %v617 = vunpack.c.l.s4 1966171168
    %v618 = vunpack.c.0.s8 %v617
    %v619 = vlaneseq
    %v620 = vshrl.u32 %v619, 7
    %v621 = vsub.s32 %v618, %v620
    %v622 = vrot.slane %v606, %v621
    %v624 = vunpack.c.l.s4 1966171168
    %v625 = vunpack.c.0.s8 %v624
    %v626 = vlaneseq
    %v627 = vshrl.u32 %v626, 7
    %v628 = vsub.s32 %v625, %v627
    %v629 = vrot.slane %v607, %v628
    %v631 = vunpack.c.l.s4 1966171168
    %v632 = vunpack.c.0.s8 %v631
    %v633 = vlaneseq
    %v634 = vshrl.u32 %v633, 7
    %v635 = vsub.s32 %v632, %v634
    %v636 = vrot.slane %v608, %v635
    %v637 = vcombine.high %v615, %v615
    %v638 = vcombine.high %v622, %v622
    %v639 = vcombine.high %v629, %v629
    %v640 = vcombine.high %v636, %v636
    %v641 = vcombine.high %v18, %v18
    %v643 = vunpack.c.l.s4 1966171168
    %v644 = vunpack.c.0.s8 %v643
    %v645 = vlaneseq
    %v646 = vshrl.u32 %v645, 7
    %v647 = vsub.s32 %v644, %v646
    %v648 = vrot.slane %v18, %v647
    %v650 = vunpack.c.l.s4 1966171168
    %v651 = vunpack.c.0.s8 %v650
    %v652 = vlaneseq
    %v653 = vshrl.u32 %v652, 7
    %v654 = vsub.s32 %v651, %v653
    %v655 = vrot.slane %v641, %v654
    %v656 = vcombine.high %v648, %v648
    %v657 = vcombine.high %v655, %v655
    %v659 = vunpack.c.l.s4 1966171168
    %v660 = vunpack.c.0.s8 %v659
    %v661 = vlaneseq
    %v662 = vshrl.u32 %v661, 7
    %v663 = vsub.s32 %v660, %v662
    %v664 = vrot.slane %v648, %v663
    %v666 = vunpack.c.l.s4 1966171168
    %v667 = vunpack.c.0.s8 %v666
    %v668 = vlaneseq
    %v669 = vshrl.u32 %v668, 7
    %v670 = vsub.s32 %v667, %v669
    %v671 = vrot.slane %v655, %v670
    %v673 = vunpack.c.l.s4 1966171168
    %v674 = vunpack.c.0.s8 %v673
    %v675 = vlaneseq
    %v676 = vshrl.u32 %v675, 7
    %v677 = vsub.s32 %v674, %v676
    %v678 = vrot.slane %v656, %v677
    %v680 = vunpack.c.l.s4 1966171168
    %v681 = vunpack.c.0.s8 %v680
    %v682 = vlaneseq
    %v683 = vshrl.u32 %v682, 7
    %v684 = vsub.s32 %v681, %v683
    %v685 = vrot.slane %v657, %v684
    %v686 = vcombine.high %v664, %v664
    %v687 = vcombine.high %v671, %v671
    %v688 = vcombine.high %v678, %v678
    %v689 = vcombine.high %v685, %v685
    %v690 = vcombine.high %v19, %v19
    %v692 = vunpack.c.l.s4 1966171168
    %v693 = vunpack.c.0.s8 %v692
    %v694 = vlaneseq
    %v695 = vshrl.u32 %v694, 7
    %v696 = vsub.s32 %v693, %v695
    %v697 = vrot.slane %v19, %v696
    %v699 = vunpack.c.l.s4 1966171168
    %v700 = vunpack.c.0.s8 %v699
    %v701 = vlaneseq
    %v702 = vshrl.u32 %v701, 7
    %v703 = vsub.s32 %v700, %v702
    %v704 = vrot.slane %v690, %v703
    %v705 = vcombine.high %v697, %v697
    %v706 = vcombine.high %v704, %v704
    %v708 = vunpack.c.l.s4 1966171168
    %v709 = vunpack.c.0.s8 %v708
    %v710 = vlaneseq
    %v711 = vshrl.u32 %v710, 7
    %v712 = vsub.s32 %v709, %v711
    %v713 = vrot.slane %v697, %v712
    %v715 = vunpack.c.l.s4 1966171168
    %v716 = vunpack.c.0.s8 %v715
    %v717 = vlaneseq
    %v718 = vshrl.u32 %v717, 7
    %v719 = vsub.s32 %v716, %v718
    %v720 = vrot.slane %v704, %v719
    %v722 = vunpack.c.l.s4 1966171168
    %v723 = vunpack.c.0.s8 %v722
    %v724 = vlaneseq
    %v725 = vshrl.u32 %v724, 7
    %v726 = vsub.s32 %v723, %v725
    %v727 = vrot.slane %v705, %v726
    %v729 = vunpack.c.l.s4 1966171168
    %v730 = vunpack.c.0.s8 %v729
    %v731 = vlaneseq
    %v732 = vshrl.u32 %v731, 7
    %v733 = vsub.s32 %v730, %v732
    %v734 = vrot.slane %v706, %v733
    %v735 = vcombine.high %v713, %v713
    %v736 = vcombine.high %v720, %v720
    %v737 = vcombine.high %v727, %v727
    %v738 = vcombine.high %v734, %v734
    %v1283 = vunpack.c.l.b16 %v20
    %v1284 = vunpack.c.l.b16 %v21
    %v1285 = vunpack.c.l.b16 %v22
    %v1286 = vunpack.c.l.b16 %v23
    %v1287 = vunpack.c.l.b16 %v24
    %v1288 = vunpack.c.l.b16 %v25
    %v1289 = vunpack.c.l.b16 %v26
    %v1290 = vunpack.c.l.b16 %v27
    %v1291 = vunpack.c.l.b16 %v28
    %v1292 = vunpack.c.l.b16 %v29
    %v1293 = vunpack.c.l.b16 %v30
    %v1294 = vunpack.c.l.b16 %v31
    %v1295 = vunpack.c.l.b16 %v32
    %v1296 = vunpack.c.l.b16 %v33
    %v1297 = vunpack.c.l.b16 %v34
    %v1298 = vunpack.c.l.b16 %v35
    %v1299 = vunpack.c.l.b16 %v36
    %v1300 = vunpack.c.l.b16 %v37
    %v1301 = vunpack.c.l.b16 %v38
    %v1302 = vunpack.c.l.b16 %v39
    %v1303 = vunpack.c.l.b16 %v40
    %v1304 = vunpack.c.l.b16 %v41
    %v1305 = vunpack.c.l.b16 %v42
    %v1306 = vunpack.c.l.b16 %v43
    %v1307 = vunpack.c.l.b16 %v44
    %v1308 = vunpack.c.l.b16 %v45
    %v1309 = vunpack.c.l.b16 %v46
    %v1310 = vunpack.c.l.b16 %v47
    %v1311 = vunpack.c.l.b16 %v48
    %v1312 = vunpack.c.l.b16 %v49
    %v1313 = vunpack.c.l.b16 %v50
    %v1314 = vunpack.c.l.b16 %v51
    %v1315 = vunpack.c.l.b16 %v52
    %v1316 = vunpack.c.l.b16 %v53
    %v1317 = vunpack.c.l.b16 %v54
    %v1318 = vunpack.c.l.b16 %v55
    %v1319 = vunpack.c.l.b16 %v56
    %v1320 = vunpack.c.l.b16 %v57
    %v1321 = vunpack.c.l.b16 %v58
    %v1322 = vunpack.c.l.b16 %v59
    %v1323 = vunpack.c.l.b16 %v60
    %v1324 = vunpack.c.l.b16 %v61
    %v1325 = vunpack.c.l.b16 %v62
    %v1326 = vunpack.c.l.b16 %v63
    %v1327 = vunpack.c.l.b16 %v64
    %v1328 = vunpack.c.l.b16 %v65
    %v1329 = vunpack.c.l.b16 %v66
    %v1330 = vunpack.c.l.b16 %v67
    %v1331 = vunpack.c.l.b16 %v68
    %v1332 = vunpack.c.l.b16 %v69
    %v1333 = vunpack.c.l.b16 %v70
    %v1334 = vunpack.c.l.b16 %v71
    %v1335 = vunpack.c.l.b16 %v72
    %v1336 = vunpack.c.l.b16 %v73
    %v1337 = vunpack.c.l.b16 %v74
    %v1338 = vunpack.c.l.b16 %v75
    %v1339 = vunpack.c.l.b16 %v76
    %v1340 = vunpack.c.l.b16 %v77
    %v1341 = vunpack.c.l.b16 %v78
    %v1342 = vunpack.c.l.b16 %v79
    %v1343 = vunpack.c.l.b16 %v80
    %v1344 = vunpack.c.l.b16 %v81
    %v1345 = vunpack.c.l.b16 %v82
    %v1346 = vunpack.c.l.b16 %v83
    %v1347 = vunpack.c.l.b16 %v84
    %v1348 = vunpack.c.l.b16 %v85
    %v1349 = vunpack.c.l.b16 %v86
    %v1350 = vunpack.c.l.b16 %v87
    %v1351 = vunpack.c.l.b16 %v88
    %v1352 = vunpack.c.l.b16 %v89
    %v1353 = vunpack.c.l.b16 %v90
    %v1354 = vunpack.c.l.b16 %v91
    %v1355 = vunpack.c.l.b16 %v92
    %v1356 = vunpack.c.l.b16 %v93
    %v1357 = vunpack.c.l.b16 %v94
    %v1358 = vunpack.c.l.b16 %v95
    %v1359 = vunpack.c.l.b16 %v96
    %v1360 = vunpack.c.l.b16 %v97
    %v1361 = vunpack.c.l.b16 %v98
    %v1362 = vunpack.c.l.b16 %v99
    %v1363 = vunpack.c.l.b16 %v100
    %v1364 = vunpack.c.l.b16 %v101
    %v1365 = vunpack.c.l.b16 %v102
    %v1366 = vunpack.c.l.b16 %v103
    %v1367 = vunpack.c.l.b16 %v104
    %v1368 = vunpack.c.l.b16 %v105
    %v1369 = vunpack.c.l.b16 %v106
    %v1370 = vunpack.c.l.b16 %v107
    %v1371 = vunpack.c.l.b16 %v108
    %v1372 = vunpack.c.l.b16 %v109
    %v1373 = vunpack.c.l.b16 %v110
    %v1374 = vunpack.c.l.b16 %v111
    %v1375 = vunpack.c.l.b16 %v112
    %v1376 = vunpack.c.l.b16 %v113
    %v1377 = vunpack.c.l.b16 %v114
    %v1378 = vunpack.c.l.b16 %v115
    %v1379 = vunpack.c.l.b16 %v116
    %v1380 = vunpack.c.l.b16 %v117
    %v1381 = vunpack.c.l.b16 %v118
    %v1382 = vunpack.c.l.b16 %v119
    %v1383 = vunpack.c.l.b16 %v120
    %v1384 = vunpack.c.l.b16 %v121
    %v1385 = vunpack.c.l.b16 %v122
    %v1386 = vunpack.c.l.b16 %v123
    %v1387 = vunpack.c.l.b16 %v124
    %v1388 = vunpack.c.l.b16 %v125
    %v1389 = vunpack.c.l.b16 %v126
    %v1390 = vunpack.c.l.b16 %v127
    %v1391 = vunpack.c.l.b16 %v128
    %v1392 = vunpack.c.l.b16 %v129
    %v1393 = vunpack.c.l.b16 %v130
    %v1394 = vunpack.c.l.b16 %v131
    %v1395 = vunpack.c.l.b16 %v132
    %v1396 = vunpack.c.l.b16 %v133
    %v1397 = vunpack.c.l.b16 %v134
    %v1398 = vunpack.c.l.b16 %v135
    %v1399 = vunpack.c.l.b16 %v136
    %v1400 = vunpack.c.l.b16 %v137
    %v1401 = vunpack.c.l.b16 %v138
    %v1402 = vunpack.c.l.b16 %v139
    %v1403 = vunpack.c.l.b16 %v140
    %v1404 = vunpack.c.l.b16 %v141
    %v1405 = vunpack.c.l.b16 %v142
    %v1406 = vunpack.c.l.b16 %v143
    %v1407 = vunpack.c.l.b16 %v144
    %v1408 = vunpack.c.l.b16 %v145
    %v1409 = vunpack.c.l.b16 %v146
    %v1410 = vunpack.c.l.b16 %v147
    %v1411 = vunpack.c.l.b16 %v148
    %v1412 = vunpack.c.l.b16 %v149
    %v1413 = vunpack.c.l.b16 %v150
    %v1414 = vunpack.c.l.b16 %v151
    %v1415 = vunpack.c.l.b16 %v152
    %v1416 = vunpack.c.l.b16 %v153
    %v1417 = vunpack.c.l.b16 %v154
    %v1418 = vunpack.c.l.b16 %v155
    %v1419 = vunpack.c.l.b16 %v156
    %v1420 = vunpack.c.l.b16 %v157
    %v1421 = vunpack.c.l.b16 %v158
    %v1422 = vunpack.c.l.b16 %v159
    %v1423 = vunpack.c.l.b16 %v160
    %v1424 = vunpack.c.l.b16 %v161
    %v1425 = vunpack.c.l.b16 %v162
    %v1426 = vunpack.c.l.b16 %v163
    %v1427 = vunpack.c.l.b16 %v164
    %v1428 = vunpack.c.l.b16 %v165
    %v1429 = vunpack.c.l.b16 %v166
    %v1430 = vunpack.c.l.b16 %v167
    %v1431 = vunpack.c.l.b16 %v168
    %v1432 = vunpack.c.l.b16 %v169
    %v1433 = vunpack.c.l.b16 %v170
    %v1434 = vunpack.c.l.b16 %v171
    %v1435 = vunpack.c.l.b16 %v172
    %v1436 = vunpack.c.l.b16 %v173
    %v1437 = vunpack.c.l.b16 %v174
    %v1438 = vunpack.c.l.b16 %v175
    %v1439 = vunpack.c.l.b16 %v176
    %v1440 = vunpack.c.l.b16 %v177
    %v1441 = vunpack.c.l.b16 %v178
    %v1442 = vunpack.c.l.b16 %v179
    %v1443 = vunpack.c.l.b16 %v180
    %v1444 = vunpack.c.l.b16 %v181
    %v1445 = vunpack.c.l.b16 %v182
    %v1446 = vunpack.c.l.b16 %v183
    %v1447 = vunpack.c.l.b16 %v184
    %v1448 = vunpack.c.l.b16 %v185
    %v1449 = vunpack.c.l.b16 %v186
    %v1450 = vunpack.c.l.b16 %v187
    %v1451 = vunpack.c.l.b16 %v188
    %v1452 = vunpack.c.l.b16 %v189
    %v1453 = vunpack.c.l.b16 %v190
    %v1454 = vunpack.c.l.b16 %v191
    %v1455 = vunpack.c.l.b16 %v192
    %v1456 = vunpack.c.l.b16 %v193
    %v1457 = vunpack.c.l.b16 %v194
    %v1458 = vunpack.c.l.b16 %v195
    %v1459 = vunpack.c.l.b16 %v196
    %v1460 = vunpack.c.l.b16 %v197
    %v1461 = vunpack.c.l.b16 %v198
    %v1462 = vunpack.c.l.b16 %v199
    %v1463 = vunpack.c.l.b16 %v200
    %v1464 = vunpack.c.l.b16 %v201
    %v1465 = vunpack.c.l.b16 %v202
    %v1466 = vunpack.c.l.b16 %v203
    %v1467 = vunpack.c.l.b16 %v204
    %v1468 = vunpack.c.l.b16 %v205
    %v1469 = vunpack.c.l.b16 %v206
    %v1470 = vunpack.c.l.b16 %v207
    %v1471 = vunpack.c.l.b16 %v208
    %v1472 = vunpack.c.l.b16 %v209
    %v1473 = vunpack.c.l.b16 %v210
    %v1474 = vunpack.c.l.b16 %v211
    %v1475 = vunpack.c.l.b16 %v212
    %v1476 = vunpack.c.l.b16 %v213
    %v1477 = vunpack.c.l.b16 %v214
    %v1478 = vunpack.c.l.b16 %v215
    %v1479 = vunpack.c.l.b16 %v216
    %v1480 = vunpack.c.l.b16 %v217
    %v1481 = vunpack.c.l.b16 %v218
    %v1482 = vunpack.c.l.b16 %v219
    %v1483 = vunpack.c.l.b16 %v220
    %v1484 = vunpack.c.l.b16 %v221
    %v1485 = vunpack.c.l.b16 %v222
    %v1486 = vunpack.c.l.b16 %v223
    %v1487 = vunpack.c.l.b16 %v224
    %v1488 = vunpack.c.l.b16 %v225
    %v1489 = vunpack.c.l.b16 %v226
    %v1490 = vunpack.c.l.b16 %v227
    %v1491 = vunpack.c.l.b16 %v228
    %v1492 = vunpack.c.l.b16 %v229
    %v1493 = vunpack.c.l.b16 %v230
    %v1494 = vunpack.c.l.b16 %v231
    %v1495 = vunpack.c.l.b16 %v232
    %v1496 = vunpack.c.l.b16 %v233
    %v1497 = vunpack.c.l.b16 %v234
    %v1498 = vunpack.c.l.b16 %v235
    %v1499 = vunpack.c.l.b16 %v236
    %v1500 = vunpack.c.l.b16 %v237
    %v1501 = vunpack.c.l.b16 %v238
    %v1502 = vunpack.c.l.b16 %v239
    %v1503 = vunpack.c.l.b16 %v240
    %v1504 = vunpack.c.l.b16 %v241
    %v1505 = vunpack.c.l.b16 %v242
    %v1506 = vunpack.c.l.b16 %v243
    %v1507 = vunpack.c.l.b16 %v244
    %v1508 = vunpack.c.l.b16 %v245
    %v1509 = vunpack.c.l.b16 %v246
    %v1510 = vunpack.c.l.b16 %v247
    %v1511 = vunpack.c.l.b16 %v248
    %v1512 = vunpack.c.l.b16 %v249
    %v1513 = vunpack.c.l.b16 %v250
    %v1514 = vunpack.c.l.b16 %v251
    %v1515 = vunpack.c.l.b16 %v252
    %v1516 = vunpack.c.l.b16 %v253
    %v1517 = vunpack.c.l.b16 %v254
    %v1518 = vunpack.c.l.b16 %v255
    %v1519 = vunpack.c.l.b16 %v256
    %v1520 = vunpack.c.l.b16 %v257
    %v1521 = vunpack.c.l.b16 %v258
    %v1522 = vunpack.c.l.b16 %v259
    %v1523 = vunpack.c.l.b16 %v260
    %v1524 = vunpack.c.l.b16 %v261
    %v1525 = vunpack.c.l.b16 %v262
    %v1526 = vunpack.c.l.b16 %v263
    %v1527 = vunpack.c.l.b16 %v264
    %v1528 = vunpack.c.l.b16 %v265
    %v1529 = vunpack.c.l.b16 %v266
    %v1530 = vunpack.c.l.b16 %v267
    %v1531 = vunpack.c.l.b16 %v268
    %v1532 = vunpack.c.l.b16 %v269
    %v1533 = vunpack.c.l.b16 %v270
    %v1534 = vunpack.c.l.b16 %v271
    %v1535 = vunpack.c.l.b16 %v272
    %v1536 = vunpack.c.l.b16 %v273
    %v1537 = vunpack.c.l.b16 %v274
    %v1538 = vunpack.c.l.b16 %v275
    %v1539 = vunpack.c.l.b16 %v276
    %v1540 = vunpack.c.l.b16 %v277
    %v1541 = vunpack.c.l.b16 %v278
    %v1542 = vunpack.c.l.b16 %v279
    %v1543 = vunpack.c.l.b16 %v280
    %v1544 = vunpack.c.l.b16 %v281
    %v1545 = vunpack.c.l.b16 %v282
    %v1546 = vunpack.c.l.b16 %v283
    %v1547 = vunpack.c.l.b16 %v284
    %v1548 = vunpack.c.l.b16 %v285
    %v1549 = vunpack.c.l.b16 %v286
    %v1550 = vunpack.c.l.b16 %v287
    %v1551 = vunpack.c.l.b16 %v288
    %v1552 = vunpack.c.l.b16 %v289
    %v1553 = vunpack.c.l.b16 %v290
    %v1554 = vunpack.c.l.b16 %v291
    %v1555 = vunpack.c.l.b16 %v292
    %v1556 = vunpack.c.l.b16 %v293
    %v1557 = vunpack.c.l.b16 %v294
    %v1558 = vunpack.c.l.b16 %v295
    %v1559 = vunpack.c.l.b16 %v296
    %v1560 = vunpack.c.l.b16 %v297
    %v1561 = vunpack.c.l.b16 %v298
    %v1562 = vunpack.c.l.b16 %v299
    %v1563 = vunpack.c.l.b16 %v300
    %v1564 = vunpack.c.l.b16 %v301
    %v1565 = vunpack.c.l.b16 %v302
    %v1566 = vunpack.c.l.b16 %v303
    %v1567 = vunpack.c.l.b16 %v304
    %v1568 = vunpack.c.l.b16 %v305
    %v1569 = vunpack.c.l.b16 %v306
    %v1570 = vunpack.c.l.b16 %v307
    %v1571 = vunpack.c.l.b16 %v308
    %v1572 = vunpack.c.l.b16 %v309
    %v1573 = vunpack.c.l.b16 %v310
    %v1574 = vunpack.c.l.b16 %v311
    %v1575 = vunpack.c.l.b16 %v312
    %v1576 = vunpack.c.l.b16 %v313
    %v1577 = vunpack.c.l.b16 %v314
    %v1578 = vunpack.c.l.b16 %v315
    %v1579 = vunpack.c.l.b16 %v316
    %v1580 = vunpack.c.l.b16 %v317
    %v1581 = vunpack.c.l.b16 %v318
    %v1582 = vunpack.c.l.b16 %v319
    %v1583 = vunpack.c.l.b16 %v320
    %v1584 = vunpack.c.l.b16 %v321
    %v1585 = vunpack.c.l.b16 %v322
    %v1586 = vunpack.c.l.b16 %v323
    %v1587 = vunpack.c.l.b16 %v324
    %v1588 = vunpack.c.l.b16 %v325
    %v1589 = vunpack.c.l.b16 %v326
    %v1590 = vunpack.c.l.b16 %v327
    %v1591 = vunpack.c.l.b16 %v328
    %v1592 = vunpack.c.l.b16 %v329
    %v1593 = vunpack.c.l.b16 %v330
    %v1594 = vunpack.c.l.b16 %v331
    %v1595 = vunpack.c.l.b16 %v332
    %v1596 = vunpack.c.l.b16 %v333
    %v1597 = vunpack.c.l.b16 %v334
    %v1598 = vunpack.c.l.b16 %v335
    %v1599 = vunpack.c.l.b16 %v336
    %v1600 = vunpack.c.l.b16 %v337
    %v1601 = vunpack.c.l.b16 %v338
    %v1602 = vunpack.c.l.b16 %v339
    %v1603 = vunpack.c.l.b16 %v340
    %v1604 = vunpack.c.l.b16 %v341
    %v1605 = vunpack.c.l.b16 %v342
    %v1606 = vunpack.c.l.b16 %v343
    %v1607 = vunpack.c.l.b16 %v344
    %v1608 = vunpack.c.l.b16 %v345
    %v1609 = vunpack.c.l.b16 %v346
    %v1610 = vunpack.c.l.b16 %v347
    %v1611 = vunpack.c.l.b16 %v348
    %v1612 = vunpack.c.l.b16 %v349
    %v1613 = vunpack.c.l.b16 %v350
    %v1614 = vunpack.c.l.b16 %v351
    %v1615 = vunpack.c.l.b16 %v352
    %v1616 = vunpack.c.l.b16 %v353
    %v1617 = vunpack.c.l.b16 %v354
    %v1618 = vunpack.c.l.b16 %v355
    %v1619 = vunpack.c.l.b16 %v356
    %v1620 = vunpack.c.l.b16 %v357
    %v1621 = vunpack.c.l.b16 %v358
    %v1622 = vunpack.c.l.b16 %v359
    %v1623 = vunpack.c.l.b16 %v360
    %v1624 = vunpack.c.l.b16 %v361
    %v1625 = vunpack.c.l.b16 %v362
    %v1626 = vunpack.c.l.b16 %v363
    %v1627 = vunpack.c.l.b16 %v364
    %v1628 = vunpack.c.l.b16 %v365
    %v1629 = vunpack.c.l.b16 %v366
    %v1630 = vunpack.c.l.b16 %v367
    %v1631 = vunpack.c.l.b16 %v368
    %v1632 = vunpack.c.l.b16 %v369
    %v1633 = vunpack.c.l.b16 %v370
    %v1634 = vunpack.c.l.b16 %v371
    %v1635 = vunpack.c.l.b16 %v372
    %v1636 = vunpack.c.l.b16 %v373
    %v1637 = vunpack.c.l.b16 %v374
    %v1638 = vunpack.c.l.b16 %v375
    %v1639 = vunpack.c.l.b16 %v376
    %v1640 = vunpack.c.l.b16 %v377
    %v1641 = vunpack.c.l.b16 %v378
    %v1642 = vunpack.c.l.b16 %v379
    %v1643 = vunpack.c.l.b16 %v380
    %v1644 = vunpack.c.l.b16 %v381
    %v1645 = vunpack.c.l.b16 %v382
    %v1646 = vunpack.c.l.b16 %v383
    %v1647 = vunpack.c.l.b16 %v384
    %v1648 = vunpack.c.l.b16 %v385
    %v1649 = vunpack.c.l.b16 %v386
    %v1650 = vunpack.c.l.b16 %v387
    %v1651 = vunpack.c.l.b16 %v388
    %v1652 = vunpack.c.l.b16 %v389
    %v1653 = vunpack.c.l.b16 %v390
    %v1654 = vunpack.c.l.b16 %v391
    %v1655 = vunpack.c.l.b16 %v392
    %v1656 = vunpack.c.l.b16 %v393
    %v1657 = vunpack.c.l.b16 %v394
    %v1658 = vunpack.c.l.b16 %v395
    %v1659 = vunpack.c.l.b16 %v396
    %v1660 = vunpack.c.l.b16 %v397
    %v1661 = vunpack.c.l.b16 %v398
    %v1662 = vunpack.c.l.b16 %v399
    %v1663 = vunpack.c.l.b16 %v400
    %v1664 = vunpack.c.l.b16 %v401
    %v1665 = vunpack.c.l.b16 %v402
    %v1666 = vunpack.c.l.b16 %v403
    %v1667 = vunpack.c.l.b16 %v404
    %v1668 = vunpack.c.l.b16 %v405
    %v1669 = vunpack.c.l.b16 %v406
    %v1670 = vunpack.c.l.b16 %v407
    %v1671 = vunpack.c.l.b16 %v408
    %v1672 = vunpack.c.l.b16 %v409
    %v1673 = vunpack.c.l.b16 %v410
    %v1674 = vunpack.c.l.b16 %v411
    %v1675 = vunpack.c.l.b16 %v412
    %v1676 = vunpack.c.l.b16 %v413
    %v1677 = vunpack.c.l.b16 %v414
    %v1678 = vunpack.c.l.b16 %v415
    %v1679 = vunpack.c.l.b16 %v416
    %v1680 = vunpack.c.l.b16 %v417
    %v1681 = vunpack.c.l.b16 %v418
    %v1682 = vunpack.c.l.b16 %v419
    %v1683 = vunpack.c.l.b16 %v420
    %v1684 = vunpack.c.l.b16 %v421
    %v1685 = vunpack.c.l.b16 %v422
    %v1686 = vunpack.c.l.b16 %v423
    %v1687 = vunpack.c.l.b16 %v424
    %v1688 = vunpack.c.l.b16 %v425
    %v1689 = vunpack.c.l.b16 %v426
    %v1690 = vunpack.c.l.b16 %v427
    %v1691 = vunpack.c.l.b16 %v428
    %v1692 = vunpack.c.l.b16 %v429
    %v1693 = vunpack.c.l.b16 %v430
    %v1694 = vunpack.c.l.b16 %v431
    %v1695 = vunpack.c.l.b16 %v432
    %v1696 = vunpack.c.l.b16 %v433
    %v1697 = vunpack.c.l.b16 %v434
    %v1698 = vunpack.c.l.b16 %v435
    %v1699 = vunpack.c.l.b16 %v436
    %v1700 = vunpack.c.l.b16 %v437
    %v1701 = vunpack.c.l.b16 %v438
    %v1702 = vunpack.c.l.b16 %v439
    %v1703 = vunpack.c.l.b16 %v440
    %v1704 = vunpack.c.l.b16 %v441
    %v1705 = vunpack.c.l.b16 %v442
    %v1706 = vunpack.c.l.b16 %v443
    %v1707 = vunpack.c.l.b16 %v444
    %v1708 = vunpack.c.l.b16 %v445
    %v1709 = vunpack.c.l.b16 %v446
    %v1710 = vunpack.c.l.b16 %v447
    %v1711 = vunpack.c.l.b16 %v448
    %v1712 = vunpack.c.l.b16 %v449
    %v1713 = vunpack.c.l.b16 %v450
    %v1714 = vunpack.c.l.b16 %v451
    %v1715 = vunpack.c.l.b16 %v452
    %v1716 = vunpack.c.l.b16 %v453
    %v1717 = vunpack.c.l.b16 %v454
    %v1718 = vunpack.c.l.b16 %v455
    %v1719 = vunpack.c.l.b16 %v456
    %v1720 = vunpack.c.l.b16 %v457
    %v1721 = vunpack.c.l.b16 %v458
    %v1722 = vunpack.c.l.b16 %v459
    %v1723 = vunpack.c.l.b16 %v460
    %v1724 = vunpack.c.l.b16 %v461
    %v1725 = vunpack.c.l.b16 %v462
    %v1726 = vunpack.c.l.b16 %v463
    %v1727 = vunpack.c.l.b16 %v464
    %v1728 = vunpack.c.l.b16 %v465
    %v1729 = vunpack.c.l.b16 %v466
    %v1730 = vunpack.c.l.b16 %v467
    %v1731 = vunpack.c.l.b16 %v468
    %v1732 = vunpack.c.l.b16 %v469
    %v1733 = vunpack.c.l.b16 %v470
    %v1734 = vunpack.c.l.b16 %v471
    %v1735 = vunpack.c.l.b16 %v472
    %v1736 = vunpack.c.l.b16 %v473
    %v1737 = vunpack.c.l.b16 %v474
    %v1738 = vunpack.c.l.b16 %v475
    %v1739 = vunpack.c.l.b16 %v476
    %v1740 = vunpack.c.l.b16 %v477
    %v1741 = vunpack.c.l.b16 %v478
    %v1742 = vunpack.c.l.b16 %v479
    %v1743 = vunpack.c.l.b16 %v480
    %v1744 = vunpack.c.l.b16 %v481
    %v1745 = vunpack.c.l.b16 %v482
    %v1746 = vunpack.c.l.b16 %v483
    %v1747 = vunpack.c.l.b16 %v484
    %v1748 = vunpack.c.l.b16 %v485
    %v1749 = vunpack.c.l.b16 %v486
    %v1750 = vunpack.c.l.b16 %v487
    %v1751 = vunpack.c.l.b16 %v488
    %v1752 = vunpack.c.l.b16 %v489
    %v1753 = vunpack.c.l.b16 %v490
    %v1754 = vunpack.c.l.b16 %v491
    %v1755 = vunpack.c.l.b16 %v492
    %v1756 = vunpack.c.l.b16 %v493
    %v1757 = vunpack.c.l.b16 %v494
    %v1758 = vunpack.c.l.b16 %v495
    %v1759 = vunpack.c.l.b16 %v496
    %v1760 = vunpack.c.l.b16 %v497
    %v1761 = vunpack.c.l.b16 %v498
    %v1762 = vunpack.c.l.b16 %v499
    %v1763 = vunpack.c.l.b16 %v500
    %v1764 = vunpack.c.l.b16 %v501
    %v1765 = vunpack.c.l.b16 %v502
    %v1766 = vunpack.c.l.b16 %v503
    %v1767 = vunpack.c.l.b16 %v504
    %v1768 = vunpack.c.l.b16 %v505
    %v1769 = vunpack.c.l.b16 %v506
    %v1770 = vunpack.c.l.b16 %v507
    %v1771 = vunpack.c.l.b16 %v508
    %v1772 = vunpack.c.l.b16 %v509
    %v1773 = vunpack.c.l.b16 %v510
    %v1774 = vunpack.c.l.b16 %v511
    %v1775 = vunpack.c.l.b16 %v512
    %v1776 = vunpack.c.l.b16 %v513
    %v1777 = vunpack.c.l.b16 %v514
    %v1778 = vunpack.c.l.b16 %v515
    %v1779 = vunpack.c.l.b16 %v516
    %v1780 = vunpack.c.l.b16 %v517
    %v1781 = vunpack.c.l.b16 %v518
    %v1782 = vunpack.c.l.b16 %v519
    %v1783 = vunpack.c.l.b16 %v520
    %v1784 = vunpack.c.l.b16 %v521
    %v1785 = vunpack.c.l.b16 %v522
    %v1786 = vunpack.c.l.b16 %v523
    %v1787 = vunpack.c.l.b16 %v524
    %v1788 = vunpack.c.l.b16 %v525
    %v1789 = vunpack.c.l.b16 %v526
    %v1790 = vunpack.c.l.b16 %v527
    %v1791 = vunpack.c.l.b16 %v528
    %v1792 = vunpack.c.l.b16 %v529
    %v1793 = vunpack.c.l.b16 %v530
    %v1794 = vunpack.c.l.b16 %v531
    %v1795 = vpack.c.b16 %v1284, %v1283
    %v1796 = vpack.c.b16 %v1286, %v1285
    %v1797 = vpack.c.b16 %v1288, %v1287
    %v1798 = vpack.c.b16 %v1290, %v1289
    %v1799 = vpack.c.b16 %v1292, %v1291
    %v1800 = vpack.c.b16 %v1294, %v1293
    %v1801 = vpack.c.b16 %v1296, %v1295
    %v1802 = vpack.c.b16 %v1298, %v1297
    %v1803 = vpack.c.b16 %v1300, %v1299
    %v1804 = vpack.c.b16 %v1302, %v1301
    %v1805 = vpack.c.b16 %v1304, %v1303
    %v1806 = vpack.c.b16 %v1306, %v1305
    %v1807 = vpack.c.b16 %v1308, %v1307
    %v1808 = vpack.c.b16 %v1310, %v1309
    %v1809 = vpack.c.b16 %v1312, %v1311
    %v1810 = vpack.c.b16 %v1314, %v1313
    %v1811 = vpack.c.b16 %v1316, %v1315
    %v1812 = vpack.c.b16 %v1318, %v1317
    %v1813 = vpack.c.b16 %v1320, %v1319
    %v1814 = vpack.c.b16 %v1322, %v1321
    %v1815 = vpack.c.b16 %v1324, %v1323
    %v1816 = vpack.c.b16 %v1326, %v1325
    %v1817 = vpack.c.b16 %v1328, %v1327
    %v1818 = vpack.c.b16 %v1330, %v1329
    %v1819 = vpack.c.b16 %v1332, %v1331
    %v1820 = vpack.c.b16 %v1334, %v1333
    %v1821 = vpack.c.b16 %v1336, %v1335
    %v1822 = vpack.c.b16 %v1338, %v1337
    %v1823 = vpack.c.b16 %v1340, %v1339
    %v1824 = vpack.c.b16 %v1342, %v1341
    %v1825 = vpack.c.b16 %v1344, %v1343
    %v1826 = vpack.c.b16 %v1346, %v1345
    %v1827 = vpack.c.b16 %v1348, %v1347
    %v1828 = vpack.c.b16 %v1350, %v1349
    %v1829 = vpack.c.b16 %v1352, %v1351
    %v1830 = vpack.c.b16 %v1354, %v1353
    %v1831 = vpack.c.b16 %v1356, %v1355
    %v1832 = vpack.c.b16 %v1358, %v1357
    %v1833 = vpack.c.b16 %v1360, %v1359
    %v1834 = vpack.c.b16 %v1362, %v1361
    %v1835 = vpack.c.b16 %v1364, %v1363
    %v1836 = vpack.c.b16 %v1366, %v1365
    %v1837 = vpack.c.b16 %v1368, %v1367
    %v1838 = vpack.c.b16 %v1370, %v1369
    %v1839 = vpack.c.b16 %v1372, %v1371
    %v1840 = vpack.c.b16 %v1374, %v1373
    %v1841 = vpack.c.b16 %v1376, %v1375
    %v1842 = vpack.c.b16 %v1378, %v1377
    %v1843 = vpack.c.b16 %v1380, %v1379
    %v1844 = vpack.c.b16 %v1382, %v1381
    %v1845 = vpack.c.b16 %v1384, %v1383
    %v1846 = vpack.c.b16 %v1386, %v1385
    %v1847 = vpack.c.b16 %v1388, %v1387
    %v1848 = vpack.c.b16 %v1390, %v1389
    %v1849 = vpack.c.b16 %v1392, %v1391
    %v1850 = vpack.c.b16 %v1394, %v1393
    %v1851 = vpack.c.b16 %v1396, %v1395
    %v1852 = vpack.c.b16 %v1398, %v1397
    %v1853 = vpack.c.b16 %v1400, %v1399
    %v1854 = vpack.c.b16 %v1402, %v1401
    %v1855 = vpack.c.b16 %v1404, %v1403
    %v1856 = vpack.c.b16 %v1406, %v1405
    %v1857 = vpack.c.b16 %v1408, %v1407
    %v1858 = vpack.c.b16 %v1410, %v1409
    %v1859 = vpack.c.b16 %v1412, %v1411
    %v1860 = vpack.c.b16 %v1414, %v1413
    %v1861 = vpack.c.b16 %v1416, %v1415
    %v1862 = vpack.c.b16 %v1418, %v1417
    %v1863 = vpack.c.b16 %v1420, %v1419
    %v1864 = vpack.c.b16 %v1422, %v1421
    %v1865 = vpack.c.b16 %v1424, %v1423
    %v1866 = vpack.c.b16 %v1426, %v1425
    %v1867 = vpack.c.b16 %v1428, %v1427
    %v1868 = vpack.c.b16 %v1430, %v1429
    %v1869 = vpack.c.b16 %v1432, %v1431
    %v1870 = vpack.c.b16 %v1434, %v1433
    %v1871 = vpack.c.b16 %v1436, %v1435
    %v1872 = vpack.c.b16 %v1438, %v1437
    %v1873 = vpack.c.b16 %v1440, %v1439
    %v1874 = vpack.c.b16 %v1442, %v1441
    %v1875 = vpack.c.b16 %v1444, %v1443
    %v1876 = vpack.c.b16 %v1446, %v1445
    %v1877 = vpack.c.b16 %v1448, %v1447
    %v1878 = vpack.c.b16 %v1450, %v1449
    %v1879 = vpack.c.b16 %v1452, %v1451
    %v1880 = vpack.c.b16 %v1454, %v1453
    %v1881 = vpack.c.b16 %v1456, %v1455
    %v1882 = vpack.c.b16 %v1458, %v1457
    %v1883 = vpack.c.b16 %v1460, %v1459
    %v1884 = vpack.c.b16 %v1462, %v1461
    %v1885 = vpack.c.b16 %v1464, %v1463
    %v1886 = vpack.c.b16 %v1466, %v1465
    %v1887 = vpack.c.b16 %v1468, %v1467
    %v1888 = vpack.c.b16 %v1470, %v1469
    %v1889 = vpack.c.b16 %v1472, %v1471
    %v1890 = vpack.c.b16 %v1474, %v1473
    %v1891 = vpack.c.b16 %v1476, %v1475
    %v1892 = vpack.c.b16 %v1478, %v1477
    %v1893 = vpack.c.b16 %v1480, %v1479
    %v1894 = vpack.c.b16 %v1482, %v1481
    %v1895 = vpack.c.b16 %v1484, %v1483
    %v1896 = vpack.c.b16 %v1486, %v1485
    %v1897 = vpack.c.b16 %v1488, %v1487
    %v1898 = vpack.c.b16 %v1490, %v1489
    %v1899 = vpack.c.b16 %v1492, %v1491
    %v1900 = vpack.c.b16 %v1494, %v1493
    %v1901 = vpack.c.b16 %v1496, %v1495
    %v1902 = vpack.c.b16 %v1498, %v1497
    %v1903 = vpack.c.b16 %v1500, %v1499
    %v1904 = vpack.c.b16 %v1502, %v1501
    %v1905 = vpack.c.b16 %v1504, %v1503
    %v1906 = vpack.c.b16 %v1506, %v1505
    %v1907 = vpack.c.b16 %v1508, %v1507
    %v1908 = vpack.c.b16 %v1510, %v1509
    %v1909 = vpack.c.b16 %v1512, %v1511
    %v1910 = vpack.c.b16 %v1514, %v1513
    %v1911 = vpack.c.b16 %v1516, %v1515
    %v1912 = vpack.c.b16 %v1518, %v1517
    %v1913 = vpack.c.b16 %v1520, %v1519
    %v1914 = vpack.c.b16 %v1522, %v1521
    %v1915 = vpack.c.b16 %v1524, %v1523
    %v1916 = vpack.c.b16 %v1526, %v1525
    %v1917 = vpack.c.b16 %v1528, %v1527
    %v1918 = vpack.c.b16 %v1530, %v1529
    %v1919 = vpack.c.b16 %v1532, %v1531
    %v1920 = vpack.c.b16 %v1534, %v1533
    %v1921 = vpack.c.b16 %v1536, %v1535
    %v1922 = vpack.c.b16 %v1538, %v1537
    %v1923 = vpack.c.b16 %v1540, %v1539
    %v1924 = vpack.c.b16 %v1542, %v1541
    %v1925 = vpack.c.b16 %v1544, %v1543
    %v1926 = vpack.c.b16 %v1546, %v1545
    %v1927 = vpack.c.b16 %v1548, %v1547
    %v1928 = vpack.c.b16 %v1550, %v1549
    %v1929 = vpack.c.b16 %v1552, %v1551
    %v1930 = vpack.c.b16 %v1554, %v1553
    %v1931 = vpack.c.b16 %v1556, %v1555
    %v1932 = vpack.c.b16 %v1558, %v1557
    %v1933 = vpack.c.b16 %v1560, %v1559
    %v1934 = vpack.c.b16 %v1562, %v1561
    %v1935 = vpack.c.b16 %v1564, %v1563
    %v1936 = vpack.c.b16 %v1566, %v1565
    %v1937 = vpack.c.b16 %v1568, %v1567
    %v1938 = vpack.c.b16 %v1570, %v1569
    %v1939 = vpack.c.b16 %v1572, %v1571
    %v1940 = vpack.c.b16 %v1574, %v1573
    %v1941 = vpack.c.b16 %v1576, %v1575
    %v1942 = vpack.c.b16 %v1578, %v1577
    %v1943 = vpack.c.b16 %v1580, %v1579
    %v1944 = vpack.c.b16 %v1582, %v1581
    %v1945 = vpack.c.b16 %v1584, %v1583
    %v1946 = vpack.c.b16 %v1586, %v1585
    %v1947 = vpack.c.b16 %v1588, %v1587
    %v1948 = vpack.c.b16 %v1590, %v1589
    %v1949 = vpack.c.b16 %v1592, %v1591
    %v1950 = vpack.c.b16 %v1594, %v1593
    %v1951 = vpack.c.b16 %v1596, %v1595
    %v1952 = vpack.c.b16 %v1598, %v1597
    %v1953 = vpack.c.b16 %v1600, %v1599
    %v1954 = vpack.c.b16 %v1602, %v1601
    %v1955 = vpack.c.b16 %v1604, %v1603
    %v1956 = vpack.c.b16 %v1606, %v1605
    %v1957 = vpack.c.b16 %v1608, %v1607
    %v1958 = vpack.c.b16 %v1610, %v1609
    %v1959 = vpack.c.b16 %v1612, %v1611
    %v1960 = vpack.c.b16 %v1614, %v1613
    %v1961 = vpack.c.b16 %v1616, %v1615
    %v1962 = vpack.c.b16 %v1618, %v1617
    %v1963 = vpack.c.b16 %v1620, %v1619
    %v1964 = vpack.c.b16 %v1622, %v1621
    %v1965 = vpack.c.b16 %v1624, %v1623
    %v1966 = vpack.c.b16 %v1626, %v1625
    %v1967 = vpack.c.b16 %v1628, %v1627
    %v1968 = vpack.c.b16 %v1630, %v1629
    %v1969 = vpack.c.b16 %v1632, %v1631
    %v1970 = vpack.c.b16 %v1634, %v1633
    %v1971 = vpack.c.b16 %v1636, %v1635
    %v1972 = vpack.c.b16 %v1638, %v1637
    %v1973 = vpack.c.b16 %v1640, %v1639
    %v1974 = vpack.c.b16 %v1642, %v1641
    %v1975 = vpack.c.b16 %v1644, %v1643
    %v1976 = vpack.c.b16 %v1646, %v1645
    %v1977 = vpack.c.b16 %v1648, %v1647
    %v1978 = vpack.c.b16 %v1650, %v1649
    %v1979 = vpack.c.b16 %v1652, %v1651
    %v1980 = vpack.c.b16 %v1654, %v1653
    %v1981 = vpack.c.b16 %v1656, %v1655
    %v1982 = vpack.c.b16 %v1658, %v1657
    %v1983 = vpack.c.b16 %v1660, %v1659
    %v1984 = vpack.c.b16 %v1662, %v1661
    %v1985 = vpack.c.b16 %v1664, %v1663
    %v1986 = vpack.c.b16 %v1666, %v1665
    %v1987 = vpack.c.b16 %v1668, %v1667
    %v1988 = vpack.c.b16 %v1670, %v1669
    %v1989 = vpack.c.b16 %v1672, %v1671
    %v1990 = vpack.c.b16 %v1674, %v1673
    %v1991 = vpack.c.b16 %v1676, %v1675
    %v1992 = vpack.c.b16 %v1678, %v1677
    %v1993 = vpack.c.b16 %v1680, %v1679
    %v1994 = vpack.c.b16 %v1682, %v1681
    %v1995 = vpack.c.b16 %v1684, %v1683
    %v1996 = vpack.c.b16 %v1686, %v1685
    %v1997 = vpack.c.b16 %v1688, %v1687
    %v1998 = vpack.c.b16 %v1690, %v1689
    %v1999 = vpack.c.b16 %v1692, %v1691
    %v2000 = vpack.c.b16 %v1694, %v1693
    %v2001 = vpack.c.b16 %v1696, %v1695
    %v2002 = vpack.c.b16 %v1698, %v1697
    %v2003 = vpack.c.b16 %v1700, %v1699
    %v2004 = vpack.c.b16 %v1702, %v1701
    %v2005 = vpack.c.b16 %v1704, %v1703
    %v2006 = vpack.c.b16 %v1706, %v1705
    %v2007 = vpack.c.b16 %v1708, %v1707
    %v2008 = vpack.c.b16 %v1710, %v1709
    %v2009 = vpack.c.b16 %v1712, %v1711
    %v2010 = vpack.c.b16 %v1714, %v1713
    %v2011 = vpack.c.b16 %v1716, %v1715
    %v2012 = vpack.c.b16 %v1718, %v1717
    %v2013 = vpack.c.b16 %v1720, %v1719
    %v2014 = vpack.c.b16 %v1722, %v1721
    %v2015 = vpack.c.b16 %v1724, %v1723
    %v2016 = vpack.c.b16 %v1726, %v1725
    %v2017 = vpack.c.b16 %v1728, %v1727
    %v2018 = vpack.c.b16 %v1730, %v1729
    %v2019 = vpack.c.b16 %v1732, %v1731
    %v2020 = vpack.c.b16 %v1734, %v1733
    %v2021 = vpack.c.b16 %v1736, %v1735
    %v2022 = vpack.c.b16 %v1738, %v1737
    %v2023 = vpack.c.b16 %v1740, %v1739
    %v2024 = vpack.c.b16 %v1742, %v1741
    %v2025 = vpack.c.b16 %v1744, %v1743
    %v2026 = vpack.c.b16 %v1746, %v1745
    %v2027 = vpack.c.b16 %v1748, %v1747
    %v2028 = vpack.c.b16 %v1750, %v1749
    %v2029 = vpack.c.b16 %v1752, %v1751
    %v2030 = vpack.c.b16 %v1754, %v1753
    %v2031 = vpack.c.b16 %v1756, %v1755
    %v2032 = vpack.c.b16 %v1758, %v1757
    %v2033 = vpack.c.b16 %v1760, %v1759
    %v2034 = vpack.c.b16 %v1762, %v1761
    %v2035 = vpack.c.b16 %v1764, %v1763
    %v2036 = vpack.c.b16 %v1766, %v1765
    %v2037 = vpack.c.b16 %v1768, %v1767
    %v2038 = vpack.c.b16 %v1770, %v1769
    %v2039 = vpack.c.b16 %v1772, %v1771
    %v2040 = vpack.c.b16 %v1774, %v1773
    %v2041 = vpack.c.b16 %v1776, %v1775
    %v2042 = vpack.c.b16 %v1778, %v1777
    %v2043 = vpack.c.b16 %v1780, %v1779
    %v2044 = vpack.c.b16 %v1782, %v1781
    %v2045 = vpack.c.b16 %v1784, %v1783
    %v2046 = vpack.c.b16 %v1786, %v1785
    %v2047 = vpack.c.b16 %v1788, %v1787
    %v2048 = vpack.c.b16 %v1790, %v1789
    %v2049 = vpack.c.b16 %v1792, %v1791
    %v2050 = vpack.c.b16 %v1794, %v1793
    %2307 = vmatprep.subr.bf16.mxu0 0
    %2308 = vmatpush1.bf16.msra.mxu0 %v1795
    %2309 = vmatprep.subr.bf16.mxu0 0
    %2310 = vmatpush1.bf16.msra.mxu0 %v1796
    %2311 = vmatprep.subr.bf16.mxu0 0
    %2312 = vmatpush1.bf16.msra.mxu0 %v1797
    %2313 = vmatprep.subr.bf16.mxu0 0
    %2314 = vmatpush1.bf16.msra.mxu0 %v1798
    %2315 = vmatprep.subr.bf16.mxu0 0
    %2316 = vmatpush1.bf16.msra.mxu0 %v1799
    %2317 = vmatprep.subr.bf16.mxu0 0
    %2318 = vmatpush1.bf16.msra.mxu0 %v1800
    %2319 = vmatprep.subr.bf16.mxu0 0
    %2320 = vmatpush1.bf16.msra.mxu0 %v1801
    %2321 = vmatprep.subr.bf16.mxu0 0
    %2322 = vmatpush1.bf16.msra.mxu0 %v1802
    %2323 = vmatprep.subr.bf16.mxu0 0
    %2324 = vmatpush1.bf16.msra.mxu0 %v1803
    %2325 = vmatprep.subr.bf16.mxu0 0
    %2326 = vmatpush1.bf16.msra.mxu0 %v1804
    %2327 = vmatprep.subr.bf16.mxu0 0
    %2328 = vmatpush1.bf16.msra.mxu0 %v1805
    %2329 = vmatprep.subr.bf16.mxu0 0
    %2330 = vmatpush1.bf16.msra.mxu0 %v1806
    %2331 = vmatprep.subr.bf16.mxu0 0
    %2332 = vmatpush1.bf16.msra.mxu0 %v1807
    %2333 = vmatprep.subr.bf16.mxu0 0
    %2334 = vmatpush1.bf16.msra.mxu0 %v1808
    %2335 = vmatprep.subr.bf16.mxu0 0
    %2336 = vmatpush1.bf16.msra.mxu0 %v1809
    %2337 = vmatprep.subr.bf16.mxu0 0
    %2338 = vmatpush1.bf16.msra.mxu0 %v1810
    %2339 = vmatprep.mubr.bf16.mxu0 %v580
    %2340 = vmatmul.mubr.bf16.gmra.mrb[0].mxu0 %v566
    %v2341 = vpop.f32.mrb[0].mxu0
    %v2342 = vadd.f32 %v537, %v2341
    %v2343 = vpop.f32.mrb[0].mxu0
    %v2344 = vpop.f32.mrb[0].mxu0
    %v2345 = vpop.f32.mrb[0].mxu0
    %2346 = vdwg.mxu0
    %2347 = vmatprep.subr.bf16.mxu0 0
    %2348 = vmatpush1.bf16.msra.mxu0 %v1811
    %2349 = vmatprep.subr.bf16.mxu0 0
    %2350 = vmatpush1.bf16.msra.mxu0 %v1812
    %2351 = vmatprep.subr.bf16.mxu0 0
    %2352 = vmatpush1.bf16.msra.mxu0 %v1813
    %2353 = vmatprep.subr.bf16.mxu0 0
    %2354 = vmatpush1.bf16.msra.mxu0 %v1814
    %2355 = vmatprep.subr.bf16.mxu0 0
    %2356 = vmatpush1.bf16.msra.mxu0 %v1815
    %2357 = vmatprep.subr.bf16.mxu0 0
    %2358 = vmatpush1.bf16.msra.mxu0 %v1816
    %2359 = vmatprep.subr.bf16.mxu0 0
    %2360 = vmatpush1.bf16.msra.mxu0 %v1817
    %2361 = vmatprep.subr.bf16.mxu0 0
    %2362 = vmatpush1.bf16.msra.mxu0 %v1818
    %2363 = vmatprep.subr.bf16.mxu0 0
    %2364 = vmatpush1.bf16.msra.mxu0 %v1819
    %2365 = vmatprep.subr.bf16.mxu0 0
    %2366 = vmatpush1.bf16.msra.mxu0 %v1820
    %2367 = vmatprep.subr.bf16.mxu0 0
    %2368 = vmatpush1.bf16.msra.mxu0 %v1821
    %2369 = vmatprep.subr.bf16.mxu0 0
    %2370 = vmatpush1.bf16.msra.mxu0 %v1822
    %2371 = vmatprep.subr.bf16.mxu0 0
    %2372 = vmatpush1.bf16.msra.mxu0 %v1823
    %2373 = vmatprep.subr.bf16.mxu0 0
    %2374 = vmatpush1.bf16.msra.mxu0 %v1824
    %2375 = vmatprep.subr.bf16.mxu0 0
    %2376 = vmatpush1.bf16.msra.mxu0 %v1825
    %2377 = vmatprep.subr.bf16.mxu0 0
    %2378 = vmatpush1.bf16.msra.mxu0 %v1826
    %2379 = vmatprep.mubr.bf16.mxu0 %v590
    %2380 = vmatmul.mubr.bf16.gmra.mrb[0].mxu0 %v588
    %v2381 = vpop.f32.mrb[0].mxu0
    %v2382 = vadd.f32 %v2342, %v2381
    %v2383 = vpop.f32.mrb[0].mxu0
    %v2384 = vpop.f32.mrb[0].mxu0
    %v2385 = vpop.f32.mrb[0].mxu0
    %2386 = vdwg.mxu0
    %2387 = vmatprep.subr.bf16.mxu0 0
    %2388 = vmatpush1.bf16.msra.mxu0 %v1827
    %2389 = vmatprep.subr.bf16.mxu0 0
    %2390 = vmatpush1.bf16.msra.mxu0 %v1828
    %2391 = vmatprep.subr.bf16.mxu0 0
    %2392 = vmatpush1.bf16.msra.mxu0 %v1829
    %2393 = vmatprep.subr.bf16.mxu0 0
    %2394 = vmatpush1.bf16.msra.mxu0 %v1830
    %2395 = vmatprep.subr.bf16.mxu0 0
    %2396 = vmatpush1.bf16.msra.mxu0 %v1831
    %2397 = vmatprep.subr.bf16.mxu0 0
    %2398 = vmatpush1.bf16.msra.mxu0 %v1832
    %2399 = vmatprep.subr.bf16.mxu0 0
    %2400 = vmatpush1.bf16.msra.mxu0 %v1833
    %2401 = vmatprep.subr.bf16.mxu0 0
    %2402 = vmatpush1.bf16.msra.mxu0 %v1834
    %2403 = vmatprep.subr.bf16.mxu0 0
    %2404 = vmatpush1.bf16.msra.mxu0 %v1835
    %2405 = vmatprep.subr.bf16.mxu0 0
    %2406 = vmatpush1.bf16.msra.mxu0 %v1836
    %2407 = vmatprep.subr.bf16.mxu0 0
    %2408 = vmatpush1.bf16.msra.mxu0 %v1837
    %2409 = vmatprep.subr.bf16.mxu0 0
    %2410 = vmatpush1.bf16.msra.mxu0 %v1838
    %2411 = vmatprep.subr.bf16.mxu0 0
    %2412 = vmatpush1.bf16.msra.mxu0 %v1839
    %2413 = vmatprep.subr.bf16.mxu0 0
    %2414 = vmatpush1.bf16.msra.mxu0 %v1840
    %2415 = vmatprep.subr.bf16.mxu0 0
    %2416 = vmatpush1.bf16.msra.mxu0 %v1841
    %2417 = vmatprep.subr.bf16.mxu0 0
    %2418 = vmatpush1.bf16.msra.mxu0 %v1842
    %2419 = vmatprep.mubr.bf16.mxu0 %v587
    %2420 = vmatmul.mubr.bf16.gmra.mrb[0].mxu0 %v573
    %v2421 = vpop.f32.mrb[0].mxu0
    %v2422 = vadd.f32 %v2382, %v2421
    %v2423 = vpop.f32.mrb[0].mxu0
    %v2424 = vpop.f32.mrb[0].mxu0
    %v2425 = vpop.f32.mrb[0].mxu0
    %2426 = vdwg.mxu0
    %2427 = vmatprep.subr.bf16.mxu0 0
    %2428 = vmatpush1.bf16.msra.mxu0 %v1843
    %2429 = vmatprep.subr.bf16.mxu0 0
    %2430 = vmatpush1.bf16.msra.mxu0 %v1844
    %2431 = vmatprep.subr.bf16.mxu0 0
    %2432 = vmatpush1.bf16.msra.mxu0 %v1845
    %2433 = vmatprep.subr.bf16.mxu0 0
    %2434 = vmatpush1.bf16.msra.mxu0 %v1846
    %2435 = vmatprep.subr.bf16.mxu0 0
    %2436 = vmatpush1.bf16.msra.mxu0 %v1847
    %2437 = vmatprep.subr.bf16.mxu0 0
    %2438 = vmatpush1.bf16.msra.mxu0 %v1848
    %2439 = vmatprep.subr.bf16.mxu0 0
    %2440 = vmatpush1.bf16.msra.mxu0 %v1849
    %2441 = vmatprep.subr.bf16.mxu0 0
    %2442 = vmatpush1.bf16.msra.mxu0 %v1850
    %2443 = vmatprep.subr.bf16.mxu0 0
    %2444 = vmatpush1.bf16.msra.mxu0 %v1851
    %2445 = vmatprep.subr.bf16.mxu0 0
    %2446 = vmatpush1.bf16.msra.mxu0 %v1852
    %2447 = vmatprep.subr.bf16.mxu0 0
    %2448 = vmatpush1.bf16.msra.mxu0 %v1853
    %2449 = vmatprep.subr.bf16.mxu0 0
    %2450 = vmatpush1.bf16.msra.mxu0 %v1854
    %2451 = vmatprep.subr.bf16.mxu0 0
    %2452 = vmatpush1.bf16.msra.mxu0 %v1855
    %2453 = vmatprep.subr.bf16.mxu0 0
    %2454 = vmatpush1.bf16.msra.mxu0 %v1856
    %2455 = vmatprep.subr.bf16.mxu0 0
    %2456 = vmatpush1.bf16.msra.mxu0 %v1857
    %2457 = vmatprep.subr.bf16.mxu0 0
    %2458 = vmatpush1.bf16.msra.mxu0 %v1858
    %2459 = vmatprep.mubr.bf16.mxu0 %v591
    %2460 = vmatmul.mubr.bf16.gmra.mrb[0].mxu0 %v589
    %v2461 = vpop.f32.mrb[0].mxu0
    %v2462 = vadd.f32 %v2422, %v2461
    %v2463 = vpop.f32.mrb[0].mxu0
    %v2464 = vpop.f32.mrb[0].mxu0
    %v2465 = vpop.f32.mrb[0].mxu0
    %2466 = vdwg.mxu0
    %2467 = vmatprep.subr.bf16.mxu0 0
    %2468 = vmatpush1.bf16.msra.mxu0 %v1859
    %2469 = vmatprep.subr.bf16.mxu0 0
    %2470 = vmatpush1.bf16.msra.mxu0 %v1860
    %2471 = vmatprep.subr.bf16.mxu0 0
    %2472 = vmatpush1.bf16.msra.mxu0 %v1861
    %2473 = vmatprep.subr.bf16.mxu0 0
    %2474 = vmatpush1.bf16.msra.mxu0 %v1862
    %2475 = vmatprep.subr.bf16.mxu0 0
    %2476 = vmatpush1.bf16.msra.mxu0 %v1863
    %2477 = vmatprep.subr.bf16.mxu0 0
    %2478 = vmatpush1.bf16.msra.mxu0 %v1864
    %2479 = vmatprep.subr.bf16.mxu0 0
    %2480 = vmatpush1.bf16.msra.mxu0 %v1865
    %2481 = vmatprep.subr.bf16.mxu0 0
    %2482 = vmatpush1.bf16.msra.mxu0 %v1866
    %2483 = vmatprep.subr.bf16.mxu0 0
    %2484 = vmatpush1.bf16.msra.mxu0 %v1867
    %2485 = vmatprep.subr.bf16.mxu0 0
    %2486 = vmatpush1.bf16.msra.mxu0 %v1868
    %2487 = vmatprep.subr.bf16.mxu0 0
    %2488 = vmatpush1.bf16.msra.mxu0 %v1869
    %2489 = vmatprep.subr.bf16.mxu0 0
    %2490 = vmatpush1.bf16.msra.mxu0 %v1870
    %2491 = vmatprep.subr.bf16.mxu0 0
    %2492 = vmatpush1.bf16.msra.mxu0 %v1871
    %2493 = vmatprep.subr.bf16.mxu0 0
    %2494 = vmatpush1.bf16.msra.mxu0 %v1872
    %2495 = vmatprep.subr.bf16.mxu0 0
    %2496 = vmatpush1.bf16.msra.mxu0 %v1873
    %2497 = vmatprep.subr.bf16.mxu0 0
    %2498 = vmatpush1.bf16.msra.mxu0 %v1874
    %2499 = vmatprep.mubr.bf16.mxu0 %v629
    %2500 = vmatmul.mubr.bf16.gmra.mrb[0].mxu0 %v615
    %v2501 = vpop.f32.mrb[0].mxu0
    %v2502 = vadd.f32 %v2462, %v2501
    %v2503 = vpop.f32.mrb[0].mxu0
    %v2504 = vpop.f32.mrb[0].mxu0
    %v2505 = vpop.f32.mrb[0].mxu0
    %2506 = vdwg.mxu0
    %2507 = vmatprep.subr.bf16.mxu0 0
    %2508 = vmatpush1.bf16.msra.mxu0 %v1875
    %2509 = vmatprep.subr.bf16.mxu0 0
    %2510 = vmatpush1.bf16.msra.mxu0 %v1876
    %2511 = vmatprep.subr.bf16.mxu0 0
    %2512 = vmatpush1.bf16.msra.mxu0 %v1877
    %2513 = vmatprep.subr.bf16.mxu0 0
    %2514 = vmatpush1.bf16.msra.mxu0 %v1878
    %2515 = vmatprep.subr.bf16.mxu0 0
    %2516 = vmatpush1.bf16.msra.mxu0 %v1879
    %2517 = vmatprep.subr.bf16.mxu0 0
    %2518 = vmatpush1.bf16.msra.mxu0 %v1880
    %2519 = vmatprep.subr.bf16.mxu0 0
    %2520 = vmatpush1.bf16.msra.mxu0 %v1881
    %2521 = vmatprep.subr.bf16.mxu0 0
    %2522 = vmatpush1.bf16.msra.mxu0 %v1882
    %2523 = vmatprep.subr.bf16.mxu0 0
    %2524 = vmatpush1.bf16.msra.mxu0 %v1883
    %2525 = vmatprep.subr.bf16.mxu0 0
    %2526 = vmatpush1.bf16.msra.mxu0 %v1884
    %2527 = vmatprep.subr.bf16.mxu0 0
    %2528 = vmatpush1.bf16.msra.mxu0 %v1885
    %2529 = vmatprep.subr.bf16.mxu0 0
    %2530 = vmatpush1.bf16.msra.mxu0 %v1886
    %2531 = vmatprep.subr.bf16.mxu0 0
    %2532 = vmatpush1.bf16.msra.mxu0 %v1887
    %2533 = vmatprep.subr.bf16.mxu0 0
    %2534 = vmatpush1.bf16.msra.mxu0 %v1888
    %2535 = vmatprep.subr.bf16.mxu0 0
    %2536 = vmatpush1.bf16.msra.mxu0 %v1889
    %2537 = vmatprep.subr.bf16.mxu0 0
    %2538 = vmatpush1.bf16.msra.mxu0 %v1890
    %2539 = vmatprep.mubr.bf16.mxu0 %v639
    %2540 = vmatmul.mubr.bf16.gmra.mrb[0].mxu0 %v637
    %v2541 = vpop.f32.mrb[0].mxu0
    %v2542 = vadd.f32 %v2502, %v2541
    %v2543 = vpop.f32.mrb[0].mxu0
    %v2544 = vpop.f32.mrb[0].mxu0
    %v2545 = vpop.f32.mrb[0].mxu0
    %2546 = vdwg.mxu0
    %2547 = vmatprep.subr.bf16.mxu0 0
    %2548 = vmatpush1.bf16.msra.mxu0 %v1891
    %2549 = vmatprep.subr.bf16.mxu0 0
    %2550 = vmatpush1.bf16.msra.mxu0 %v1892
    %2551 = vmatprep.subr.bf16.mxu0 0
    %2552 = vmatpush1.bf16.msra.mxu0 %v1893
    %2553 = vmatprep.subr.bf16.mxu0 0
    %2554 = vmatpush1.bf16.msra.mxu0 %v1894
    %2555 = vmatprep.subr.bf16.mxu0 0
    %2556 = vmatpush1.bf16.msra.mxu0 %v1895
    %2557 = vmatprep.subr.bf16.mxu0 0
    %2558 = vmatpush1.bf16.msra.mxu0 %v1896
    %2559 = vmatprep.subr.bf16.mxu0 0
    %2560 = vmatpush1.bf16.msra.mxu0 %v1897
    %2561 = vmatprep.subr.bf16.mxu0 0
    %2562 = vmatpush1.bf16.msra.mxu0 %v1898
    %2563 = vmatprep.subr.bf16.mxu0 0
    %2564 = vmatpush1.bf16.msra.mxu0 %v1899
    %2565 = vmatprep.subr.bf16.mxu0 0
    %2566 = vmatpush1.bf16.msra.mxu0 %v1900
    %2567 = vmatprep.subr.bf16.mxu0 0
    %2568 = vmatpush1.bf16.msra.mxu0 %v1901
    %2569 = vmatprep.subr.bf16.mxu0 0
    %2570 = vmatpush1.bf16.msra.mxu0 %v1902
    %2571 = vmatprep.subr.bf16.mxu0 0
    %2572 = vmatpush1.bf16.msra.mxu0 %v1903
    %2573 = vmatprep.subr.bf16.mxu0 0
    %2574 = vmatpush1.bf16.msra.mxu0 %v1904
    %2575 = vmatprep.subr.bf16.mxu0 0
    %2576 = vmatpush1.bf16.msra.mxu0 %v1905
    %2577 = vmatprep.subr.bf16.mxu0 0
    %2578 = vmatpush1.bf16.msra.mxu0 %v1906
    %2579 = vmatprep.mubr.bf16.mxu0 %v636
    %2580 = vmatmul.mubr.bf16.gmra.mrb[0].mxu0 %v622
    %v2581 = vpop.f32.mrb[0].mxu0
    %v2582 = vadd.f32 %v2542, %v2581
    %v2583 = vpop.f32.mrb[0].mxu0
    %v2584 = vpop.f32.mrb[0].mxu0
    %v2585 = vpop.f32.mrb[0].mxu0
    %2586 = vdwg.mxu0
    %2587 = vmatprep.subr.bf16.mxu0 0
    %2588 = vmatpush1.bf16.msra.mxu0 %v1907
    %2589 = vmatprep.subr.bf16.mxu0 0
    %2590 = vmatpush1.bf16.msra.mxu0 %v1908
    %2591 = vmatprep.subr.bf16.mxu0 0
    %2592 = vmatpush1.bf16.msra.mxu0 %v1909
    %2593 = vmatprep.subr.bf16.mxu0 0
    %2594 = vmatpush1.bf16.msra.mxu0 %v1910
    %2595 = vmatprep.subr.bf16.mxu0 0
    %2596 = vmatpush1.bf16.msra.mxu0 %v1911
    %2597 = vmatprep.subr.bf16.mxu0 0
    %2598 = vmatpush1.bf16.msra.mxu0 %v1912
    %2599 = vmatprep.subr.bf16.mxu0 0
    %2600 = vmatpush1.bf16.msra.mxu0 %v1913
    %2601 = vmatprep.subr.bf16.mxu0 0
    %2602 = vmatpush1.bf16.msra.mxu0 %v1914
    %2603 = vmatprep.subr.bf16.mxu0 0
    %2604 = vmatpush1.bf16.msra.mxu0 %v1915
    %2605 = vmatprep.subr.bf16.mxu0 0
    %2606 = vmatpush1.bf16.msra.mxu0 %v1916
    %2607 = vmatprep.subr.bf16.mxu0 0
    %2608 = vmatpush1.bf16.msra.mxu0 %v1917
    %2609 = vmatprep.subr.bf16.mxu0 0
    %2610 = vmatpush1.bf16.msra.mxu0 %v1918
    %2611 = vmatprep.subr.bf16.mxu0 0
    %2612 = vmatpush1.bf16.msra.mxu0 %v1919
    %2613 = vmatprep.subr.bf16.mxu0 0
    %2614 = vmatpush1.bf16.msra.mxu0 %v1920
    %2615 = vmatprep.subr.bf16.mxu0 0
    %2616 = vmatpush1.bf16.msra.mxu0 %v1921
    %2617 = vmatprep.subr.bf16.mxu0 0
    %2618 = vmatpush1.bf16.msra.mxu0 %v1922
    %2619 = vmatprep.mubr.bf16.mxu0 %v640
    %2620 = vmatmul.mubr.bf16.gmra.mrb[0].mxu0 %v638
    %v2621 = vpop.f32.mrb[0].mxu0
    %v2622 = vadd.f32 %v2582, %v2621
    %v2623 = vpop.f32.mrb[0].mxu0
    %v2624 = vpop.f32.mrb[0].mxu0
    %v2625 = vpop.f32.mrb[0].mxu0
    %2626 = vdwg.mxu0
    %2627 = vmatprep.subr.bf16.mxu0 0
    %2628 = vmatpush1.bf16.msra.mxu0 %v1923
    %2629 = vmatprep.subr.bf16.mxu0 0
    %2630 = vmatpush1.bf16.msra.mxu0 %v1924
    %2631 = vmatprep.subr.bf16.mxu0 0
    %2632 = vmatpush1.bf16.msra.mxu0 %v1925
    %2633 = vmatprep.subr.bf16.mxu0 0
    %2634 = vmatpush1.bf16.msra.mxu0 %v1926
    %2635 = vmatprep.subr.bf16.mxu0 0
    %2636 = vmatpush1.bf16.msra.mxu0 %v1927
    %2637 = vmatprep.subr.bf16.mxu0 0
    %2638 = vmatpush1.bf16.msra.mxu0 %v1928
    %2639 = vmatprep.subr.bf16.mxu0 0
    %2640 = vmatpush1.bf16.msra.mxu0 %v1929
    %2641 = vmatprep.subr.bf16.mxu0 0
    %2642 = vmatpush1.bf16.msra.mxu0 %v1930
    %2643 = vmatprep.subr.bf16.mxu0 0
    %2644 = vmatpush1.bf16.msra.mxu0 %v1931
    %2645 = vmatprep.subr.bf16.mxu0 0
    %2646 = vmatpush1.bf16.msra.mxu0 %v1932
    %2647 = vmatprep.subr.bf16.mxu0 0
    %2648 = vmatpush1.bf16.msra.mxu0 %v1933
    %2649 = vmatprep.subr.bf16.mxu0 0
    %2650 = vmatpush1.bf16.msra.mxu0 %v1934
    %2651 = vmatprep.subr.bf16.mxu0 0
    %2652 = vmatpush1.bf16.msra.mxu0 %v1935
    %2653 = vmatprep.subr.bf16.mxu0 0
    %2654 = vmatpush1.bf16.msra.mxu0 %v1936
    %2655 = vmatprep.subr.bf16.mxu0 0
    %2656 = vmatpush1.bf16.msra.mxu0 %v1937
    %2657 = vmatprep.subr.bf16.mxu0 0
    %2658 = vmatpush1.bf16.msra.mxu0 %v1938
    %2659 = vmatprep.mubr.bf16.mxu0 %v678
    %2660 = vmatmul.mubr.bf16.gmra.mrb[0].mxu0 %v664
    %v2661 = vpop.f32.mrb[0].mxu0
    %v2662 = vadd.f32 %v2622, %v2661
    %v2663 = vpop.f32.mrb[0].mxu0
    %v2664 = vpop.f32.mrb[0].mxu0
    %v2665 = vpop.f32.mrb[0].mxu0
    %2666 = vdwg.mxu0
    %2667 = vmatprep.subr.bf16.mxu0 0
    %2668 = vmatpush1.bf16.msra.mxu0 %v1939
    %2669 = vmatprep.subr.bf16.mxu0 0
    %2670 = vmatpush1.bf16.msra.mxu0 %v1940
    %2671 = vmatprep.subr.bf16.mxu0 0
    %2672 = vmatpush1.bf16.msra.mxu0 %v1941
    %2673 = vmatprep.subr.bf16.mxu0 0
    %2674 = vmatpush1.bf16.msra.mxu0 %v1942
    %2675 = vmatprep.subr.bf16.mxu0 0
    %2676 = vmatpush1.bf16.msra.mxu0 %v1943
    %2677 = vmatprep.subr.bf16.mxu0 0
    %2678 = vmatpush1.bf16.msra.mxu0 %v1944
    %2679 = vmatprep.subr.bf16.mxu0 0
    %2680 = vmatpush1.bf16.msra.mxu0 %v1945
    %2681 = vmatprep.subr.bf16.mxu0 0
    %2682 = vmatpush1.bf16.msra.mxu0 %v1946
    %2683 = vmatprep.subr.bf16.mxu0 0
    %2684 = vmatpush1.bf16.msra.mxu0 %v1947
    %2685 = vmatprep.subr.bf16.mxu0 0
    %2686 = vmatpush1.bf16.msra.mxu0 %v1948
    %2687 = vmatprep.subr.bf16.mxu0 0
    %2688 = vmatpush1.bf16.msra.mxu0 %v1949
    %2689 = vmatprep.subr.bf16.mxu0 0
    %2690 = vmatpush1.bf16.msra.mxu0 %v1950
    %2691 = vmatprep.subr.bf16.mxu0 0
    %2692 = vmatpush1.bf16.msra.mxu0 %v1951
    %2693 = vmatprep.subr.bf16.mxu0 0
    %2694 = vmatpush1.bf16.msra.mxu0 %v1952
    %2695 = vmatprep.subr.bf16.mxu0 0
    %2696 = vmatpush1.bf16.msra.mxu0 %v1953
    %2697 = vmatprep.subr.bf16.mxu0 0
    %2698 = vmatpush1.bf16.msra.mxu0 %v1954
    %2699 = vmatprep.mubr.bf16.mxu0 %v688
    %2700 = vmatmul.mubr.bf16.gmra.mrb[0].mxu0 %v686
    %v2701 = vpop.f32.mrb[0].mxu0
    %v2702 = vadd.f32 %v2662, %v2701
    %v2703 = vpop.f32.mrb[0].mxu0
    %v2704 = vpop.f32.mrb[0].mxu0
    %v2705 = vpop.f32.mrb[0].mxu0
    %2706 = vdwg.mxu0
    %2707 = vmatprep.subr.bf16.mxu0 0
    %2708 = vmatpush1.bf16.msra.mxu0 %v1955
    %2709 = vmatprep.subr.bf16.mxu0 0
    %2710 = vmatpush1.bf16.msra.mxu0 %v1956
    %2711 = vmatprep.subr.bf16.mxu0 0
    %2712 = vmatpush1.bf16.msra.mxu0 %v1957
    %2713 = vmatprep.subr.bf16.mxu0 0
    %2714 = vmatpush1.bf16.msra.mxu0 %v1958
    %2715 = vmatprep.subr.bf16.mxu0 0
    %2716 = vmatpush1.bf16.msra.mxu0 %v1959
    %2717 = vmatprep.subr.bf16.mxu0 0
    %2718 = vmatpush1.bf16.msra.mxu0 %v1960
    %2719 = vmatprep.subr.bf16.mxu0 0
    %2720 = vmatpush1.bf16.msra.mxu0 %v1961
    %2721 = vmatprep.subr.bf16.mxu0 0
    %2722 = vmatpush1.bf16.msra.mxu0 %v1962
    %2723 = vmatprep.subr.bf16.mxu0 0
    %2724 = vmatpush1.bf16.msra.mxu0 %v1963
    %2725 = vmatprep.subr.bf16.mxu0 0
    %2726 = vmatpush1.bf16.msra.mxu0 %v1964
    %2727 = vmatprep.subr.bf16.mxu0 0
    %2728 = vmatpush1.bf16.msra.mxu0 %v1965
    %2729 = vmatprep.subr.bf16.mxu0 0
    %2730 = vmatpush1.bf16.msra.mxu0 %v1966
    %2731 = vmatprep.subr.bf16.mxu0 0
    %2732 = vmatpush1.bf16.msra.mxu0 %v1967
    %2733 = vmatprep.subr.bf16.mxu0 0
    %2734 = vmatpush1.bf16.msra.mxu0 %v1968
    %2735 = vmatprep.subr.bf16.mxu0 0
    %2736 = vmatpush1.bf16.msra.mxu0 %v1969
    %2737 = vmatprep.subr.bf16.mxu0 0
    %2738 = vmatpush1.bf16.msra.mxu0 %v1970
    %2739 = vmatprep.mubr.bf16.mxu0 %v685
    %2740 = vmatmul.mubr.bf16.gmra.mrb[0].mxu0 %v671
    %v2741 = vpop.f32.mrb[0].mxu0
    %v2742 = vadd.f32 %v2702, %v2741
    %v2743 = vpop.f32.mrb[0].mxu0
    %v2744 = vpop.f32.mrb[0].mxu0
    %v2745 = vpop.f32.mrb[0].mxu0
    %2746 = vdwg.mxu0
    %2747 = vmatprep.subr.bf16.mxu0 0
    %2748 = vmatpush1.bf16.msra.mxu0 %v1971
    %2749 = vmatprep.subr.bf16.mxu0 0
    %2750 = vmatpush1.bf16.msra.mxu0 %v1972
    %2751 = vmatprep.subr.bf16.mxu0 0
    %2752 = vmatpush1.bf16.msra.mxu0 %v1973
    %2753 = vmatprep.subr.bf16.mxu0 0
    %2754 = vmatpush1.bf16.msra.mxu0 %v1974
    %2755 = vmatprep.subr.bf16.mxu0 0
    %2756 = vmatpush1.bf16.msra.mxu0 %v1975
    %2757 = vmatprep.subr.bf16.mxu0 0
    %2758 = vmatpush1.bf16.msra.mxu0 %v1976
    %2759 = vmatprep.subr.bf16.mxu0 0
    %2760 = vmatpush1.bf16.msra.mxu0 %v1977
    %2761 = vmatprep.subr.bf16.mxu0 0
    %2762 = vmatpush1.bf16.msra.mxu0 %v1978
    %2763 = vmatprep.subr.bf16.mxu0 0
    %2764 = vmatpush1.bf16.msra.mxu0 %v1979
    %2765 = vmatprep.subr.bf16.mxu0 0
    %2766 = vmatpush1.bf16.msra.mxu0 %v1980
    %2767 = vmatprep.subr.bf16.mxu0 0
    %2768 = vmatpush1.bf16.msra.mxu0 %v1981
    %2769 = vmatprep.subr.bf16.mxu0 0
    %2770 = vmatpush1.bf16.msra.mxu0 %v1982
    %2771 = vmatprep.subr.bf16.mxu0 0
    %2772 = vmatpush1.bf16.msra.mxu0 %v1983
    %2773 = vmatprep.subr.bf16.mxu0 0
    %2774 = vmatpush1.bf16.msra.mxu0 %v1984
    %2775 = vmatprep.subr.bf16.mxu0 0
    %2776 = vmatpush1.bf16.msra.mxu0 %v1985
    %2777 = vmatprep.subr.bf16.mxu0 0
    %2778 = vmatpush1.bf16.msra.mxu0 %v1986
    %2779 = vmatprep.mubr.bf16.mxu0 %v689
    %2780 = vmatmul.mubr.bf16.gmra.mrb[0].mxu0 %v687
    %v2781 = vpop.f32.mrb[0].mxu0
    %v2782 = vadd.f32 %v2742, %v2781
    %v2783 = vpop.f32.mrb[0].mxu0
    %v2784 = vpop.f32.mrb[0].mxu0
    %v2785 = vpop.f32.mrb[0].mxu0
    %2786 = vdwg.mxu0
    %2787 = vmatprep.subr.bf16.mxu0 0
    %2788 = vmatpush1.bf16.msra.mxu0 %v1987
    %2789 = vmatprep.subr.bf16.mxu0 0
    %2790 = vmatpush1.bf16.msra.mxu0 %v1988
    %2791 = vmatprep.subr.bf16.mxu0 0
    %2792 = vmatpush1.bf16.msra.mxu0 %v1989
    %2793 = vmatprep.subr.bf16.mxu0 0
    %2794 = vmatpush1.bf16.msra.mxu0 %v1990
    %2795 = vmatprep.subr.bf16.mxu0 0
    %2796 = vmatpush1.bf16.msra.mxu0 %v1991
    %2797 = vmatprep.subr.bf16.mxu0 0
    %2798 = vmatpush1.bf16.msra.mxu0 %v1992
    %2799 = vmatprep.subr.bf16.mxu0 0
    %2800 = vmatpush1.bf16.msra.mxu0 %v1993
    %2801 = vmatprep.subr.bf16.mxu0 0
    %2802 = vmatpush1.bf16.msra.mxu0 %v1994
    %2803 = vmatprep.subr.bf16.mxu0 0
    %2804 = vmatpush1.bf16.msra.mxu0 %v1995
    %2805 = vmatprep.subr.bf16.mxu0 0
    %2806 = vmatpush1.bf16.msra.mxu0 %v1996
    %2807 = vmatprep.subr.bf16.mxu0 0
    %2808 = vmatpush1.bf16.msra.mxu0 %v1997
    %2809 = vmatprep.subr.bf16.mxu0 0
    %2810 = vmatpush1.bf16.msra.mxu0 %v1998
    %2811 = vmatprep.subr.bf16.mxu0 0
    %2812 = vmatpush1.bf16.msra.mxu0 %v1999
    %2813 = vmatprep.subr.bf16.mxu0 0
    %2814 = vmatpush1.bf16.msra.mxu0 %v2000
    %2815 = vmatprep.subr.bf16.mxu0 0
    %2816 = vmatpush1.bf16.msra.mxu0 %v2001
    %2817 = vmatprep.subr.bf16.mxu0 0
    %2818 = vmatpush1.bf16.msra.mxu0 %v2002
    %2819 = vmatprep.mubr.bf16.mxu0 %v727
    %2820 = vmatmul.mubr.bf16.gmra.mrb[0].mxu0 %v713
    %v2821 = vpop.f32.mrb[0].mxu0
    %v2822 = vadd.f32 %v2782, %v2821
    %v2823 = vpop.f32.mrb[0].mxu0
    %v2824 = vpop.f32.mrb[0].mxu0
    %v2825 = vpop.f32.mrb[0].mxu0
    %2826 = vdwg.mxu0
    %2827 = vmatprep.subr.bf16.mxu0 0
    %2828 = vmatpush1.bf16.msra.mxu0 %v2003
    %2829 = vmatprep.subr.bf16.mxu0 0
    %2830 = vmatpush1.bf16.msra.mxu0 %v2004
    %2831 = vmatprep.subr.bf16.mxu0 0
    %2832 = vmatpush1.bf16.msra.mxu0 %v2005
    %2833 = vmatprep.subr.bf16.mxu0 0
    %2834 = vmatpush1.bf16.msra.mxu0 %v2006
    %2835 = vmatprep.subr.bf16.mxu0 0
    %2836 = vmatpush1.bf16.msra.mxu0 %v2007
    %2837 = vmatprep.subr.bf16.mxu0 0
    %2838 = vmatpush1.bf16.msra.mxu0 %v2008
    %2839 = vmatprep.subr.bf16.mxu0 0
    %2840 = vmatpush1.bf16.msra.mxu0 %v2009
    %2841 = vmatprep.subr.bf16.mxu0 0
    %2842 = vmatpush1.bf16.msra.mxu0 %v2010
    %2843 = vmatprep.subr.bf16.mxu0 0
    %2844 = vmatpush1.bf16.msra.mxu0 %v2011
    %2845 = vmatprep.subr.bf16.mxu0 0
    %2846 = vmatpush1.bf16.msra.mxu0 %v2012
    %2847 = vmatprep.subr.bf16.mxu0 0
    %2848 = vmatpush1.bf16.msra.mxu0 %v2013
    %2849 = vmatprep.subr.bf16.mxu0 0
    %2850 = vmatpush1.bf16.msra.mxu0 %v2014
    %2851 = vmatprep.subr.bf16.mxu0 0
    %2852 = vmatpush1.bf16.msra.mxu0 %v2015
    %2853 = vmatprep.subr.bf16.mxu0 0
    %2854 = vmatpush1.bf16.msra.mxu0 %v2016
    %2855 = vmatprep.subr.bf16.mxu0 0
    %2856 = vmatpush1.bf16.msra.mxu0 %v2017
    %2857 = vmatprep.subr.bf16.mxu0 0
    %2858 = vmatpush1.bf16.msra.mxu0 %v2018
    %2859 = vmatprep.mubr.bf16.mxu0 %v737
    %2860 = vmatmul.mubr.bf16.gmra.mrb[0].mxu0 %v735
    %v2861 = vpop.f32.mrb[0].mxu0
    %v2862 = vadd.f32 %v2822, %v2861
    %v2863 = vpop.f32.mrb[0].mxu0
    %v2864 = vpop.f32.mrb[0].mxu0
    %v2865 = vpop.f32.mrb[0].mxu0
    %2866 = vdwg.mxu0
    %2867 = vmatprep.subr.bf16.mxu0 0
    %2868 = vmatpush1.bf16.msra.mxu0 %v2019
    %2869 = vmatprep.subr.bf16.mxu0 0
    %2870 = vmatpush1.bf16.msra.mxu0 %v2020
    %2871 = vmatprep.subr.bf16.mxu0 0
    %2872 = vmatpush1.bf16.msra.mxu0 %v2021
    %2873 = vmatprep.subr.bf16.mxu0 0
    %2874 = vmatpush1.bf16.msra.mxu0 %v2022
    %2875 = vmatprep.subr.bf16.mxu0 0
    %2876 = vmatpush1.bf16.msra.mxu0 %v2023
    %2877 = vmatprep.subr.bf16.mxu0 0
    %2878 = vmatpush1.bf16.msra.mxu0 %v2024
    %2879 = vmatprep.subr.bf16.mxu0 0
    %2880 = vmatpush1.bf16.msra.mxu0 %v2025
    %2881 = vmatprep.subr.bf16.mxu0 0
    %2882 = vmatpush1.bf16.msra.mxu0 %v2026
    %2883 = vmatprep.subr.bf16.mxu0 0
    %2884 = vmatpush1.bf16.msra.mxu0 %v2027
    %2885 = vmatprep.subr.bf16.mxu0 0
    %2886 = vmatpush1.bf16.msra.mxu0 %v2028
    %2887 = vmatprep.subr.bf16.mxu0 0
    %2888 = vmatpush1.bf16.msra.mxu0 %v2029
    %2889 = vmatprep.subr.bf16.mxu0 0
    %2890 = vmatpush1.bf16.msra.mxu0 %v2030
    %2891 = vmatprep.subr.bf16.mxu0 0
    %2892 = vmatpush1.bf16.msra.mxu0 %v2031
    %2893 = vmatprep.subr.bf16.mxu0 0
    %2894 = vmatpush1.bf16.msra.mxu0 %v2032
    %2895 = vmatprep.subr.bf16.mxu0 0
    %2896 = vmatpush1.bf16.msra.mxu0 %v2033
    %2897 = vmatprep.subr.bf16.mxu0 0
    %2898 = vmatpush1.bf16.msra.mxu0 %v2034
    %2899 = vmatprep.mubr.bf16.mxu0 %v734
    %2900 = vmatmul.mubr.bf16.gmra.mrb[0].mxu0 %v720
    %v2901 = vpop.f32.mrb[0].mxu0
    %v2902 = vadd.f32 %v2862, %v2901
    %v2903 = vpop.f32.mrb[0].mxu0
    %v2904 = vpop.f32.mrb[0].mxu0
    %v2905 = vpop.f32.mrb[0].mxu0
    %2906 = vdwg.mxu0
    %2907 = vmatprep.subr.bf16.mxu0 0
    %2908 = vmatpush1.bf16.msra.mxu0 %v2035
    %2909 = vmatprep.subr.bf16.mxu0 0
    %2910 = vmatpush1.bf16.msra.mxu0 %v2036
    %2911 = vmatprep.subr.bf16.mxu0 0
    %2912 = vmatpush1.bf16.msra.mxu0 %v2037
    %2913 = vmatprep.subr.bf16.mxu0 0
    %2914 = vmatpush1.bf16.msra.mxu0 %v2038
    %2915 = vmatprep.subr.bf16.mxu0 0
    %2916 = vmatpush1.bf16.msra.mxu0 %v2039
    %2917 = vmatprep.subr.bf16.mxu0 0
    %2918 = vmatpush1.bf16.msra.mxu0 %v2040
    %2919 = vmatprep.subr.bf16.mxu0 0
    %2920 = vmatpush1.bf16.msra.mxu0 %v2041
    %2921 = vmatprep.subr.bf16.mxu0 0
    %2922 = vmatpush1.bf16.msra.mxu0 %v2042
    %2923 = vmatprep.subr.bf16.mxu0 0
    %2924 = vmatpush1.bf16.msra.mxu0 %v2043
    %2925 = vmatprep.subr.bf16.mxu0 0
    %2926 = vmatpush1.bf16.msra.mxu0 %v2044
    %2927 = vmatprep.subr.bf16.mxu0 0
    %2928 = vmatpush1.bf16.msra.mxu0 %v2045
    %2929 = vmatprep.subr.bf16.mxu0 0
    %2930 = vmatpush1.bf16.msra.mxu0 %v2046
    %2931 = vmatprep.subr.bf16.mxu0 0
    %2932 = vmatpush1.bf16.msra.mxu0 %v2047
    %2933 = vmatprep.subr.bf16.mxu0 0
    %2934 = vmatpush1.bf16.msra.mxu0 %v2048
    %2935 = vmatprep.subr.bf16.mxu0 0
    %2936 = vmatpush1.bf16.msra.mxu0 %v2049
    %2937 = vmatprep.subr.bf16.mxu0 0
    %2938 = vmatpush1.bf16.msra.mxu0 %v2050
    %2939 = vmatprep.mubr.bf16.mxu0 %v738
    %2940 = vmatmul.mubr.bf16.gmra.mrb[0].mxu0 %v736
    %v2941 = vpop.f32.mrb[0].mxu0
    %v2942 = vadd.f32 %v2902, %v2941
    %v2943 = vpop.f32.mrb[0].mxu0
    %v2944 = vpop.f32.mrb[0].mxu0
    %v2945 = vpop.f32.mrb[0].mxu0
    %2946 = vdwg.mxu0
    %2947 = vst [vmem:[#allocation2] sm:$0x3] %v2942
    // Predicated region
    $region14: #{conv1d_forward.3} parent=1 // pred_check
      _
    $region15: #{conv1d_forward.3} parent=1 // pred_check_branch
      %2949 = sbr.rel (0) target = $region17
    $region16: #{conv1d_forward.3} parent=1 // pred_region
      %s2951 = ssub.s32 32, 32
      %2952 = vsyncadd [#allocation3], %s2951
      %s2954 = sshll.u32 [#allocation2], 4
      %s2955 = int_to_ptr.vmem [resolvable:$true] %s2954
      %2957 = dma.vmem_to_hbm [thread:$0]  %s2955, 32, %s3, [#allocation3]
    $region17: #{conv1d_forward.3} parent=1 // pred_fallthru
      _
    // Predicated region
    $region18: #{conv1d_forward.3} parent=1 // pred_check
      _
    $region19: #{conv1d_forward.3} parent=1 // pred_check_branch
      %2959 = sbr.rel (0) target = $region21
    $region20: #{conv1d_forward.3} parent=1 // pred_region
      %2960 = dma.done [#allocation3], 32
    $region21: #{conv1d_forward.3} parent=1 // pred_fallthru
      _
    %2961 = vsyncpa [#allocation3], 1

</llo_original>
